<compile_context>
chip_gen: v7x
topology: tpu7x:2x2x1
jax: 0.10.0
libtpu: 0.0.40
codegen_flags: <defaults>
</compile_context>

<pallas_src>
import functools

import jax
import jax.numpy as jnp
from jax import lax
from jax.experimental import pallas as pl
from jax.experimental.pallas import tpu as pltpu


# ----------------------------------------------------------------------------
# Fused kernel: 4x conv3x3(+bias+ReLU) -> per-pixel LSTM -> output Linear
# ----------------------------------------------------------------------------
def _fused_forward_kernel(x_ref, mask_ref,
                          w1_ref, b1_ref, w2_ref, b2_ref,
                          w3_ref, b3_ref, w4_ref, b4_ref,
                          wl_ref, bl_ref, wo_ref, bo_ref,
                          o_ref, act_sc,
                          *, seq, H, W, Hd):
    Wp = W + 2
    Npad = act_sc.shape[1]              # (H + 2) * Wp, flattened padded grid
    P = H * Wp - 2                      # compute width (covers every valid pixel)
    off0 = Wp + 1                       # flat index of padded pixel (1, 1)
    taps = tuple(dy * Wp + dx for dy in range(3) for dx in range(3))

    mask = mask_ref[...]                # (1, P): 1.0 on valid output columns
    conv_w = (w1_ref, w2_ref, w3_ref, w4_ref)
    conv_b = (b1_ref, b2_ref, b3_ref, b4_ref)

    # Zero the padded activation scratch once; only its interior is rewritten,
    # so the 1-pixel zero halo persists across layers and timesteps.
    act_sc[...] = jnp.zeros_like(act_sc)

    h = jnp.zeros((Hd, Npad), jnp.float32)
    c = jnp.zeros((Hd, Npad), jnp.float32)

    # TODO(synk): switch to lax.fori_loop(..., unroll=k) for large seq.
    for t in range(seq):
        # ---- 4x (conv3x3 + bias + ReLU): one im2col matmul each ------------
        for l in range(4):
            if l == 0:
                pieces = [x_ref[t, :, o:o + P] for o in taps]
            else:
                pieces = [act_sc[:, o:o + P] for o in taps]
            s_mat = jnp.concatenate(pieces, axis=0)            # (9*Cin, P)
            raw = jnp.dot(conv_w[l][...], s_mat,
                          preferred_element_type=jnp.float32) + conv_b[l][...]
            # Mask zeroes the junk columns so the halo of the next layer's
            # padded activation stays exactly zero.
            act_sc[:, off0:off0 + P] = jnp.maximum(raw, 0.0) * mask

        # ---- one LSTM step over all pixels (pixels in lanes) ---------------
        z = jnp.concatenate([act_sc[...], h], axis=0)          # (F + Hd, Npad)
        gates = jnp.dot(wl_ref[...], z,
                        preferred_element_type=jnp.float32) + bl_ref[...]
        i_g = jax.nn.sigmoid(gates[0 * Hd:1 * Hd])
        f_g = jax.nn.sigmoid(gates[1 * Hd:2 * Hd])
        g_g = jnp.tanh(gates[2 * Hd:3 * Hd])
        o_g = jax.nn.sigmoid(gates[3 * Hd:4 * Hd])
        c = f_g * c + i_g * g_g
        h = o_g * jnp.tanh(c)

    # ---- output Linear on the last hidden state (lane-dense store) ---------
    o_ref[...] = (jnp.dot(wo_ref[...], h, preferred_element_type=jnp.float32)
                  + bo_ref[...])


def fused_forward(xpad, mask, enc_w, enc_b, w_lstm, b_lstm, w_out, b_out,
                  *, H, W):
    # xpad: (b, seq, Cpad, Npad) padded-flat input; mask: (1, P)
    b, seq, _, Npad = xpad.shape
    F = enc_w[0].shape[0]
    Hd = w_lstm.shape[0] // 4
    Cout = w_out.shape[0]

    in_specs = [
        pl.BlockSpec((None,) + xpad.shape[1:], lambda n: (n, 0, 0, 0)),
        pl.BlockSpec(mask.shape, lambda n: (0, 0)),
    ]
    inputs = [xpad, mask]
    for wv, bv in zip(enc_w, enc_b):
        in_specs += [pl.BlockSpec(wv.shape, lambda n: (0, 0)),
                     pl.BlockSpec(bv.shape, lambda n: (0, 0))]
        inputs += [wv, bv]
    for arr in (w_lstm, b_lstm, w_out, b_out):
        in_specs.append(pl.BlockSpec(arr.shape, lambda n: (0, 0)))
        inputs.append(arr)

    kern = functools.partial(_fused_forward_kernel, seq=seq, H=H, W=W, Hd=Hd)
    return pl.pallas_call(
        kern,
        out_shape=jax.ShapeDtypeStruct((b, Cout, Npad), jnp.float32),
        grid_spec=pltpu.PrefetchScalarGridSpec(
            num_scalar_prefetch=0,
            grid=(b,),
            in_specs=in_specs,
            out_specs=pl.BlockSpec((None, Cout, Npad), lambda n: (n, 0, 0)),
            scratch_shapes=[pltpu.VMEM((F, Npad), jnp.float32)],
        ),
        compiler_params=pltpu.CompilerParams(
            dimension_semantics=("parallel",)),
    )(*inputs)


# ----------------------------------------------------------------------------
# Wrapper: layout plumbing (all tiny, one-time XLA ops on inputs / weights)
# ----------------------------------------------------------------------------
def _interior_mask(h, w):
    Wp = w + 2
    P = h * Wp - 2
    q = jnp.arange(P, dtype=jnp.int32) + (Wp + 1)
    col = q % Wp
    row = q // Wp
    valid = (col >= 1) & (col <= w) & (row >= 1) & (row <= h)
    return valid.astype(jnp.float32).reshape(1, P)


def model_forward(params, peat_map, temporal_ft, static_ft, future_step=None):
    del peat_map, future_step                     # unused by the reference forward
    b, t, seq, h, w = temporal_ft.shape
    k = static_ft.shape[1]
    cin = k + t

    # Build (b, seq, cin, h, w) with static channels first (matches torch.cat).
    t_ft = jnp.transpose(temporal_ft, (0, 2, 1, 3, 4))
    s_ft = jnp.broadcast_to(static_ft, (b, k, seq, h, w))
    s_ft = jnp.transpose(s_ft, (0, 2, 1, 3, 4))
    x = jnp.concatenate([s_ft, t_ft], axis=2).astype(jnp.float32)

    # Pad channels to a sublane multiple (keeps in-kernel concats aligned) and
    # zero-pad the spatial halo ONCE, flattening the padded grid into lanes.
    cpad = -(-cin // 8) * 8
    xp = jnp.pad(x, ((0, 0), (0, 0), (0, cpad - cin), (1, 1), (1, 1)))
    xp = xp.reshape(b, seq, cpad, (h + 2) * (w + 2))

    feats = params["enc1_w"].shape[-1]
    hd = params["whh"].shape[0]

    enc_w, enc_b = [], []
    for i in range(4):
        wv = params[f"enc{i + 1}_w"]                          # (3, 3, cin_i, F) HWIO
        if i == 0 and cpad != cin:
            wv = jnp.pad(wv, ((0, 0), (0, 0), (0, cpad - cin), (0, 0)))
        wf = jnp.transpose(wv, (3, 0, 1, 2)).reshape(feats, -1)   # (F, 9*cin_i)
        enc_w.append(wf)
        enc_b.append(params[f"enc{i + 1}_b"].reshape(feats, 1))

    w_lstm = jnp.concatenate([params["wih"].T, params["whh"].T], axis=1)  # (4Hd, F+Hd)
    b_lstm = params["b_lstm"].reshape(4 * hd, 1)
    w_out = params["wout"].T                                              # (Cout, Hd)
    b_out = params["bout"].reshape(-1, 1)

    out = fused_forward(xp, _interior_mask(h, w), enc_w, enc_b,
                        w_lstm, b_lstm, w_out, b_out, H=h, W=w)
    out_ch = w_out.shape[0]
    out = out.reshape(b, out_ch, h + 2, w + 2)[:, :, 1:h + 1, 1:w + 1]
    return out[:, :, None]                         # (b, out_channels, 1, h, w)


# ----------------------------------------------------------------------------
# Parameter init (deterministic, synthetic) + pure-JAX reference
# ----------------------------------------------------------------------------
def init_params(key, static_ch, temporal_ch, out_channels, dmodel, in_days=3):
    t = temporal_ch // in_days
    in_ch = t + static_ch
    feats = dmodel
    Hd = 2 * out_channels
    ks = jax.random.split(key, 13)

    def u(k, shape, scale):
        return jax.random.uniform(k, shape, jnp.float32, -scale, scale)

    params = {}
    chans = [in_ch, feats, feats, feats]
    for idx, cin in enumerate(chans):
        params[f"enc{idx + 1}_w"] = u(ks[2 * idx], (3, 3, cin, feats), 0.2)
        params[f"enc{idx + 1}_b"] = u(ks[2 * idx + 1], (feats,), 0.1)
    params["wih"] = u(ks[8], (feats, 4 * Hd), 0.3)      # gate order: i, f, g, o
    params["whh"] = u(ks[9], (Hd, 4 * Hd), 0.3)
    params["b_lstm"] = u(ks[10], (4 * Hd,), 0.1)        # bias_ih + bias_hh folded
    params["wout"] = u(ks[11], (Hd, out_channels), 0.4)
    params["bout"] = u(ks[12], (out_channels,), 0.1)
    return params


def reference_forward(params, peat_map, temporal_ft, static_ft):
    del peat_map
    b, t, seq, h, w = temporal_ft.shape
    k = static_ft.shape[1]
    t_ft = jnp.transpose(temporal_ft, (0, 2, 1, 3, 4)).reshape(b * seq, t, h, w)
    s_ft = jnp.broadcast_to(static_ft, (b, k, seq, h, w))
    s_ft = jnp.transpose(s_ft, (0, 2, 1, 3, 4)).reshape(b * seq, k, h, w)
    x = jnp.concatenate([s_ft, t_ft], axis=1)
    x = jnp.transpose(x, (0, 2, 3, 1))                  # NHWC
    for i in range(4):
        y = lax.conv_general_dilated(
            x, params[f"enc{i + 1}_w"], (1, 1), "SAME",
            dimension_numbers=("NHWC", "HWIO", "NHWC"),
            precision=lax.Precision.HIGHEST)
        x = jax.nn.relu(y + params[f"enc{i + 1}_b"])
    feats = x.shape[-1]
    x = x.reshape(b, seq, h, w, feats)
    x = jnp.transpose(x, (0, 2, 3, 1, 4)).reshape(b * h * w, seq, feats)
    hd = params["whh"].shape[0]
    hs = jnp.zeros((x.shape[0], hd), jnp.float32)
    cs = jnp.zeros((x.shape[0], hd), jnp.float32)
    hi = lax.Precision.HIGHEST
    for tt in range(seq):
        g = (jnp.dot(x[:, tt], params["wih"], precision=hi)
             + jnp.dot(hs, params["whh"], precision=hi) + params["b_lstm"])
        i_g = jax.nn.sigmoid(g[:, :hd])
        f_g = jax.nn.sigmoid(g[:, hd:2 * hd])
        g_g = jnp.tanh(g[:, 2 * hd:3 * hd])
        o_g = jax.nn.sigmoid(g[:, 3 * hd:])
        cs = f_g * cs + i_g * g_g
        hs = o_g * jnp.tanh(cs)
    out = jnp.dot(hs, params["wout"], precision=hi) + params["bout"]
    out_ch = out.shape[-1]
    out = out.reshape(b, h, w, out_ch)
    return jnp.transpose(out, (0, 3, 1, 2))[:, :, None]


if __name__ == "__main__":
    key = jax.random.PRNGKey(0)
    k_p, k_t, k_s, k_w = jax.random.split(key, 4)

    # Small shapes consistent with the module's forward.
    b, in_days = 2, 3
    static_ch, temporal_ch = 3, 6          # per-day temporal channels t = 2
    out_channels, dmodel = 4, 8            # LSTM hidden = 2 * out_channels = 8
    seq_len, h, w = 4, 8, 16

    t = temporal_ch // in_days
    peat_map = jax.random.normal(k_p, (b, 1, h, w), jnp.float32)   # unused
    temporal = jax.random.normal(k_t, (b, t, seq_len, h, w), jnp.float32)
    static = jax.random.normal(k_s, (b, static_ch, 1, h, w), jnp.float32)

    params = init_params(k_w, static_ch, temporal_ch, out_channels, dmodel,
                         in_days)

    out = model_forward(params, peat_map, temporal, static, future_step=1)
    out = jax.block_until_ready(out)
    assert out.shape == (b, out_channels, 1, h, w), out.shape

    ref = reference_forward(params, peat_map, temporal, static)
    max_err = float(jnp.max(jnp.abs(out - ref)))
    assert jnp.allclose(out, ref, atol=1e-3, rtol=1e-3), max_err

    print("KERNEL_OK")
</pallas_src>

<mosaic_0001>
module attributes {stable_mosaic.version = 11 : i64} {
  func.func @_fused_forward_kernel(%arg0: i32, %arg1: memref<1x4x8x180xf32, #tpu.memory_space<vmem>>, %arg2: memref<1x142xf32, #tpu.memory_space<vmem>>, %arg3: memref<8x72xf32, #tpu.memory_space<vmem>>, %arg4: memref<8x1xf32, #tpu.memory_space<vmem>>, %arg5: memref<8x72xf32, #tpu.memory_space<vmem>>, %arg6: memref<8x1xf32, #tpu.memory_space<vmem>>, %arg7: memref<8x72xf32, #tpu.memory_space<vmem>>, %arg8: memref<8x1xf32, #tpu.memory_space<vmem>>, %arg9: memref<8x72xf32, #tpu.memory_space<vmem>>, %arg10: memref<8x1xf32, #tpu.memory_space<vmem>>, %arg11: memref<32x16xf32, #tpu.memory_space<vmem>>, %arg12: memref<32x1xf32, #tpu.memory_space<vmem>>, %arg13: memref<4x8xf32, #tpu.memory_space<vmem>>, %arg14: memref<4x1xf32, #tpu.memory_space<vmem>>, %arg15: memref<1x4x180xf32, #tpu.memory_space<vmem>>, %arg16: memref<8x180xf32, #tpu.memory_space<vmem>>) attributes {dimension_semantics = [#tpu.dimension_semantics<parallel>], iteration_bounds = array<i64: 2>, scalar_prefetch = 0 : i64, scratch_operands = 1 : i64, tpu.core_type = #tpu.core_type<tc>, window_params = [{transform_indices = @transform_0, window_bounds = array<i64: 1, 4, 8, 180>}, {pipeline_mode = #tpu.pipeline_mode<synchronous>, transform_indices = @transform_1, window_bounds = array<i64: 1, 142>}, {pipeline_mode = #tpu.pipeline_mode<synchronous>, transform_indices = @transform_2, window_bounds = array<i64: 8, 72>}, {pipeline_mode = #tpu.pipeline_mode<synchronous>, transform_indices = @transform_3, window_bounds = array<i64: 8, 1>}, {pipeline_mode = #tpu.pipeline_mode<synchronous>, transform_indices = @transform_4, window_bounds = array<i64: 8, 72>}, {pipeline_mode = #tpu.pipeline_mode<synchronous>, transform_indices = @transform_5, window_bounds = array<i64: 8, 1>}, {pipeline_mode = #tpu.pipeline_mode<synchronous>, transform_indices = @transform_6, window_bounds = array<i64: 8, 72>}, {pipeline_mode = #tpu.pipeline_mode<synchronous>, transform_indices = @transform_7, window_bounds = array<i64: 8, 1>}, {pipeline_mode = #tpu.pipeline_mode<synchronous>, transform_indices = @transform_8, window_bounds = array<i64: 8, 72>}, {pipeline_mode = #tpu.pipeline_mode<synchronous>, transform_indices = @transform_9, window_bounds = array<i64: 8, 1>}, {pipeline_mode = #tpu.pipeline_mode<synchronous>, transform_indices = @transform_10, window_bounds = array<i64: 32, 16>}, {pipeline_mode = #tpu.pipeline_mode<synchronous>, transform_indices = @transform_11, window_bounds = array<i64: 32, 1>}, {pipeline_mode = #tpu.pipeline_mode<synchronous>, transform_indices = @transform_12, window_bounds = array<i64: 4, 8>}, {pipeline_mode = #tpu.pipeline_mode<synchronous>, transform_indices = @transform_13, window_bounds = array<i64: 4, 1>}, {transform_indices = @transform_14, window_bounds = array<i64: 1, 4, 180>}]} {
    %c0 = arith.constant 0 : index
    %c0_0 = arith.constant 0 : index
    %0 = vector.load %arg2[%c0, %c0_0] : memref<1x142xf32, #tpu.memory_space<vmem>>, vector<1x142xf32>
    %cst = arith.constant 0.000000e+00 : f32
    %1 = vector.broadcast %cst : f32 to vector<8x180xf32>
    %c0_1 = arith.constant 0 : index
    %c0_2 = arith.constant 0 : index
    %2 = vector.load %arg16[%c0_1, %c0_2] : memref<8x180xf32, #tpu.memory_space<vmem>>, vector<8x180xf32>
    tpu.vector_store %arg16[%c0_1, %c0_2], %1 {strides = array<i32>} : memref<8x180xf32, #tpu.memory_space<vmem>>, vector<8x180xf32>,
    %cst_3 = arith.constant 0.000000e+00 : f32
    %3 = vector.broadcast %cst_3 : f32 to vector<8x180xf32>
    %cst_4 = arith.constant 0.000000e+00 : f32
    %4 = vector.broadcast %cst_4 : f32 to vector<8x180xf32>
    %c0_5 = arith.constant 0 : index
    %c0_6 = arith.constant 0 : index
    %c0_7 = arith.constant 0 : index
    %c0_8 = arith.constant 0 : index
    %5 = vector.load %arg1[%c0_5, %c0_6, %c0_7, %c0_8] : memref<1x4x8x180xf32, #tpu.memory_space<vmem>>, vector<1x1x8x142xf32>
    %6 = vector.shape_cast %5 : vector<1x1x8x142xf32> to vector<8x142xf32>
    %c0_9 = arith.constant 0 : index
    %c0_10 = arith.constant 0 : index
    %c0_11 = arith.constant 0 : index
    %c1 = arith.constant 1 : index
    %7 = vector.load %arg1[%c0_9, %c0_10, %c0_11, %c1] : memref<1x4x8x180xf32, #tpu.memory_space<vmem>>, vector<1x1x8x142xf32>
    %8 = vector.shape_cast %7 : vector<1x1x8x142xf32> to vector<8x142xf32>
    %c0_12 = arith.constant 0 : index
    %c0_13 = arith.constant 0 : index
    %c0_14 = arith.constant 0 : index
    %c2 = arith.constant 2 : index
    %9 = vector.load %arg1[%c0_12, %c0_13, %c0_14, %c2] : memref<1x4x8x180xf32, #tpu.memory_space<vmem>>, vector<1x1x8x142xf32>
    %10 = vector.shape_cast %9 : vector<1x1x8x142xf32> to vector<8x142xf32>
    %c0_15 = arith.constant 0 : index
    %c0_16 = arith.constant 0 : index
    %c0_17 = arith.constant 0 : index
    %c18 = arith.constant 18 : index
    %11 = vector.load %arg1[%c0_15, %c0_16, %c0_17, %c18] : memref<1x4x8x180xf32, #tpu.memory_space<vmem>>, vector<1x1x8x142xf32>
    %12 = vector.shape_cast %11 : vector<1x1x8x142xf32> to vector<8x142xf32>
    %c0_18 = arith.constant 0 : index
    %c0_19 = arith.constant 0 : index
    %c0_20 = arith.constant 0 : index
    %c19 = arith.constant 19 : index
    %13 = vector.load %arg1[%c0_18, %c0_19, %c0_20, %c19] : memref<1x4x8x180xf32, #tpu.memory_space<vmem>>, vector<1x1x8x142xf32>
    %14 = vector.shape_cast %13 : vector<1x1x8x142xf32> to vector<8x142xf32>
    %c0_21 = arith.constant 0 : index
    %c0_22 = arith.constant 0 : index
    %c0_23 = arith.constant 0 : index
    %c20 = arith.constant 20 : index
    %15 = vector.load %arg1[%c0_21, %c0_22, %c0_23, %c20] : memref<1x4x8x180xf32, #tpu.memory_space<vmem>>, vector<1x1x8x142xf32>
    %16 = vector.shape_cast %15 : vector<1x1x8x142xf32> to vector<8x142xf32>
    %c0_24 = arith.constant 0 : index
    %c0_25 = arith.constant 0 : index
    %c0_26 = arith.constant 0 : index
    %c36 = arith.constant 36 : index
    %17 = vector.load %arg1[%c0_24, %c0_25, %c0_26, %c36] : memref<1x4x8x180xf32, #tpu.memory_space<vmem>>, vector<1x1x8x142xf32>
    %18 = vector.shape_cast %17 : vector<1x1x8x142xf32> to vector<8x142xf32>
    %c0_27 = arith.constant 0 : index
    %c0_28 = arith.constant 0 : index
    %c0_29 = arith.constant 0 : index
    %c37 = arith.constant 37 : index
    %19 = vector.load %arg1[%c0_27, %c0_28, %c0_29, %c37] : memref<1x4x8x180xf32, #tpu.memory_space<vmem>>, vector<1x1x8x142xf32>
    %20 = vector.shape_cast %19 : vector<1x1x8x142xf32> to vector<8x142xf32>
    %c0_30 = arith.constant 0 : index
    %c0_31 = arith.constant 0 : index
    %c0_32 = arith.constant 0 : index
    %c38 = arith.constant 38 : index
    %21 = vector.load %arg1[%c0_30, %c0_31, %c0_32, %c38] : memref<1x4x8x180xf32, #tpu.memory_space<vmem>>, vector<1x1x8x142xf32>
    %22 = vector.shape_cast %21 : vector<1x1x8x142xf32> to vector<8x142xf32>
    %23 = tpu.concatenate %6, %8, %10, %12, %14, %16, %18, %20, %22 in 0 : vector<8x142xf32>, vector<8x142xf32>, vector<8x142xf32>, vector<8x142xf32>, vector<8x142xf32>, vector<8x142xf32>, vector<8x142xf32>, vector<8x142xf32>, vector<8x142xf32> -> vector<72x142xf32>
    %c0_33 = arith.constant 0 : index
    %c0_34 = arith.constant 0 : index
    %24 = vector.load %arg3[%c0_33, %c0_34] : memref<8x72xf32, #tpu.memory_space<vmem>>, vector<8x72xf32>
    %cst_35 = arith.constant dense<0.000000e+00> : vector<8x142xf32>
    %25 = tpu.matmul %24, %23, %cst_35 {dimension_numbers = #tpu.dot_dimension_numbers<[1], [0], [0], [1], [0, 0, 1, 1], [], []>} : vector<8x72xf32>, vector<72x142xf32>, vector<8x142xf32> -> vector<8x142xf32>
    %c0_36 = arith.constant 0 : index
    %c0_37 = arith.constant 0 : index
    %26 = vector.load %arg4[%c0_36, %c0_37] : memref<8x1xf32, #tpu.memory_space<vmem>>, vector<8x1xf32>
    %27 = vector.broadcast %26 : vector<8x1xf32> to vector<8x142xf32>
    %28 = arith.addf %25, %27 : vector<8x142xf32>
    %cst_38 = arith.constant 0.000000e+00 : f32
    %29 = vector.broadcast %cst_38 : f32 to vector<8x142xf32>
    %30 = arith.maximumf %28, %29 : vector<8x142xf32>
    %31 = vector.broadcast %0 : vector<1x142xf32> to vector<8x142xf32>
    %32 = arith.mulf %30, %31 : vector<8x142xf32>
    %c0_39 = arith.constant 0 : index
    %c19_40 = arith.constant 19 : index
    %33 = vector.load %arg16[%c0_39, %c19_40] : memref<8x180xf32, #tpu.memory_space<vmem>>, vector<8x142xf32>
    tpu.vector_store %arg16[%c0_39, %c19_40], %32 {strides = array<i32>} : memref<8x180xf32, #tpu.memory_space<vmem>>, vector<8x142xf32>,
    %c0_41 = arith.constant 0 : index
    %c0_42 = arith.constant 0 : index
    %34 = vector.load %arg16[%c0_41, %c0_42] : memref<8x180xf32, #tpu.memory_space<vmem>>, vector<8x142xf32>
    %c0_43 = arith.constant 0 : index
    %c1_44 = arith.constant 1 : index
    %35 = vector.load %arg16[%c0_43, %c1_44] : memref<8x180xf32, #tpu.memory_space<vmem>>, vector<8x142xf32>
    %c0_45 = arith.constant 0 : index
    %c2_46 = arith.constant 2 : index
    %36 = vector.load %arg16[%c0_45, %c2_46] : memref<8x180xf32, #tpu.memory_space<vmem>>, vector<8x142xf32>
    %c0_47 = arith.constant 0 : index
    %c18_48 = arith.constant 18 : index
    %37 = vector.load %arg16[%c0_47, %c18_48] : memref<8x180xf32, #tpu.memory_space<vmem>>, vector<8x142xf32>
    %c0_49 = arith.constant 0 : index
    %c19_50 = arith.constant 19 : index
    %38 = vector.load %arg16[%c0_49, %c19_50] : memref<8x180xf32, #tpu.memory_space<vmem>>, vector<8x142xf32>
    %c0_51 = arith.constant 0 : index
    %c20_52 = arith.constant 20 : index
    %39 = vector.load %arg16[%c0_51, %c20_52] : memref<8x180xf32, #tpu.memory_space<vmem>>, vector<8x142xf32>
    %c0_53 = arith.constant 0 : index
    %c36_54 = arith.constant 36 : index
    %40 = vector.load %arg16[%c0_53, %c36_54] : memref<8x180xf32, #tpu.memory_space<vmem>>, vector<8x142xf32>
    %c0_55 = arith.constant 0 : index
    %c37_56 = arith.constant 37 : index
    %41 = vector.load %arg16[%c0_55, %c37_56] : memref<8x180xf32, #tpu.memory_space<vmem>>, vector<8x142xf32>
    %c0_57 = arith.constant 0 : index
    %c38_58 = arith.constant 38 : index
    %42 = vector.load %arg16[%c0_57, %c38_58] : memref<8x180xf32, #tpu.memory_space<vmem>>, vector<8x142xf32>
    %43 = tpu.concatenate %34, %35, %36, %37, %38, %39, %40, %41, %42 in 0 : vector<8x142xf32>, vector<8x142xf32>, vector<8x142xf32>, vector<8x142xf32>, vector<8x142xf32>, vector<8x142xf32>, vector<8x142xf32>, vector<8x142xf32>, vector<8x142xf32> -> vector<72x142xf32>
    %c0_59 = arith.constant 0 : index
    %c0_60 = arith.constant 0 : index
    %44 = vector.load %arg5[%c0_59, %c0_60] : memref<8x72xf32, #tpu.memory_space<vmem>>, vector<8x72xf32>
    %cst_61 = arith.constant dense<0.000000e+00> : vector<8x142xf32>
    %45 = tpu.matmul %44, %43, %cst_61 {dimension_numbers = #tpu.dot_dimension_numbers<[1], [0], [0], [1], [0, 0, 1, 1], [], []>} : vector<8x72xf32>, vector<72x142xf32>, vector<8x142xf32> -> vector<8x142xf32>
    %c0_62 = arith.constant 0 : index
    %c0_63 = arith.constant 0 : index
    %46 = vector.load %arg6[%c0_62, %c0_63] : memref<8x1xf32, #tpu.memory_space<vmem>>, vector<8x1xf32>
    %47 = vector.broadcast %46 : vector<8x1xf32> to vector<8x142xf32>
    %48 = arith.addf %45, %47 : vector<8x142xf32>
    %cst_64 = arith.constant 0.000000e+00 : f32
    %49 = vector.broadcast %cst_64 : f32 to vector<8x142xf32>
    %50 = arith.maximumf %48, %49 : vector<8x142xf32>
    %51 = vector.broadcast %0 : vector<1x142xf32> to vector<8x142xf32>
    %52 = arith.mulf %50, %51 : vector<8x142xf32>
    %c0_65 = arith.constant 0 : index
    %c19_66 = arith.constant 19 : index
    %53 = vector.load %arg16[%c0_65, %c19_66] : memref<8x180xf32, #tpu.memory_space<vmem>>, vector<8x142xf32>
    tpu.vector_store %arg16[%c0_65, %c19_66], %52 {strides = array<i32>} : memref<8x180xf32, #tpu.memory_space<vmem>>, vector<8x142xf32>,
    %c0_67 = arith.constant 0 : index
    %c0_68 = arith.constant 0 : index
    %54 = vector.load %arg16[%c0_67, %c0_68] : memref<8x180xf32, #tpu.memory_space<vmem>>, vector<8x142xf32>
    %c0_69 = arith.constant 0 : index
    %c1_70 = arith.constant 1 : index
    %55 = vector.load %arg16[%c0_69, %c1_70] : memref<8x180xf32, #tpu.memory_space<vmem>>, vector<8x142xf32>
    %c0_71 = arith.constant 0 : index
    %c2_72 = arith.constant 2 : index
    %56 = vector.load %arg16[%c0_71, %c2_72] : memref<8x180xf32, #tpu.memory_space<vmem>>, vector<8x142xf32>
    %c0_73 = arith.constant 0 : index
    %c18_74 = arith.constant 18 : index
    %57 = vector.load %arg16[%c0_73, %c18_74] : memref<8x180xf32, #tpu.memory_space<vmem>>, vector<8x142xf32>
    %c0_75 = arith.constant 0 : index
    %c19_76 = arith.constant 19 : index
    %58 = vector.load %arg16[%c0_75, %c19_76] : memref<8x180xf32, #tpu.memory_space<vmem>>, vector<8x142xf32>
    %c0_77 = arith.constant 0 : index
    %c20_78 = arith.constant 20 : index
    %59 = vector.load %arg16[%c0_77, %c20_78] : memref<8x180xf32, #tpu.memory_space<vmem>>, vector<8x142xf32>
    %c0_79 = arith.constant 0 : index
    %c36_80 = arith.constant 36 : index
    %60 = vector.load %arg16[%c0_79, %c36_80] : memref<8x180xf32, #tpu.memory_space<vmem>>, vector<8x142xf32>
    %c0_81 = arith.constant 0 : index
    %c37_82 = arith.constant 37 : index
    %61 = vector.load %arg16[%c0_81, %c37_82] : memref<8x180xf32, #tpu.memory_space<vmem>>, vector<8x142xf32>
    %c0_83 = arith.constant 0 : index
    %c38_84 = arith.constant 38 : index
    %62 = vector.load %arg16[%c0_83, %c38_84] : memref<8x180xf32, #tpu.memory_space<vmem>>, vector<8x142xf32>
    %63 = tpu.concatenate %54, %55, %56, %57, %58, %59, %60, %61, %62 in 0 : vector<8x142xf32>, vector<8x142xf32>, vector<8x142xf32>, vector<8x142xf32>, vector<8x142xf32>, vector<8x142xf32>, vector<8x142xf32>, vector<8x142xf32>, vector<8x142xf32> -> vector<72x142xf32>
    %c0_85 = arith.constant 0 : index
    %c0_86 = arith.constant 0 : index
    %64 = vector.load %arg7[%c0_85, %c0_86] : memref<8x72xf32, #tpu.memory_space<vmem>>, vector<8x72xf32>
    %cst_87 = arith.constant dense<0.000000e+00> : vector<8x142xf32>
    %65 = tpu.matmul %64, %63, %cst_87 {dimension_numbers = #tpu.dot_dimension_numbers<[1], [0], [0], [1], [0, 0, 1, 1], [], []>} : vector<8x72xf32>, vector<72x142xf32>, vector<8x142xf32> -> vector<8x142xf32>
    %c0_88 = arith.constant 0 : index
    %c0_89 = arith.constant 0 : index
    %66 = vector.load %arg8[%c0_88, %c0_89] : memref<8x1xf32, #tpu.memory_space<vmem>>, vector<8x1xf32>
    %67 = vector.broadcast %66 : vector<8x1xf32> to vector<8x142xf32>
    %68 = arith.addf %65, %67 : vector<8x142xf32>
    %cst_90 = arith.constant 0.000000e+00 : f32
    %69 = vector.broadcast %cst_90 : f32 to vector<8x142xf32>
    %70 = arith.maximumf %68, %69 : vector<8x142xf32>
    %71 = vector.broadcast %0 : vector<1x142xf32> to vector<8x142xf32>
    %72 = arith.mulf %70, %71 : vector<8x142xf32>
    %c0_91 = arith.constant 0 : index
    %c19_92 = arith.constant 19 : index
    %73 = vector.load %arg16[%c0_91, %c19_92] : memref<8x180xf32, #tpu.memory_space<vmem>>, vector<8x142xf32>
    tpu.vector_store %arg16[%c0_91, %c19_92], %72 {strides = array<i32>} : memref<8x180xf32, #tpu.memory_space<vmem>>, vector<8x142xf32>,
    %c0_93 = arith.constant 0 : index
    %c0_94 = arith.constant 0 : index
    %74 = vector.load %arg16[%c0_93, %c0_94] : memref<8x180xf32, #tpu.memory_space<vmem>>, vector<8x142xf32>
    %c0_95 = arith.constant 0 : index
    %c1_96 = arith.constant 1 : index
    %75 = vector.load %arg16[%c0_95, %c1_96] : memref<8x180xf32, #tpu.memory_space<vmem>>, vector<8x142xf32>
    %c0_97 = arith.constant 0 : index
    %c2_98 = arith.constant 2 : index
    %76 = vector.load %arg16[%c0_97, %c2_98] : memref<8x180xf32, #tpu.memory_space<vmem>>, vector<8x142xf32>
    %c0_99 = arith.constant 0 : index
    %c18_100 = arith.constant 18 : index
    %77 = vector.load %arg16[%c0_99, %c18_100] : memref<8x180xf32, #tpu.memory_space<vmem>>, vector<8x142xf32>
    %c0_101 = arith.constant 0 : index
    %c19_102 = arith.constant 19 : index
    %78 = vector.load %arg16[%c0_101, %c19_102] : memref<8x180xf32, #tpu.memory_space<vmem>>, vector<8x142xf32>
    %c0_103 = arith.constant 0 : index
    %c20_104 = arith.constant 20 : index
    %79 = vector.load %arg16[%c0_103, %c20_104] : memref<8x180xf32, #tpu.memory_space<vmem>>, vector<8x142xf32>
    %c0_105 = arith.constant 0 : index
    %c36_106 = arith.constant 36 : index
    %80 = vector.load %arg16[%c0_105, %c36_106] : memref<8x180xf32, #tpu.memory_space<vmem>>, vector<8x142xf32>
    %c0_107 = arith.constant 0 : index
    %c37_108 = arith.constant 37 : index
    %81 = vector.load %arg16[%c0_107, %c37_108] : memref<8x180xf32, #tpu.memory_space<vmem>>, vector<8x142xf32>
    %c0_109 = arith.constant 0 : index
    %c38_110 = arith.constant 38 : index
    %82 = vector.load %arg16[%c0_109, %c38_110] : memref<8x180xf32, #tpu.memory_space<vmem>>, vector<8x142xf32>
    %83 = tpu.concatenate %74, %75, %76, %77, %78, %79, %80, %81, %82 in 0 : vector<8x142xf32>, vector<8x142xf32>, vector<8x142xf32>, vector<8x142xf32>, vector<8x142xf32>, vector<8x142xf32>, vector<8x142xf32>, vector<8x142xf32>, vector<8x142xf32> -> vector<72x142xf32>
    %c0_111 = arith.constant 0 : index
    %c0_112 = arith.constant 0 : index
    %84 = vector.load %arg9[%c0_111, %c0_112] : memref<8x72xf32, #tpu.memory_space<vmem>>, vector<8x72xf32>
    %cst_113 = arith.constant dense<0.000000e+00> : vector<8x142xf32>
    %85 = tpu.matmul %84, %83, %cst_113 {dimension_numbers = #tpu.dot_dimension_numbers<[1], [0], [0], [1], [0, 0, 1, 1], [], []>} : vector<8x72xf32>, vector<72x142xf32>, vector<8x142xf32> -> vector<8x142xf32>
    %c0_114 = arith.constant 0 : index
    %c0_115 = arith.constant 0 : index
    %86 = vector.load %arg10[%c0_114, %c0_115] : memref<8x1xf32, #tpu.memory_space<vmem>>, vector<8x1xf32>
    %87 = vector.broadcast %86 : vector<8x1xf32> to vector<8x142xf32>
    %88 = arith.addf %85, %87 : vector<8x142xf32>
    %cst_116 = arith.constant 0.000000e+00 : f32
    %89 = vector.broadcast %cst_116 : f32 to vector<8x142xf32>
    %90 = arith.maximumf %88, %89 : vector<8x142xf32>
    %91 = vector.broadcast %0 : vector<1x142xf32> to vector<8x142xf32>
    %92 = arith.mulf %90, %91 : vector<8x142xf32>
    %c0_117 = arith.constant 0 : index
    %c19_118 = arith.constant 19 : index
    %93 = vector.load %arg16[%c0_117, %c19_118] : memref<8x180xf32, #tpu.memory_space<vmem>>, vector<8x142xf32>
    tpu.vector_store %arg16[%c0_117, %c19_118], %92 {strides = array<i32>} : memref<8x180xf32, #tpu.memory_space<vmem>>, vector<8x142xf32>,
    %c0_119 = arith.constant 0 : index
    %c0_120 = arith.constant 0 : index
    %94 = vector.load %arg16[%c0_119, %c0_120] : memref<8x180xf32, #tpu.memory_space<vmem>>, vector<8x180xf32>
    %95 = tpu.concatenate %94, %3 in 0 : vector<8x180xf32>, vector<8x180xf32> -> vector<16x180xf32>
    %c0_121 = arith.constant 0 : index
    %c0_122 = arith.constant 0 : index
    %96 = vector.load %arg11[%c0_121, %c0_122] : memref<32x16xf32, #tpu.memory_space<vmem>>, vector<32x16xf32>
    %cst_123 = arith.constant dense<0.000000e+00> : vector<32x180xf32>
    %97 = tpu.matmul %96, %95, %cst_123 {dimension_numbers = #tpu.dot_dimension_numbers<[1], [0], [0], [1], [0, 0, 1, 1], [], []>} : vector<32x16xf32>, vector<16x180xf32>, vector<32x180xf32> -> vector<32x180xf32>
    %c0_124 = arith.constant 0 : index
    %c0_125 = arith.constant 0 : index
    %98 = vector.load %arg12[%c0_124, %c0_125] : memref<32x1xf32, #tpu.memory_space<vmem>>, vector<32x1xf32>
    %99 = vector.broadcast %98 : vector<32x1xf32> to vector<32x180xf32>
    %100 = arith.addf %97, %99 : vector<32x180xf32>
    %101 = vector.extract_strided_slice %100 {offsets = [0, 0], sizes = [8, 180], strides = [1, 1]} : vector<32x180xf32> to vector<8x180xf32>
    %102 = arith.negf %101 : vector<8x180xf32>
    %103 = math.exp %102 : vector<8x180xf32>
    %cst_126 = arith.constant 1.000000e+00 : f32
    %104 = vector.broadcast %cst_126 : f32 to vector<8x180xf32>
    %105 = arith.addf %104, %103 : vector<8x180xf32>
    %106 = arith.divf %104, %105 : vector<8x180xf32>
    %107 = vector.extract_strided_slice %100 {offsets = [8, 0], sizes = [8, 180], strides = [1, 1]} : vector<32x180xf32> to vector<8x180xf32>
    %108 = arith.negf %107 : vector<8x180xf32>
    %109 = math.exp %108 : vector<8x180xf32>
    %cst_127 = arith.constant 1.000000e+00 : f32
    %110 = vector.broadcast %cst_127 : f32 to vector<8x180xf32>
    %111 = arith.addf %110, %109 : vector<8x180xf32>
    %112 = arith.divf %110, %111 : vector<8x180xf32>
    %113 = vector.extract_strided_slice %100 {offsets = [16, 0], sizes = [8, 180], strides = [1, 1]} : vector<32x180xf32> to vector<8x180xf32>
    %114 = math.tanh %113 : vector<8x180xf32>
    %115 = vector.extract_strided_slice %100 {offsets = [24, 0], sizes = [8, 180], strides = [1, 1]} : vector<32x180xf32> to vector<8x180xf32>
    %116 = arith.negf %115 : vector<8x180xf32>
    %117 = math.exp %116 : vector<8x180xf32>
    %cst_128 = arith.constant 1.000000e+00 : f32
    %118 = vector.broadcast %cst_128 : f32 to vector<8x180xf32>
    %119 = arith.addf %118, %117 : vector<8x180xf32>
    %120 = arith.divf %118, %119 : vector<8x180xf32>
    %121 = arith.mulf %112, %4 : vector<8x180xf32>
    %122 = arith.mulf %106, %114 : vector<8x180xf32>
    %123 = arith.addf %121, %122 : vector<8x180xf32>
    %124 = math.tanh %123 : vector<8x180xf32>
    %125 = arith.mulf %120, %124 : vector<8x180xf32>
    %c0_129 = arith.constant 0 : index
    %c1_130 = arith.constant 1 : index
    %c0_131 = arith.constant 0 : index
    %c0_132 = arith.constant 0 : index
    %126 = vector.load %arg1[%c0_129, %c1_130, %c0_131, %c0_132] : memref<1x4x8x180xf32, #tpu.memory_space<vmem>>, vector<1x1x8x142xf32>
    %127 = vector.shape_cast %126 : vector<1x1x8x142xf32> to vector<8x142xf32>
    %c0_133 = arith.constant 0 : index
    %c1_134 = arith.constant 1 : index
    %c0_135 = arith.constant 0 : index
    %c1_136 = arith.constant 1 : index
    %128 = vector.load %arg1[%c0_133, %c1_134, %c0_135, %c1_136] : memref<1x4x8x180xf32, #tpu.memory_space<vmem>>, vector<1x1x8x142xf32>
    %129 = vector.shape_cast %128 : vector<1x1x8x142xf32> to vector<8x142xf32>
    %c0_137 = arith.constant 0 : index
    %c1_138 = arith.constant 1 : index
    %c0_139 = arith.constant 0 : index
    %c2_140 = arith.constant 2 : index
    %130 = vector.load %arg1[%c0_137, %c1_138, %c0_139, %c2_140] : memref<1x4x8x180xf32, #tpu.memory_space<vmem>>, vector<1x1x8x142xf32>
    %131 = vector.shape_cast %130 : vector<1x1x8x142xf32> to vector<8x142xf32>
    %c0_141 = arith.constant 0 : index
    %c1_142 = arith.constant 1 : index
    %c0_143 = arith.constant 0 : index
    %c18_144 = arith.constant 18 : index
    %132 = vector.load %arg1[%c0_141, %c1_142, %c0_143, %c18_144] : memref<1x4x8x180xf32, #tpu.memory_space<vmem>>, vector<1x1x8x142xf32>
    %133 = vector.shape_cast %132 : vector<1x1x8x142xf32> to vector<8x142xf32>
    %c0_145 = arith.constant 0 : index
    %c1_146 = arith.constant 1 : index
    %c0_147 = arith.constant 0 : index
    %c19_148 = arith.constant 19 : index
    %134 = vector.load %arg1[%c0_145, %c1_146, %c0_147, %c19_148] : memref<1x4x8x180xf32, #tpu.memory_space<vmem>>, vector<1x1x8x142xf32>
    %135 = vector.shape_cast %134 : vector<1x1x8x142xf32> to vector<8x142xf32>
    %c0_149 = arith.constant 0 : index
    %c1_150 = arith.constant 1 : index
    %c0_151 = arith.constant 0 : index
    %c20_152 = arith.constant 20 : index
    %136 = vector.load %arg1[%c0_149, %c1_150, %c0_151, %c20_152] : memref<1x4x8x180xf32, #tpu.memory_space<vmem>>, vector<1x1x8x142xf32>
    %137 = vector.shape_cast %136 : vector<1x1x8x142xf32> to vector<8x142xf32>
    %c0_153 = arith.constant 0 : index
    %c1_154 = arith.constant 1 : index
    %c0_155 = arith.constant 0 : index
    %c36_156 = arith.constant 36 : index
    %138 = vector.load %arg1[%c0_153, %c1_154, %c0_155, %c36_156] : memref<1x4x8x180xf32, #tpu.memory_space<vmem>>, vector<1x1x8x142xf32>
    %139 = vector.shape_cast %138 : vector<1x1x8x142xf32> to vector<8x142xf32>
    %c0_157 = arith.constant 0 : index
    %c1_158 = arith.constant 1 : index
    %c0_159 = arith.constant 0 : index
    %c37_160 = arith.constant 37 : index
    %140 = vector.load %arg1[%c0_157, %c1_158, %c0_159, %c37_160] : memref<1x4x8x180xf32, #tpu.memory_space<vmem>>, vector<1x1x8x142xf32>
    %141 = vector.shape_cast %140 : vector<1x1x8x142xf32> to vector<8x142xf32>
    %c0_161 = arith.constant 0 : index
    %c1_162 = arith.constant 1 : index
    %c0_163 = arith.constant 0 : index
    %c38_164 = arith.constant 38 : index
    %142 = vector.load %arg1[%c0_161, %c1_162, %c0_163, %c38_164] : memref<1x4x8x180xf32, #tpu.memory_space<vmem>>, vector<1x1x8x142xf32>
    %143 = vector.shape_cast %142 : vector<1x1x8x142xf32> to vector<8x142xf32>
    %144 = tpu.concatenate %127, %129, %131, %133, %135, %137, %139, %141, %143 in 0 : vector<8x142xf32>, vector<8x142xf32>, vector<8x142xf32>, vector<8x142xf32>, vector<8x142xf32>, vector<8x142xf32>, vector<8x142xf32>, vector<8x142xf32>, vector<8x142xf32> -> vector<72x142xf32>
    %c0_165 = arith.constant 0 : index
    %c0_166 = arith.constant 0 : index
    %145 = vector.load %arg3[%c0_165, %c0_166] : memref<8x72xf32, #tpu.memory_space<vmem>>, vector<8x72xf32>
    %cst_167 = arith.constant dense<0.000000e+00> : vector<8x142xf32>
    %146 = tpu.matmul %145, %144, %cst_167 {dimension_numbers = #tpu.dot_dimension_numbers<[1], [0], [0], [1], [0, 0, 1, 1], [], []>} : vector<8x72xf32>, vector<72x142xf32>, vector<8x142xf32> -> vector<8x142xf32>
    %c0_168 = arith.constant 0 : index
    %c0_169 = arith.constant 0 : index
    %147 = vector.load %arg4[%c0_168, %c0_169] : memref<8x1xf32, #tpu.memory_space<vmem>>, vector<8x1xf32>
    %148 = vector.broadcast %147 : vector<8x1xf32> to vector<8x142xf32>
    %149 = arith.addf %146, %148 : vector<8x142xf32>
    %cst_170 = arith.constant 0.000000e+00 : f32
    %150 = vector.broadcast %cst_170 : f32 to vector<8x142xf32>
    %151 = arith.maximumf %149, %150 : vector<8x142xf32>
    %152 = vector.broadcast %0 : vector<1x142xf32> to vector<8x142xf32>
    %153 = arith.mulf %151, %152 : vector<8x142xf32>
    %c0_171 = arith.constant 0 : index
    %c19_172 = arith.constant 19 : index
    %154 = vector.load %arg16[%c0_171, %c19_172] : memref<8x180xf32, #tpu.memory_space<vmem>>, vector<8x142xf32>
    tpu.vector_store %arg16[%c0_171, %c19_172], %153 {strides = array<i32>} : memref<8x180xf32, #tpu.memory_space<vmem>>, vector<8x142xf32>,
    %c0_173 = arith.constant 0 : index
    %c0_174 = arith.constant 0 : index
    %155 = vector.load %arg16[%c0_173, %c0_174] : memref<8x180xf32, #tpu.memory_space<vmem>>, vector<8x142xf32>
    %c0_175 = arith.constant 0 : index
    %c1_176 = arith.constant 1 : index
    %156 = vector.load %arg16[%c0_175, %c1_176] : memref<8x180xf32, #tpu.memory_space<vmem>>, vector<8x142xf32>
    %c0_177 = arith.constant 0 : index
    %c2_178 = arith.constant 2 : index
    %157 = vector.load %arg16[%c0_177, %c2_178] : memref<8x180xf32, #tpu.memory_space<vmem>>, vector<8x142xf32>
    %c0_179 = arith.constant 0 : index
    %c18_180 = arith.constant 18 : index
    %158 = vector.load %arg16[%c0_179, %c18_180] : memref<8x180xf32, #tpu.memory_space<vmem>>, vector<8x142xf32>
    %c0_181 = arith.constant 0 : index
    %c19_182 = arith.constant 19 : index
    %159 = vector.load %arg16[%c0_181, %c19_182] : memref<8x180xf32, #tpu.memory_space<vmem>>, vector<8x142xf32>
    %c0_183 = arith.constant 0 : index
    %c20_184 = arith.constant 20 : index
    %160 = vector.load %arg16[%c0_183, %c20_184] : memref<8x180xf32, #tpu.memory_space<vmem>>, vector<8x142xf32>
    %c0_185 = arith.constant 0 : index
    %c36_186 = arith.constant 36 : index
    %161 = vector.load %arg16[%c0_185, %c36_186] : memref<8x180xf32, #tpu.memory_space<vmem>>, vector<8x142xf32>
    %c0_187 = arith.constant 0 : index
    %c37_188 = arith.constant 37 : index
    %162 = vector.load %arg16[%c0_187, %c37_188] : memref<8x180xf32, #tpu.memory_space<vmem>>, vector<8x142xf32>
    %c0_189 = arith.constant 0 : index
    %c38_190 = arith.constant 38 : index
    %163 = vector.load %arg16[%c0_189, %c38_190] : memref<8x180xf32, #tpu.memory_space<vmem>>, vector<8x142xf32>
    %164 = tpu.concatenate %155, %156, %157, %158, %159, %160, %161, %162, %163 in 0 : vector<8x142xf32>, vector<8x142xf32>, vector<8x142xf32>, vector<8x142xf32>, vector<8x142xf32>, vector<8x142xf32>, vector<8x142xf32>, vector<8x142xf32>, vector<8x142xf32> -> vector<72x142xf32>
    %c0_191 = arith.constant 0 : index
    %c0_192 = arith.constant 0 : index
    %165 = vector.load %arg5[%c0_191, %c0_192] : memref<8x72xf32, #tpu.memory_space<vmem>>, vector<8x72xf32>
    %cst_193 = arith.constant dense<0.000000e+00> : vector<8x142xf32>
    %166 = tpu.matmul %165, %164, %cst_193 {dimension_numbers = #tpu.dot_dimension_numbers<[1], [0], [0], [1], [0, 0, 1, 1], [], []>} : vector<8x72xf32>, vector<72x142xf32>, vector<8x142xf32> -> vector<8x142xf32>
    %c0_194 = arith.constant 0 : index
    %c0_195 = arith.constant 0 : index
    %167 = vector.load %arg6[%c0_194, %c0_195] : memref<8x1xf32, #tpu.memory_space<vmem>>, vector<8x1xf32>
    %168 = vector.broadcast %167 : vector<8x1xf32> to vector<8x142xf32>
    %169 = arith.addf %166, %168 : vector<8x142xf32>
    %cst_196 = arith.constant 0.000000e+00 : f32
    %170 = vector.broadcast %cst_196 : f32 to vector<8x142xf32>
    %171 = arith.maximumf %169, %170 : vector<8x142xf32>
    %172 = vector.broadcast %0 : vector<1x142xf32> to vector<8x142xf32>
    %173 = arith.mulf %171, %172 : vector<8x142xf32>
    %c0_197 = arith.constant 0 : index
    %c19_198 = arith.constant 19 : index
    %174 = vector.load %arg16[%c0_197, %c19_198] : memref<8x180xf32, #tpu.memory_space<vmem>>, vector<8x142xf32>
    tpu.vector_store %arg16[%c0_197, %c19_198], %173 {strides = array<i32>} : memref<8x180xf32, #tpu.memory_space<vmem>>, vector<8x142xf32>,
    %c0_199 = arith.constant 0 : index
    %c0_200 = arith.constant 0 : index
    %175 = vector.load %arg16[%c0_199, %c0_200] : memref<8x180xf32, #tpu.memory_space<vmem>>, vector<8x142xf32>
    %c0_201 = arith.constant 0 : index
    %c1_202 = arith.constant 1 : index
    %176 = vector.load %arg16[%c0_201, %c1_202] : memref<8x180xf32, #tpu.memory_space<vmem>>, vector<8x142xf32>
    %c0_203 = arith.constant 0 : index
    %c2_204 = arith.constant 2 : index
    %177 = vector.load %arg16[%c0_203, %c2_204] : memref<8x180xf32, #tpu.memory_space<vmem>>, vector<8x142xf32>
    %c0_205 = arith.constant 0 : index
    %c18_206 = arith.constant 18 : index
    %178 = vector.load %arg16[%c0_205, %c18_206] : memref<8x180xf32, #tpu.memory_space<vmem>>, vector<8x142xf32>
    %c0_207 = arith.constant 0 : index
    %c19_208 = arith.constant 19 : index
    %179 = vector.load %arg16[%c0_207, %c19_208] : memref<8x180xf32, #tpu.memory_space<vmem>>, vector<8x142xf32>
    %c0_209 = arith.constant 0 : index
    %c20_210 = arith.constant 20 : index
    %180 = vector.load %arg16[%c0_209, %c20_210] : memref<8x180xf32, #tpu.memory_space<vmem>>, vector<8x142xf32>
    %c0_211 = arith.constant 0 : index
    %c36_212 = arith.constant 36 : index
    %181 = vector.load %arg16[%c0_211, %c36_212] : memref<8x180xf32, #tpu.memory_space<vmem>>, vector<8x142xf32>
    %c0_213 = arith.constant 0 : index
    %c37_214 = arith.constant 37 : index
    %182 = vector.load %arg16[%c0_213, %c37_214] : memref<8x180xf32, #tpu.memory_space<vmem>>, vector<8x142xf32>
    %c0_215 = arith.constant 0 : index
    %c38_216 = arith.constant 38 : index
    %183 = vector.load %arg16[%c0_215, %c38_216] : memref<8x180xf32, #tpu.memory_space<vmem>>, vector<8x142xf32>
    %184 = tpu.concatenate %175, %176, %177, %178, %179, %180, %181, %182, %183 in 0 : vector<8x142xf32>, vector<8x142xf32>, vector<8x142xf32>, vector<8x142xf32>, vector<8x142xf32>, vector<8x142xf32>, vector<8x142xf32>, vector<8x142xf32>, vector<8x142xf32> -> vector<72x142xf32>
    %c0_217 = arith.constant 0 : index
    %c0_218 = arith.constant 0 : index
    %185 = vector.load %arg7[%c0_217, %c0_218] : memref<8x72xf32, #tpu.memory_space<vmem>>, vector<8x72xf32>
    %cst_219 = arith.constant dense<0.000000e+00> : vector<8x142xf32>
    %186 = tpu.matmul %185, %184, %cst_219 {dimension_numbers = #tpu.dot_dimension_numbers<[1], [0], [0], [1], [0, 0, 1, 1], [], []>} : vector<8x72xf32>, vector<72x142xf32>, vector<8x142xf32> -> vector<8x142xf32>
    %c0_220 = arith.constant 0 : index
    %c0_221 = arith.constant 0 : index
    %187 = vector.load %arg8[%c0_220, %c0_221] : memref<8x1xf32, #tpu.memory_space<vmem>>, vector<8x1xf32>
    %188 = vector.broadcast %187 : vector<8x1xf32> to vector<8x142xf32>
    %189 = arith.addf %186, %188 : vector<8x142xf32>
    %cst_222 = arith.constant 0.000000e+00 : f32
    %190 = vector.broadcast %cst_222 : f32 to vector<8x142xf32>
    %191 = arith.maximumf %189, %190 : vector<8x142xf32>
    %192 = vector.broadcast %0 : vector<1x142xf32> to vector<8x142xf32>
    %193 = arith.mulf %191, %192 : vector<8x142xf32>
    %c0_223 = arith.constant 0 : index
    %c19_224 = arith.constant 19 : index
    %194 = vector.load %arg16[%c0_223, %c19_224] : memref<8x180xf32, #tpu.memory_space<vmem>>, vector<8x142xf32>
    tpu.vector_store %arg16[%c0_223, %c19_224], %193 {strides = array<i32>} : memref<8x180xf32, #tpu.memory_space<vmem>>, vector<8x142xf32>,
    %c0_225 = arith.constant 0 : index
    %c0_226 = arith.constant 0 : index
    %195 = vector.load %arg16[%c0_225, %c0_226] : memref<8x180xf32, #tpu.memory_space<vmem>>, vector<8x142xf32>
    %c0_227 = arith.constant 0 : index
    %c1_228 = arith.constant 1 : index
    %196 = vector.load %arg16[%c0_227, %c1_228] : memref<8x180xf32, #tpu.memory_space<vmem>>, vector<8x142xf32>
    %c0_229 = arith.constant 0 : index
    %c2_230 = arith.constant 2 : index
    %197 = vector.load %arg16[%c0_229, %c2_230] : memref<8x180xf32, #tpu.memory_space<vmem>>, vector<8x142xf32>
    %c0_231 = arith.constant 0 : index
    %c18_232 = arith.constant 18 : index
    %198 = vector.load %arg16[%c0_231, %c18_232] : memref<8x180xf32, #tpu.memory_space<vmem>>, vector<8x142xf32>
    %c0_233 = arith.constant 0 : index
    %c19_234 = arith.constant 19 : index
    %199 = vector.load %arg16[%c0_233, %c19_234] : memref<8x180xf32, #tpu.memory_space<vmem>>, vector<8x142xf32>
    %c0_235 = arith.constant 0 : index
    %c20_236 = arith.constant 20 : index
    %200 = vector.load %arg16[%c0_235, %c20_236] : memref<8x180xf32, #tpu.memory_space<vmem>>, vector<8x142xf32>
    %c0_237 = arith.constant 0 : index
    %c36_238 = arith.constant 36 : index
    %201 = vector.load %arg16[%c0_237, %c36_238] : memref<8x180xf32, #tpu.memory_space<vmem>>, vector<8x142xf32>
    %c0_239 = arith.constant 0 : index
    %c37_240 = arith.constant 37 : index
    %202 = vector.load %arg16[%c0_239, %c37_240] : memref<8x180xf32, #tpu.memory_space<vmem>>, vector<8x142xf32>
    %c0_241 = arith.constant 0 : index
    %c38_242 = arith.constant 38 : index
    %203 = vector.load %arg16[%c0_241, %c38_242] : memref<8x180xf32, #tpu.memory_space<vmem>>, vector<8x142xf32>
    %204 = tpu.concatenate %195, %196, %197, %198, %199, %200, %201, %202, %203 in 0 : vector<8x142xf32>, vector<8x142xf32>, vector<8x142xf32>, vector<8x142xf32>, vector<8x142xf32>, vector<8x142xf32>, vector<8x142xf32>, vector<8x142xf32>, vector<8x142xf32> -> vector<72x142xf32>
    %c0_243 = arith.constant 0 : index
    %c0_244 = arith.constant 0 : index
    %205 = vector.load %arg9[%c0_243, %c0_244] : memref<8x72xf32, #tpu.memory_space<vmem>>, vector<8x72xf32>
    %cst_245 = arith.constant dense<0.000000e+00> : vector<8x142xf32>
    %206 = tpu.matmul %205, %204, %cst_245 {dimension_numbers = #tpu.dot_dimension_numbers<[1], [0], [0], [1], [0, 0, 1, 1], [], []>} : vector<8x72xf32>, vector<72x142xf32>, vector<8x142xf32> -> vector<8x142xf32>
    %c0_246 = arith.constant 0 : index
    %c0_247 = arith.constant 0 : index
    %207 = vector.load %arg10[%c0_246, %c0_247] : memref<8x1xf32, #tpu.memory_space<vmem>>, vector<8x1xf32>
    %208 = vector.broadcast %207 : vector<8x1xf32> to vector<8x142xf32>
    %209 = arith.addf %206, %208 : vector<8x142xf32>
    %cst_248 = arith.constant 0.000000e+00 : f32
    %210 = vector.broadcast %cst_248 : f32 to vector<8x142xf32>
    %211 = arith.maximumf %209, %210 : vector<8x142xf32>
    %212 = vector.broadcast %0 : vector<1x142xf32> to vector<8x142xf32>
    %213 = arith.mulf %211, %212 : vector<8x142xf32>
    %c0_249 = arith.constant 0 : index
    %c19_250 = arith.constant 19 : index
    %214 = vector.load %arg16[%c0_249, %c19_250] : memref<8x180xf32, #tpu.memory_space<vmem>>, vector<8x142xf32>
    tpu.vector_store %arg16[%c0_249, %c19_250], %213 {strides = array<i32>} : memref<8x180xf32, #tpu.memory_space<vmem>>, vector<8x142xf32>,
    %c0_251 = arith.constant 0 : index
    %c0_252 = arith.constant 0 : index
    %215 = vector.load %arg16[%c0_251, %c0_252] : memref<8x180xf32, #tpu.memory_space<vmem>>, vector<8x180xf32>
    %216 = tpu.concatenate %215, %125 in 0 : vector<8x180xf32>, vector<8x180xf32> -> vector<16x180xf32>
    %c0_253 = arith.constant 0 : index
    %c0_254 = arith.constant 0 : index
    %217 = vector.load %arg11[%c0_253, %c0_254] : memref<32x16xf32, #tpu.memory_space<vmem>>, vector<32x16xf32>
    %cst_255 = arith.constant dense<0.000000e+00> : vector<32x180xf32>
    %218 = tpu.matmul %217, %216, %cst_255 {dimension_numbers = #tpu.dot_dimension_numbers<[1], [0], [0], [1], [0, 0, 1, 1], [], []>} : vector<32x16xf32>, vector<16x180xf32>, vector<32x180xf32> -> vector<32x180xf32>
    %c0_256 = arith.constant 0 : index
    %c0_257 = arith.constant 0 : index
    %219 = vector.load %arg12[%c0_256, %c0_257] : memref<32x1xf32, #tpu.memory_space<vmem>>, vector<32x1xf32>
    %220 = vector.broadcast %219 : vector<32x1xf32> to vector<32x180xf32>
    %221 = arith.addf %218, %220 : vector<32x180xf32>
    %222 = vector.extract_strided_slice %221 {offsets = [0, 0], sizes = [8, 180], strides = [1, 1]} : vector<32x180xf32> to vector<8x180xf32>
    %223 = arith.negf %222 : vector<8x180xf32>
    %224 = math.exp %223 : vector<8x180xf32>
    %cst_258 = arith.constant 1.000000e+00 : f32
    %225 = vector.broadcast %cst_258 : f32 to vector<8x180xf32>
    %226 = arith.addf %225, %224 : vector<8x180xf32>
    %227 = arith.divf %225, %226 : vector<8x180xf32>
    %228 = vector.extract_strided_slice %221 {offsets = [8, 0], sizes = [8, 180], strides = [1, 1]} : vector<32x180xf32> to vector<8x180xf32>
    %229 = arith.negf %228 : vector<8x180xf32>
    %230 = math.exp %229 : vector<8x180xf32>
    %cst_259 = arith.constant 1.000000e+00 : f32
    %231 = vector.broadcast %cst_259 : f32 to vector<8x180xf32>
    %232 = arith.addf %231, %230 : vector<8x180xf32>
    %233 = arith.divf %231, %232 : vector<8x180xf32>
    %234 = vector.extract_strided_slice %221 {offsets = [16, 0], sizes = [8, 180], strides = [1, 1]} : vector<32x180xf32> to vector<8x180xf32>
    %235 = math.tanh %234 : vector<8x180xf32>
    %236 = vector.extract_strided_slice %221 {offsets = [24, 0], sizes = [8, 180], strides = [1, 1]} : vector<32x180xf32> to vector<8x180xf32>
    %237 = arith.negf %236 : vector<8x180xf32>
    %238 = math.exp %237 : vector<8x180xf32>
    %cst_260 = arith.constant 1.000000e+00 : f32
    %239 = vector.broadcast %cst_260 : f32 to vector<8x180xf32>
    %240 = arith.addf %239, %238 : vector<8x180xf32>
    %241 = arith.divf %239, %240 : vector<8x180xf32>
    %242 = arith.mulf %233, %123 : vector<8x180xf32>
    %243 = arith.mulf %227, %235 : vector<8x180xf32>
    %244 = arith.addf %242, %243 : vector<8x180xf32>
    %245 = math.tanh %244 : vector<8x180xf32>
    %246 = arith.mulf %241, %245 : vector<8x180xf32>
    %c0_261 = arith.constant 0 : index
    %c2_262 = arith.constant 2 : index
    %c0_263 = arith.constant 0 : index
    %c0_264 = arith.constant 0 : index
    %247 = vector.load %arg1[%c0_261, %c2_262, %c0_263, %c0_264] : memref<1x4x8x180xf32, #tpu.memory_space<vmem>>, vector<1x1x8x142xf32>
    %248 = vector.shape_cast %247 : vector<1x1x8x142xf32> to vector<8x142xf32>
    %c0_265 = arith.constant 0 : index
    %c2_266 = arith.constant 2 : index
    %c0_267 = arith.constant 0 : index
    %c1_268 = arith.constant 1 : index
    %249 = vector.load %arg1[%c0_265, %c2_266, %c0_267, %c1_268] : memref<1x4x8x180xf32, #tpu.memory_space<vmem>>, vector<1x1x8x142xf32>
    %250 = vector.shape_cast %249 : vector<1x1x8x142xf32> to vector<8x142xf32>
    %c0_269 = arith.constant 0 : index
    %c2_270 = arith.constant 2 : index
    %c0_271 = arith.constant 0 : index
    %c2_272 = arith.constant 2 : index
    %251 = vector.load %arg1[%c0_269, %c2_270, %c0_271, %c2_272] : memref<1x4x8x180xf32, #tpu.memory_space<vmem>>, vector<1x1x8x142xf32>
    %252 = vector.shape_cast %251 : vector<1x1x8x142xf32> to vector<8x142xf32>
    %c0_273 = arith.constant 0 : index
    %c2_274 = arith.constant 2 : index
    %c0_275 = arith.constant 0 : index
    %c18_276 = arith.constant 18 : index
    %253 = vector.load %arg1[%c0_273, %c2_274, %c0_275, %c18_276] : memref<1x4x8x180xf32, #tpu.memory_space<vmem>>, vector<1x1x8x142xf32>
    %254 = vector.shape_cast %253 : vector<1x1x8x142xf32> to vector<8x142xf32>
    %c0_277 = arith.constant 0 : index
    %c2_278 = arith.constant 2 : index
    %c0_279 = arith.constant 0 : index
    %c19_280 = arith.constant 19 : index
    %255 = vector.load %arg1[%c0_277, %c2_278, %c0_279, %c19_280] : memref<1x4x8x180xf32, #tpu.memory_space<vmem>>, vector<1x1x8x142xf32>
    %256 = vector.shape_cast %255 : vector<1x1x8x142xf32> to vector<8x142xf32>
    %c0_281 = arith.constant 0 : index
    %c2_282 = arith.constant 2 : index
    %c0_283 = arith.constant 0 : index
    %c20_284 = arith.constant 20 : index
    %257 = vector.load %arg1[%c0_281, %c2_282, %c0_283, %c20_284] : memref<1x4x8x180xf32, #tpu.memory_space<vmem>>, vector<1x1x8x142xf32>
    %258 = vector.shape_cast %257 : vector<1x1x8x142xf32> to vector<8x142xf32>
    %c0_285 = arith.constant 0 : index
    %c2_286 = arith.constant 2 : index
    %c0_287 = arith.constant 0 : index
    %c36_288 = arith.constant 36 : index
    %259 = vector.load %arg1[%c0_285, %c2_286, %c0_287, %c36_288] : memref<1x4x8x180xf32, #tpu.memory_space<vmem>>, vector<1x1x8x142xf32>
    %260 = vector.shape_cast %259 : vector<1x1x8x142xf32> to vector<8x142xf32>
    %c0_289 = arith.constant 0 : index
    %c2_290 = arith.constant 2 : index
    %c0_291 = arith.constant 0 : index
    %c37_292 = arith.constant 37 : index
    %261 = vector.load %arg1[%c0_289, %c2_290, %c0_291, %c37_292] : memref<1x4x8x180xf32, #tpu.memory_space<vmem>>, vector<1x1x8x142xf32>
    %262 = vector.shape_cast %261 : vector<1x1x8x142xf32> to vector<8x142xf32>
    %c0_293 = arith.constant 0 : index
    %c2_294 = arith.constant 2 : index
    %c0_295 = arith.constant 0 : index
    %c38_296 = arith.constant 38 : index
    %263 = vector.load %arg1[%c0_293, %c2_294, %c0_295, %c38_296] : memref<1x4x8x180xf32, #tpu.memory_space<vmem>>, vector<1x1x8x142xf32>
    %264 = vector.shape_cast %263 : vector<1x1x8x142xf32> to vector<8x142xf32>
    %265 = tpu.concatenate %248, %250, %252, %254, %256, %258, %260, %262, %264 in 0 : vector<8x142xf32>, vector<8x142xf32>, vector<8x142xf32>, vector<8x142xf32>, vector<8x142xf32>, vector<8x142xf32>, vector<8x142xf32>, vector<8x142xf32>, vector<8x142xf32> -> vector<72x142xf32>
    %c0_297 = arith.constant 0 : index
    %c0_298 = arith.constant 0 : index
    %266 = vector.load %arg3[%c0_297, %c0_298] : memref<8x72xf32, #tpu.memory_space<vmem>>, vector<8x72xf32>
    %cst_299 = arith.constant dense<0.000000e+00> : vector<8x142xf32>
    %267 = tpu.matmul %266, %265, %cst_299 {dimension_numbers = #tpu.dot_dimension_numbers<[1], [0], [0], [1], [0, 0, 1, 1], [], []>} : vector<8x72xf32>, vector<72x142xf32>, vector<8x142xf32> -> vector<8x142xf32>
    %c0_300 = arith.constant 0 : index
    %c0_301 = arith.constant 0 : index
    %268 = vector.load %arg4[%c0_300, %c0_301] : memref<8x1xf32, #tpu.memory_space<vmem>>, vector<8x1xf32>
    %269 = vector.broadcast %268 : vector<8x1xf32> to vector<8x142xf32>
    %270 = arith.addf %267, %269 : vector<8x142xf32>
    %cst_302 = arith.constant 0.000000e+00 : f32
    %271 = vector.broadcast %cst_302 : f32 to vector<8x142xf32>
    %272 = arith.maximumf %270, %271 : vector<8x142xf32>
    %273 = vector.broadcast %0 : vector<1x142xf32> to vector<8x142xf32>
    %274 = arith.mulf %272, %273 : vector<8x142xf32>
    %c0_303 = arith.constant 0 : index
    %c19_304 = arith.constant 19 : index
    %275 = vector.load %arg16[%c0_303, %c19_304] : memref<8x180xf32, #tpu.memory_space<vmem>>, vector<8x142xf32>
    tpu.vector_store %arg16[%c0_303, %c19_304], %274 {strides = array<i32>} : memref<8x180xf32, #tpu.memory_space<vmem>>, vector<8x142xf32>,
    %c0_305 = arith.constant 0 : index
    %c0_306 = arith.constant 0 : index
    %276 = vector.load %arg16[%c0_305, %c0_306] : memref<8x180xf32, #tpu.memory_space<vmem>>, vector<8x142xf32>
    %c0_307 = arith.constant 0 : index
    %c1_308 = arith.constant 1 : index
    %277 = vector.load %arg16[%c0_307, %c1_308] : memref<8x180xf32, #tpu.memory_space<vmem>>, vector<8x142xf32>
    %c0_309 = arith.constant 0 : index
    %c2_310 = arith.constant 2 : index
    %278 = vector.load %arg16[%c0_309, %c2_310] : memref<8x180xf32, #tpu.memory_space<vmem>>, vector<8x142xf32>
    %c0_311 = arith.constant 0 : index
    %c18_312 = arith.constant 18 : index
    %279 = vector.load %arg16[%c0_311, %c18_312] : memref<8x180xf32, #tpu.memory_space<vmem>>, vector<8x142xf32>
    %c0_313 = arith.constant 0 : index
    %c19_314 = arith.constant 19 : index
    %280 = vector.load %arg16[%c0_313, %c19_314] : memref<8x180xf32, #tpu.memory_space<vmem>>, vector<8x142xf32>
    %c0_315 = arith.constant 0 : index
    %c20_316 = arith.constant 20 : index
    %281 = vector.load %arg16[%c0_315, %c20_316] : memref<8x180xf32, #tpu.memory_space<vmem>>, vector<8x142xf32>
    %c0_317 = arith.constant 0 : index
    %c36_318 = arith.constant 36 : index
    %282 = vector.load %arg16[%c0_317, %c36_318] : memref<8x180xf32, #tpu.memory_space<vmem>>, vector<8x142xf32>
    %c0_319 = arith.constant 0 : index
    %c37_320 = arith.constant 37 : index
    %283 = vector.load %arg16[%c0_319, %c37_320] : memref<8x180xf32, #tpu.memory_space<vmem>>, vector<8x142xf32>
    %c0_321 = arith.constant 0 : index
    %c38_322 = arith.constant 38 : index
    %284 = vector.load %arg16[%c0_321, %c38_322] : memref<8x180xf32, #tpu.memory_space<vmem>>, vector<8x142xf32>
    %285 = tpu.concatenate %276, %277, %278, %279, %280, %281, %282, %283, %284 in 0 : vector<8x142xf32>, vector<8x142xf32>, vector<8x142xf32>, vector<8x142xf32>, vector<8x142xf32>, vector<8x142xf32>, vector<8x142xf32>, vector<8x142xf32>, vector<8x142xf32> -> vector<72x142xf32>
    %c0_323 = arith.constant 0 : index
    %c0_324 = arith.constant 0 : index
    %286 = vector.load %arg5[%c0_323, %c0_324] : memref<8x72xf32, #tpu.memory_space<vmem>>, vector<8x72xf32>
    %cst_325 = arith.constant dense<0.000000e+00> : vector<8x142xf32>
    %287 = tpu.matmul %286, %285, %cst_325 {dimension_numbers = #tpu.dot_dimension_numbers<[1], [0], [0], [1], [0, 0, 1, 1], [], []>} : vector<8x72xf32>, vector<72x142xf32>, vector<8x142xf32> -> vector<8x142xf32>
    %c0_326 = arith.constant 0 : index
    %c0_327 = arith.constant 0 : index
    %288 = vector.load %arg6[%c0_326, %c0_327] : memref<8x1xf32, #tpu.memory_space<vmem>>, vector<8x1xf32>
    %289 = vector.broadcast %288 : vector<8x1xf32> to vector<8x142xf32>
    %290 = arith.addf %287, %289 : vector<8x142xf32>
    %cst_328 = arith.constant 0.000000e+00 : f32
    %291 = vector.broadcast %cst_328 : f32 to vector<8x142xf32>
    %292 = arith.maximumf %290, %291 : vector<8x142xf32>
    %293 = vector.broadcast %0 : vector<1x142xf32> to vector<8x142xf32>
    %294 = arith.mulf %292, %293 : vector<8x142xf32>
    %c0_329 = arith.constant 0 : index
    %c19_330 = arith.constant 19 : index
    %295 = vector.load %arg16[%c0_329, %c19_330] : memref<8x180xf32, #tpu.memory_space<vmem>>, vector<8x142xf32>
    tpu.vector_store %arg16[%c0_329, %c19_330], %294 {strides = array<i32>} : memref<8x180xf32, #tpu.memory_space<vmem>>, vector<8x142xf32>,
    %c0_331 = arith.constant 0 : index
    %c0_332 = arith.constant 0 : index
    %296 = vector.load %arg16[%c0_331, %c0_332] : memref<8x180xf32, #tpu.memory_space<vmem>>, vector<8x142xf32>
    %c0_333 = arith.constant 0 : index
    %c1_334 = arith.constant 1 : index
    %297 = vector.load %arg16[%c0_333, %c1_334] : memref<8x180xf32, #tpu.memory_space<vmem>>, vector<8x142xf32>
    %c0_335 = arith.constant 0 : index
    %c2_336 = arith.constant 2 : index
    %298 = vector.load %arg16[%c0_335, %c2_336] : memref<8x180xf32, #tpu.memory_space<vmem>>, vector<8x142xf32>
    %c0_337 = arith.constant 0 : index
    %c18_338 = arith.constant 18 : index
    %299 = vector.load %arg16[%c0_337, %c18_338] : memref<8x180xf32, #tpu.memory_space<vmem>>, vector<8x142xf32>
    %c0_339 = arith.constant 0 : index
    %c19_340 = arith.constant 19 : index
    %300 = vector.load %arg16[%c0_339, %c19_340] : memref<8x180xf32, #tpu.memory_space<vmem>>, vector<8x142xf32>
    %c0_341 = arith.constant 0 : index
    %c20_342 = arith.constant 20 : index
    %301 = vector.load %arg16[%c0_341, %c20_342] : memref<8x180xf32, #tpu.memory_space<vmem>>, vector<8x142xf32>
    %c0_343 = arith.constant 0 : index
    %c36_344 = arith.constant 36 : index
    %302 = vector.load %arg16[%c0_343, %c36_344] : memref<8x180xf32, #tpu.memory_space<vmem>>, vector<8x142xf32>
    %c0_345 = arith.constant 0 : index
    %c37_346 = arith.constant 37 : index
    %303 = vector.load %arg16[%c0_345, %c37_346] : memref<8x180xf32, #tpu.memory_space<vmem>>, vector<8x142xf32>
    %c0_347 = arith.constant 0 : index
    %c38_348 = arith.constant 38 : index
    %304 = vector.load %arg16[%c0_347, %c38_348] : memref<8x180xf32, #tpu.memory_space<vmem>>, vector<8x142xf32>
    %305 = tpu.concatenate %296, %297, %298, %299, %300, %301, %302, %303, %304 in 0 : vector<8x142xf32>, vector<8x142xf32>, vector<8x142xf32>, vector<8x142xf32>, vector<8x142xf32>, vector<8x142xf32>, vector<8x142xf32>, vector<8x142xf32>, vector<8x142xf32> -> vector<72x142xf32>
    %c0_349 = arith.constant 0 : index
    %c0_350 = arith.constant 0 : index
    %306 = vector.load %arg7[%c0_349, %c0_350] : memref<8x72xf32, #tpu.memory_space<vmem>>, vector<8x72xf32>
    %cst_351 = arith.constant dense<0.000000e+00> : vector<8x142xf32>
    %307 = tpu.matmul %306, %305, %cst_351 {dimension_numbers = #tpu.dot_dimension_numbers<[1], [0], [0], [1], [0, 0, 1, 1], [], []>} : vector<8x72xf32>, vector<72x142xf32>, vector<8x142xf32> -> vector<8x142xf32>
    %c0_352 = arith.constant 0 : index
    %c0_353 = arith.constant 0 : index
    %308 = vector.load %arg8[%c0_352, %c0_353] : memref<8x1xf32, #tpu.memory_space<vmem>>, vector<8x1xf32>
    %309 = vector.broadcast %308 : vector<8x1xf32> to vector<8x142xf32>
    %310 = arith.addf %307, %309 : vector<8x142xf32>
    %cst_354 = arith.constant 0.000000e+00 : f32
    %311 = vector.broadcast %cst_354 : f32 to vector<8x142xf32>
    %312 = arith.maximumf %310, %311 : vector<8x142xf32>
    %313 = vector.broadcast %0 : vector<1x142xf32> to vector<8x142xf32>
    %314 = arith.mulf %312, %313 : vector<8x142xf32>
    %c0_355 = arith.constant 0 : index
    %c19_356 = arith.constant 19 : index
    %315 = vector.load %arg16[%c0_355, %c19_356] : memref<8x180xf32, #tpu.memory_space<vmem>>, vector<8x142xf32>
    tpu.vector_store %arg16[%c0_355, %c19_356], %314 {strides = array<i32>} : memref<8x180xf32, #tpu.memory_space<vmem>>, vector<8x142xf32>,
    %c0_357 = arith.constant 0 : index
    %c0_358 = arith.constant 0 : index
    %316 = vector.load %arg16[%c0_357, %c0_358] : memref<8x180xf32, #tpu.memory_space<vmem>>, vector<8x142xf32>
    %c0_359 = arith.constant 0 : index
    %c1_360 = arith.constant 1 : index
    %317 = vector.load %arg16[%c0_359, %c1_360] : memref<8x180xf32, #tpu.memory_space<vmem>>, vector<8x142xf32>
    %c0_361 = arith.constant 0 : index
    %c2_362 = arith.constant 2 : index
    %318 = vector.load %arg16[%c0_361, %c2_362] : memref<8x180xf32, #tpu.memory_space<vmem>>, vector<8x142xf32>
    %c0_363 = arith.constant 0 : index
    %c18_364 = arith.constant 18 : index
    %319 = vector.load %arg16[%c0_363, %c18_364] : memref<8x180xf32, #tpu.memory_space<vmem>>, vector<8x142xf32>
    %c0_365 = arith.constant 0 : index
    %c19_366 = arith.constant 19 : index
    %320 = vector.load %arg16[%c0_365, %c19_366] : memref<8x180xf32, #tpu.memory_space<vmem>>, vector<8x142xf32>
    %c0_367 = arith.constant 0 : index
    %c20_368 = arith.constant 20 : index
    %321 = vector.load %arg16[%c0_367, %c20_368] : memref<8x180xf32, #tpu.memory_space<vmem>>, vector<8x142xf32>
    %c0_369 = arith.constant 0 : index
    %c36_370 = arith.constant 36 : index
    %322 = vector.load %arg16[%c0_369, %c36_370] : memref<8x180xf32, #tpu.memory_space<vmem>>, vector<8x142xf32>
    %c0_371 = arith.constant 0 : index
    %c37_372 = arith.constant 37 : index
    %323 = vector.load %arg16[%c0_371, %c37_372] : memref<8x180xf32, #tpu.memory_space<vmem>>, vector<8x142xf32>
    %c0_373 = arith.constant 0 : index
    %c38_374 = arith.constant 38 : index
    %324 = vector.load %arg16[%c0_373, %c38_374] : memref<8x180xf32, #tpu.memory_space<vmem>>, vector<8x142xf32>
    %325 = tpu.concatenate %316, %317, %318, %319, %320, %321, %322, %323, %324 in 0 : vector<8x142xf32>, vector<8x142xf32>, vector<8x142xf32>, vector<8x142xf32>, vector<8x142xf32>, vector<8x142xf32>, vector<8x142xf32>, vector<8x142xf32>, vector<8x142xf32> -> vector<72x142xf32>
    %c0_375 = arith.constant 0 : index
    %c0_376 = arith.constant 0 : index
    %326 = vector.load %arg9[%c0_375, %c0_376] : memref<8x72xf32, #tpu.memory_space<vmem>>, vector<8x72xf32>
    %cst_377 = arith.constant dense<0.000000e+00> : vector<8x142xf32>
    %327 = tpu.matmul %326, %325, %cst_377 {dimension_numbers = #tpu.dot_dimension_numbers<[1], [0], [0], [1], [0, 0, 1, 1], [], []>} : vector<8x72xf32>, vector<72x142xf32>, vector<8x142xf32> -> vector<8x142xf32>
    %c0_378 = arith.constant 0 : index
    %c0_379 = arith.constant 0 : index
    %328 = vector.load %arg10[%c0_378, %c0_379] : memref<8x1xf32, #tpu.memory_space<vmem>>, vector<8x1xf32>
    %329 = vector.broadcast %328 : vector<8x1xf32> to vector<8x142xf32>
    %330 = arith.addf %327, %329 : vector<8x142xf32>
    %cst_380 = arith.constant 0.000000e+00 : f32
    %331 = vector.broadcast %cst_380 : f32 to vector<8x142xf32>
    %332 = arith.maximumf %330, %331 : vector<8x142xf32>
    %333 = vector.broadcast %0 : vector<1x142xf32> to vector<8x142xf32>
    %334 = arith.mulf %332, %333 : vector<8x142xf32>
    %c0_381 = arith.constant 0 : index
    %c19_382 = arith.constant 19 : index
    %335 = vector.load %arg16[%c0_381, %c19_382] : memref<8x180xf32, #tpu.memory_space<vmem>>, vector<8x142xf32>
    tpu.vector_store %arg16[%c0_381, %c19_382], %334 {strides = array<i32>} : memref<8x180xf32, #tpu.memory_space<vmem>>, vector<8x142xf32>,
    %c0_383 = arith.constant 0 : index
    %c0_384 = arith.constant 0 : index
    %336 = vector.load %arg16[%c0_383, %c0_384] : memref<8x180xf32, #tpu.memory_space<vmem>>, vector<8x180xf32>
    %337 = tpu.concatenate %336, %246 in 0 : vector<8x180xf32>, vector<8x180xf32> -> vector<16x180xf32>
    %c0_385 = arith.constant 0 : index
    %c0_386 = arith.constant 0 : index
    %338 = vector.load %arg11[%c0_385, %c0_386] : memref<32x16xf32, #tpu.memory_space<vmem>>, vector<32x16xf32>
    %cst_387 = arith.constant dense<0.000000e+00> : vector<32x180xf32>
    %339 = tpu.matmul %338, %337, %cst_387 {dimension_numbers = #tpu.dot_dimension_numbers<[1], [0], [0], [1], [0, 0, 1, 1], [], []>} : vector<32x16xf32>, vector<16x180xf32>, vector<32x180xf32> -> vector<32x180xf32>
    %c0_388 = arith.constant 0 : index
    %c0_389 = arith.constant 0 : index
    %340 = vector.load %arg12[%c0_388, %c0_389] : memref<32x1xf32, #tpu.memory_space<vmem>>, vector<32x1xf32>
    %341 = vector.broadcast %340 : vector<32x1xf32> to vector<32x180xf32>
    %342 = arith.addf %339, %341 : vector<32x180xf32>
    %343 = vector.extract_strided_slice %342 {offsets = [0, 0], sizes = [8, 180], strides = [1, 1]} : vector<32x180xf32> to vector<8x180xf32>
    %344 = arith.negf %343 : vector<8x180xf32>
    %345 = math.exp %344 : vector<8x180xf32>
    %cst_390 = arith.constant 1.000000e+00 : f32
    %346 = vector.broadcast %cst_390 : f32 to vector<8x180xf32>
    %347 = arith.addf %346, %345 : vector<8x180xf32>
    %348 = arith.divf %346, %347 : vector<8x180xf32>
    %349 = vector.extract_strided_slice %342 {offsets = [8, 0], sizes = [8, 180], strides = [1, 1]} : vector<32x180xf32> to vector<8x180xf32>
    %350 = arith.negf %349 : vector<8x180xf32>
    %351 = math.exp %350 : vector<8x180xf32>
    %cst_391 = arith.constant 1.000000e+00 : f32
    %352 = vector.broadcast %cst_391 : f32 to vector<8x180xf32>
    %353 = arith.addf %352, %351 : vector<8x180xf32>
    %354 = arith.divf %352, %353 : vector<8x180xf32>
    %355 = vector.extract_strided_slice %342 {offsets = [16, 0], sizes = [8, 180], strides = [1, 1]} : vector<32x180xf32> to vector<8x180xf32>
    %356 = math.tanh %355 : vector<8x180xf32>
    %357 = vector.extract_strided_slice %342 {offsets = [24, 0], sizes = [8, 180], strides = [1, 1]} : vector<32x180xf32> to vector<8x180xf32>
    %358 = arith.negf %357 : vector<8x180xf32>
    %359 = math.exp %358 : vector<8x180xf32>
    %cst_392 = arith.constant 1.000000e+00 : f32
    %360 = vector.broadcast %cst_392 : f32 to vector<8x180xf32>
    %361 = arith.addf %360, %359 : vector<8x180xf32>
    %362 = arith.divf %360, %361 : vector<8x180xf32>
    %363 = arith.mulf %354, %244 : vector<8x180xf32>
    %364 = arith.mulf %348, %356 : vector<8x180xf32>
    %365 = arith.addf %363, %364 : vector<8x180xf32>
    %366 = math.tanh %365 : vector<8x180xf32>
    %367 = arith.mulf %362, %366 : vector<8x180xf32>
    %c0_393 = arith.constant 0 : index
    %c3 = arith.constant 3 : index
    %c0_394 = arith.constant 0 : index
    %c0_395 = arith.constant 0 : index
    %368 = vector.load %arg1[%c0_393, %c3, %c0_394, %c0_395] : memref<1x4x8x180xf32, #tpu.memory_space<vmem>>, vector<1x1x8x142xf32>
    %369 = vector.shape_cast %368 : vector<1x1x8x142xf32> to vector<8x142xf32>
    %c0_396 = arith.constant 0 : index
    %c3_397 = arith.constant 3 : index
    %c0_398 = arith.constant 0 : index
    %c1_399 = arith.constant 1 : index
    %370 = vector.load %arg1[%c0_396, %c3_397, %c0_398, %c1_399] : memref<1x4x8x180xf32, #tpu.memory_space<vmem>>, vector<1x1x8x142xf32>
    %371 = vector.shape_cast %370 : vector<1x1x8x142xf32> to vector<8x142xf32>
    %c0_400 = arith.constant 0 : index
    %c3_401 = arith.constant 3 : index
    %c0_402 = arith.constant 0 : index
    %c2_403 = arith.constant 2 : index
    %372 = vector.load %arg1[%c0_400, %c3_401, %c0_402, %c2_403] : memref<1x4x8x180xf32, #tpu.memory_space<vmem>>, vector<1x1x8x142xf32>
    %373 = vector.shape_cast %372 : vector<1x1x8x142xf32> to vector<8x142xf32>
    %c0_404 = arith.constant 0 : index
    %c3_405 = arith.constant 3 : index
    %c0_406 = arith.constant 0 : index
    %c18_407 = arith.constant 18 : index
    %374 = vector.load %arg1[%c0_404, %c3_405, %c0_406, %c18_407] : memref<1x4x8x180xf32, #tpu.memory_space<vmem>>, vector<1x1x8x142xf32>
    %375 = vector.shape_cast %374 : vector<1x1x8x142xf32> to vector<8x142xf32>
    %c0_408 = arith.constant 0 : index
    %c3_409 = arith.constant 3 : index
    %c0_410 = arith.constant 0 : index
    %c19_411 = arith.constant 19 : index
    %376 = vector.load %arg1[%c0_408, %c3_409, %c0_410, %c19_411] : memref<1x4x8x180xf32, #tpu.memory_space<vmem>>, vector<1x1x8x142xf32>
    %377 = vector.shape_cast %376 : vector<1x1x8x142xf32> to vector<8x142xf32>
    %c0_412 = arith.constant 0 : index
    %c3_413 = arith.constant 3 : index
    %c0_414 = arith.constant 0 : index
    %c20_415 = arith.constant 20 : index
    %378 = vector.load %arg1[%c0_412, %c3_413, %c0_414, %c20_415] : memref<1x4x8x180xf32, #tpu.memory_space<vmem>>, vector<1x1x8x142xf32>
    %379 = vector.shape_cast %378 : vector<1x1x8x142xf32> to vector<8x142xf32>
    %c0_416 = arith.constant 0 : index
    %c3_417 = arith.constant 3 : index
    %c0_418 = arith.constant 0 : index
    %c36_419 = arith.constant 36 : index
    %380 = vector.load %arg1[%c0_416, %c3_417, %c0_418, %c36_419] : memref<1x4x8x180xf32, #tpu.memory_space<vmem>>, vector<1x1x8x142xf32>
    %381 = vector.shape_cast %380 : vector<1x1x8x142xf32> to vector<8x142xf32>
    %c0_420 = arith.constant 0 : index
    %c3_421 = arith.constant 3 : index
    %c0_422 = arith.constant 0 : index
    %c37_423 = arith.constant 37 : index
    %382 = vector.load %arg1[%c0_420, %c3_421, %c0_422, %c37_423] : memref<1x4x8x180xf32, #tpu.memory_space<vmem>>, vector<1x1x8x142xf32>
    %383 = vector.shape_cast %382 : vector<1x1x8x142xf32> to vector<8x142xf32>
    %c0_424 = arith.constant 0 : index
    %c3_425 = arith.constant 3 : index
    %c0_426 = arith.constant 0 : index
    %c38_427 = arith.constant 38 : index
    %384 = vector.load %arg1[%c0_424, %c3_425, %c0_426, %c38_427] : memref<1x4x8x180xf32, #tpu.memory_space<vmem>>, vector<1x1x8x142xf32>
    %385 = vector.shape_cast %384 : vector<1x1x8x142xf32> to vector<8x142xf32>
    %386 = tpu.concatenate %369, %371, %373, %375, %377, %379, %381, %383, %385 in 0 : vector<8x142xf32>, vector<8x142xf32>, vector<8x142xf32>, vector<8x142xf32>, vector<8x142xf32>, vector<8x142xf32>, vector<8x142xf32>, vector<8x142xf32>, vector<8x142xf32> -> vector<72x142xf32>
    %c0_428 = arith.constant 0 : index
    %c0_429 = arith.constant 0 : index
    %387 = vector.load %arg3[%c0_428, %c0_429] : memref<8x72xf32, #tpu.memory_space<vmem>>, vector<8x72xf32>
    %cst_430 = arith.constant dense<0.000000e+00> : vector<8x142xf32>
    %388 = tpu.matmul %387, %386, %cst_430 {dimension_numbers = #tpu.dot_dimension_numbers<[1], [0], [0], [1], [0, 0, 1, 1], [], []>} : vector<8x72xf32>, vector<72x142xf32>, vector<8x142xf32> -> vector<8x142xf32>
    %c0_431 = arith.constant 0 : index
    %c0_432 = arith.constant 0 : index
    %389 = vector.load %arg4[%c0_431, %c0_432] : memref<8x1xf32, #tpu.memory_space<vmem>>, vector<8x1xf32>
    %390 = vector.broadcast %389 : vector<8x1xf32> to vector<8x142xf32>
    %391 = arith.addf %388, %390 : vector<8x142xf32>
    %cst_433 = arith.constant 0.000000e+00 : f32
    %392 = vector.broadcast %cst_433 : f32 to vector<8x142xf32>
    %393 = arith.maximumf %391, %392 : vector<8x142xf32>
    %394 = vector.broadcast %0 : vector<1x142xf32> to vector<8x142xf32>
    %395 = arith.mulf %393, %394 : vector<8x142xf32>
    %c0_434 = arith.constant 0 : index
    %c19_435 = arith.constant 19 : index
    %396 = vector.load %arg16[%c0_434, %c19_435] : memref<8x180xf32, #tpu.memory_space<vmem>>, vector<8x142xf32>
    tpu.vector_store %arg16[%c0_434, %c19_435], %395 {strides = array<i32>} : memref<8x180xf32, #tpu.memory_space<vmem>>, vector<8x142xf32>,
    %c0_436 = arith.constant 0 : index
    %c0_437 = arith.constant 0 : index
    %397 = vector.load %arg16[%c0_436, %c0_437] : memref<8x180xf32, #tpu.memory_space<vmem>>, vector<8x142xf32>
    %c0_438 = arith.constant 0 : index
    %c1_439 = arith.constant 1 : index
    %398 = vector.load %arg16[%c0_438, %c1_439] : memref<8x180xf32, #tpu.memory_space<vmem>>, vector<8x142xf32>
    %c0_440 = arith.constant 0 : index
    %c2_441 = arith.constant 2 : index
    %399 = vector.load %arg16[%c0_440, %c2_441] : memref<8x180xf32, #tpu.memory_space<vmem>>, vector<8x142xf32>
    %c0_442 = arith.constant 0 : index
    %c18_443 = arith.constant 18 : index
    %400 = vector.load %arg16[%c0_442, %c18_443] : memref<8x180xf32, #tpu.memory_space<vmem>>, vector<8x142xf32>
    %c0_444 = arith.constant 0 : index
    %c19_445 = arith.constant 19 : index
    %401 = vector.load %arg16[%c0_444, %c19_445] : memref<8x180xf32, #tpu.memory_space<vmem>>, vector<8x142xf32>
    %c0_446 = arith.constant 0 : index
    %c20_447 = arith.constant 20 : index
    %402 = vector.load %arg16[%c0_446, %c20_447] : memref<8x180xf32, #tpu.memory_space<vmem>>, vector<8x142xf32>
    %c0_448 = arith.constant 0 : index
    %c36_449 = arith.constant 36 : index
    %403 = vector.load %arg16[%c0_448, %c36_449] : memref<8x180xf32, #tpu.memory_space<vmem>>, vector<8x142xf32>
    %c0_450 = arith.constant 0 : index
    %c37_451 = arith.constant 37 : index
    %404 = vector.load %arg16[%c0_450, %c37_451] : memref<8x180xf32, #tpu.memory_space<vmem>>, vector<8x142xf32>
    %c0_452 = arith.constant 0 : index
    %c38_453 = arith.constant 38 : index
    %405 = vector.load %arg16[%c0_452, %c38_453] : memref<8x180xf32, #tpu.memory_space<vmem>>, vector<8x142xf32>
    %406 = tpu.concatenate %397, %398, %399, %400, %401, %402, %403, %404, %405 in 0 : vector<8x142xf32>, vector<8x142xf32>, vector<8x142xf32>, vector<8x142xf32>, vector<8x142xf32>, vector<8x142xf32>, vector<8x142xf32>, vector<8x142xf32>, vector<8x142xf32> -> vector<72x142xf32>
    %c0_454 = arith.constant 0 : index
    %c0_455 = arith.constant 0 : index
    %407 = vector.load %arg5[%c0_454, %c0_455] : memref<8x72xf32, #tpu.memory_space<vmem>>, vector<8x72xf32>
    %cst_456 = arith.constant dense<0.000000e+00> : vector<8x142xf32>
    %408 = tpu.matmul %407, %406, %cst_456 {dimension_numbers = #tpu.dot_dimension_numbers<[1], [0], [0], [1], [0, 0, 1, 1], [], []>} : vector<8x72xf32>, vector<72x142xf32>, vector<8x142xf32> -> vector<8x142xf32>
    %c0_457 = arith.constant 0 : index
    %c0_458 = arith.constant 0 : index
    %409 = vector.load %arg6[%c0_457, %c0_458] : memref<8x1xf32, #tpu.memory_space<vmem>>, vector<8x1xf32>
    %410 = vector.broadcast %409 : vector<8x1xf32> to vector<8x142xf32>
    %411 = arith.addf %408, %410 : vector<8x142xf32>
    %cst_459 = arith.constant 0.000000e+00 : f32
    %412 = vector.broadcast %cst_459 : f32 to vector<8x142xf32>
    %413 = arith.maximumf %411, %412 : vector<8x142xf32>
    %414 = vector.broadcast %0 : vector<1x142xf32> to vector<8x142xf32>
    %415 = arith.mulf %413, %414 : vector<8x142xf32>
    %c0_460 = arith.constant 0 : index
    %c19_461 = arith.constant 19 : index
    %416 = vector.load %arg16[%c0_460, %c19_461] : memref<8x180xf32, #tpu.memory_space<vmem>>, vector<8x142xf32>
    tpu.vector_store %arg16[%c0_460, %c19_461], %415 {strides = array<i32>} : memref<8x180xf32, #tpu.memory_space<vmem>>, vector<8x142xf32>,
    %c0_462 = arith.constant 0 : index
    %c0_463 = arith.constant 0 : index
    %417 = vector.load %arg16[%c0_462, %c0_463] : memref<8x180xf32, #tpu.memory_space<vmem>>, vector<8x142xf32>
    %c0_464 = arith.constant 0 : index
    %c1_465 = arith.constant 1 : index
    %418 = vector.load %arg16[%c0_464, %c1_465] : memref<8x180xf32, #tpu.memory_space<vmem>>, vector<8x142xf32>
    %c0_466 = arith.constant 0 : index
    %c2_467 = arith.constant 2 : index
    %419 = vector.load %arg16[%c0_466, %c2_467] : memref<8x180xf32, #tpu.memory_space<vmem>>, vector<8x142xf32>
    %c0_468 = arith.constant 0 : index
    %c18_469 = arith.constant 18 : index
    %420 = vector.load %arg16[%c0_468, %c18_469] : memref<8x180xf32, #tpu.memory_space<vmem>>, vector<8x142xf32>
    %c0_470 = arith.constant 0 : index
    %c19_471 = arith.constant 19 : index
    %421 = vector.load %arg16[%c0_470, %c19_471] : memref<8x180xf32, #tpu.memory_space<vmem>>, vector<8x142xf32>
    %c0_472 = arith.constant 0 : index
    %c20_473 = arith.constant 20 : index
    %422 = vector.load %arg16[%c0_472, %c20_473] : memref<8x180xf32, #tpu.memory_space<vmem>>, vector<8x142xf32>
    %c0_474 = arith.constant 0 : index
    %c36_475 = arith.constant 36 : index
    %423 = vector.load %arg16[%c0_474, %c36_475] : memref<8x180xf32, #tpu.memory_space<vmem>>, vector<8x142xf32>
    %c0_476 = arith.constant 0 : index
    %c37_477 = arith.constant 37 : index
    %424 = vector.load %arg16[%c0_476, %c37_477] : memref<8x180xf32, #tpu.memory_space<vmem>>, vector<8x142xf32>
    %c0_478 = arith.constant 0 : index
    %c38_479 = arith.constant 38 : index
    %425 = vector.load %arg16[%c0_478, %c38_479] : memref<8x180xf32, #tpu.memory_space<vmem>>, vector<8x142xf32>
    %426 = tpu.concatenate %417, %418, %419, %420, %421, %422, %423, %424, %425 in 0 : vector<8x142xf32>, vector<8x142xf32>, vector<8x142xf32>, vector<8x142xf32>, vector<8x142xf32>, vector<8x142xf32>, vector<8x142xf32>, vector<8x142xf32>, vector<8x142xf32> -> vector<72x142xf32>
    %c0_480 = arith.constant 0 : index
    %c0_481 = arith.constant 0 : index
    %427 = vector.load %arg7[%c0_480, %c0_481] : memref<8x72xf32, #tpu.memory_space<vmem>>, vector<8x72xf32>
    %cst_482 = arith.constant dense<0.000000e+00> : vector<8x142xf32>
    %428 = tpu.matmul %427, %426, %cst_482 {dimension_numbers = #tpu.dot_dimension_numbers<[1], [0], [0], [1], [0, 0, 1, 1], [], []>} : vector<8x72xf32>, vector<72x142xf32>, vector<8x142xf32> -> vector<8x142xf32>
    %c0_483 = arith.constant 0 : index
    %c0_484 = arith.constant 0 : index
    %429 = vector.load %arg8[%c0_483, %c0_484] : memref<8x1xf32, #tpu.memory_space<vmem>>, vector<8x1xf32>
    %430 = vector.broadcast %429 : vector<8x1xf32> to vector<8x142xf32>
    %431 = arith.addf %428, %430 : vector<8x142xf32>
    %cst_485 = arith.constant 0.000000e+00 : f32
    %432 = vector.broadcast %cst_485 : f32 to vector<8x142xf32>
    %433 = arith.maximumf %431, %432 : vector<8x142xf32>
    %434 = vector.broadcast %0 : vector<1x142xf32> to vector<8x142xf32>
    %435 = arith.mulf %433, %434 : vector<8x142xf32>
    %c0_486 = arith.constant 0 : index
    %c19_487 = arith.constant 19 : index
    %436 = vector.load %arg16[%c0_486, %c19_487] : memref<8x180xf32, #tpu.memory_space<vmem>>, vector<8x142xf32>
    tpu.vector_store %arg16[%c0_486, %c19_487], %435 {strides = array<i32>} : memref<8x180xf32, #tpu.memory_space<vmem>>, vector<8x142xf32>,
    %c0_488 = arith.constant 0 : index
    %c0_489 = arith.constant 0 : index
    %437 = vector.load %arg16[%c0_488, %c0_489] : memref<8x180xf32, #tpu.memory_space<vmem>>, vector<8x142xf32>
    %c0_490 = arith.constant 0 : index
    %c1_491 = arith.constant 1 : index
    %438 = vector.load %arg16[%c0_490, %c1_491] : memref<8x180xf32, #tpu.memory_space<vmem>>, vector<8x142xf32>
    %c0_492 = arith.constant 0 : index
    %c2_493 = arith.constant 2 : index
    %439 = vector.load %arg16[%c0_492, %c2_493] : memref<8x180xf32, #tpu.memory_space<vmem>>, vector<8x142xf32>
    %c0_494 = arith.constant 0 : index
    %c18_495 = arith.constant 18 : index
    %440 = vector.load %arg16[%c0_494, %c18_495] : memref<8x180xf32, #tpu.memory_space<vmem>>, vector<8x142xf32>
    %c0_496 = arith.constant 0 : index
    %c19_497 = arith.constant 19 : index
    %441 = vector.load %arg16[%c0_496, %c19_497] : memref<8x180xf32, #tpu.memory_space<vmem>>, vector<8x142xf32>
    %c0_498 = arith.constant 0 : index
    %c20_499 = arith.constant 20 : index
    %442 = vector.load %arg16[%c0_498, %c20_499] : memref<8x180xf32, #tpu.memory_space<vmem>>, vector<8x142xf32>
    %c0_500 = arith.constant 0 : index
    %c36_501 = arith.constant 36 : index
    %443 = vector.load %arg16[%c0_500, %c36_501] : memref<8x180xf32, #tpu.memory_space<vmem>>, vector<8x142xf32>
    %c0_502 = arith.constant 0 : index
    %c37_503 = arith.constant 37 : index
    %444 = vector.load %arg16[%c0_502, %c37_503] : memref<8x180xf32, #tpu.memory_space<vmem>>, vector<8x142xf32>
    %c0_504 = arith.constant 0 : index
    %c38_505 = arith.constant 38 : index
    %445 = vector.load %arg16[%c0_504, %c38_505] : memref<8x180xf32, #tpu.memory_space<vmem>>, vector<8x142xf32>
    %446 = tpu.concatenate %437, %438, %439, %440, %441, %442, %443, %444, %445 in 0 : vector<8x142xf32>, vector<8x142xf32>, vector<8x142xf32>, vector<8x142xf32>, vector<8x142xf32>, vector<8x142xf32>, vector<8x142xf32>, vector<8x142xf32>, vector<8x142xf32> -> vector<72x142xf32>
    %c0_506 = arith.constant 0 : index
    %c0_507 = arith.constant 0 : index
    %447 = vector.load %arg9[%c0_506, %c0_507] : memref<8x72xf32, #tpu.memory_space<vmem>>, vector<8x72xf32>
    %cst_508 = arith.constant dense<0.000000e+00> : vector<8x142xf32>
    %448 = tpu.matmul %447, %446, %cst_508 {dimension_numbers = #tpu.dot_dimension_numbers<[1], [0], [0], [1], [0, 0, 1, 1], [], []>} : vector<8x72xf32>, vector<72x142xf32>, vector<8x142xf32> -> vector<8x142xf32>
    %c0_509 = arith.constant 0 : index
    %c0_510 = arith.constant 0 : index
    %449 = vector.load %arg10[%c0_509, %c0_510] : memref<8x1xf32, #tpu.memory_space<vmem>>, vector<8x1xf32>
    %450 = vector.broadcast %449 : vector<8x1xf32> to vector<8x142xf32>
    %451 = arith.addf %448, %450 : vector<8x142xf32>
    %cst_511 = arith.constant 0.000000e+00 : f32
    %452 = vector.broadcast %cst_511 : f32 to vector<8x142xf32>
    %453 = arith.maximumf %451, %452 : vector<8x142xf32>
    %454 = vector.broadcast %0 : vector<1x142xf32> to vector<8x142xf32>
    %455 = arith.mulf %453, %454 : vector<8x142xf32>
    %c0_512 = arith.constant 0 : index
    %c19_513 = arith.constant 19 : index
    %456 = vector.load %arg16[%c0_512, %c19_513] : memref<8x180xf32, #tpu.memory_space<vmem>>, vector<8x142xf32>
    tpu.vector_store %arg16[%c0_512, %c19_513], %455 {strides = array<i32>} : memref<8x180xf32, #tpu.memory_space<vmem>>, vector<8x142xf32>,
    %c0_514 = arith.constant 0 : index
    %c0_515 = arith.constant 0 : index
    %457 = vector.load %arg16[%c0_514, %c0_515] : memref<8x180xf32, #tpu.memory_space<vmem>>, vector<8x180xf32>
    %458 = tpu.concatenate %457, %367 in 0 : vector<8x180xf32>, vector<8x180xf32> -> vector<16x180xf32>
    %c0_516 = arith.constant 0 : index
    %c0_517 = arith.constant 0 : index
    %459 = vector.load %arg11[%c0_516, %c0_517] : memref<32x16xf32, #tpu.memory_space<vmem>>, vector<32x16xf32>
    %cst_518 = arith.constant dense<0.000000e+00> : vector<32x180xf32>
    %460 = tpu.matmul %459, %458, %cst_518 {dimension_numbers = #tpu.dot_dimension_numbers<[1], [0], [0], [1], [0, 0, 1, 1], [], []>} : vector<32x16xf32>, vector<16x180xf32>, vector<32x180xf32> -> vector<32x180xf32>
    %c0_519 = arith.constant 0 : index
    %c0_520 = arith.constant 0 : index
    %461 = vector.load %arg12[%c0_519, %c0_520] : memref<32x1xf32, #tpu.memory_space<vmem>>, vector<32x1xf32>
    %462 = vector.broadcast %461 : vector<32x1xf32> to vector<32x180xf32>
    %463 = arith.addf %460, %462 : vector<32x180xf32>
    %464 = vector.extract_strided_slice %463 {offsets = [0, 0], sizes = [8, 180], strides = [1, 1]} : vector<32x180xf32> to vector<8x180xf32>
    %465 = arith.negf %464 : vector<8x180xf32>
    %466 = math.exp %465 : vector<8x180xf32>
    %cst_521 = arith.constant 1.000000e+00 : f32
    %467 = vector.broadcast %cst_521 : f32 to vector<8x180xf32>
    %468 = arith.addf %467, %466 : vector<8x180xf32>
    %469 = arith.divf %467, %468 : vector<8x180xf32>
    %470 = vector.extract_strided_slice %463 {offsets = [8, 0], sizes = [8, 180], strides = [1, 1]} : vector<32x180xf32> to vector<8x180xf32>
    %471 = arith.negf %470 : vector<8x180xf32>
    %472 = math.exp %471 : vector<8x180xf32>
    %cst_522 = arith.constant 1.000000e+00 : f32
    %473 = vector.broadcast %cst_522 : f32 to vector<8x180xf32>
    %474 = arith.addf %473, %472 : vector<8x180xf32>
    %475 = arith.divf %473, %474 : vector<8x180xf32>
    %476 = vector.extract_strided_slice %463 {offsets = [16, 0], sizes = [8, 180], strides = [1, 1]} : vector<32x180xf32> to vector<8x180xf32>
    %477 = math.tanh %476 : vector<8x180xf32>
    %478 = vector.extract_strided_slice %463 {offsets = [24, 0], sizes = [8, 180], strides = [1, 1]} : vector<32x180xf32> to vector<8x180xf32>
    %479 = arith.negf %478 : vector<8x180xf32>
    %480 = math.exp %479 : vector<8x180xf32>
    %cst_523 = arith.constant 1.000000e+00 : f32
    %481 = vector.broadcast %cst_523 : f32 to vector<8x180xf32>
    %482 = arith.addf %481, %480 : vector<8x180xf32>
    %483 = arith.divf %481, %482 : vector<8x180xf32>
    %484 = arith.mulf %475, %365 : vector<8x180xf32>
    %485 = arith.mulf %469, %477 : vector<8x180xf32>
    %486 = arith.addf %484, %485 : vector<8x180xf32>
    %487 = math.tanh %486 : vector<8x180xf32>
    %488 = arith.mulf %483, %487 : vector<8x180xf32>
    %c0_524 = arith.constant 0 : index
    %c0_525 = arith.constant 0 : index
    %489 = vector.load %arg13[%c0_524, %c0_525] : memref<4x8xf32, #tpu.memory_space<vmem>>, vector<4x8xf32>
    %cst_526 = arith.constant dense<0.000000e+00> : vector<4x180xf32>
    %490 = tpu.matmul %489, %488, %cst_526 {dimension_numbers = #tpu.dot_dimension_numbers<[1], [0], [0], [1], [0, 0, 1, 1], [], []>} : vector<4x8xf32>, vector<8x180xf32>, vector<4x180xf32> -> vector<4x180xf32>
    %c0_527 = arith.constant 0 : index
    %c0_528 = arith.constant 0 : index
    %491 = vector.load %arg14[%c0_527, %c0_528] : memref<4x1xf32, #tpu.memory_space<vmem>>, vector<4x1xf32>
    %492 = vector.broadcast %491 : vector<4x1xf32> to vector<4x180xf32>
    %493 = arith.addf %490, %492 : vector<4x180xf32>
    %c0_529 = arith.constant 0 : index
    %c0_530 = arith.constant 0 : index
    %c0_531 = arith.constant 0 : index
    %494 = vector.load %arg15[%c0_529, %c0_530, %c0_531] : memref<1x4x180xf32, #tpu.memory_space<vmem>>, vector<1x4x180xf32>
    %495 = vector.shape_cast %494 : vector<1x4x180xf32> to vector<4x180xf32>
    %496 = vector.shape_cast %493 : vector<4x180xf32> to vector<1x4x180xf32>
    tpu.vector_store %arg15[%c0_529, %c0_530, %c0_531], %496 {strides = array<i32>} : memref<1x4x180xf32, #tpu.memory_space<vmem>>, vector<1x4x180xf32>,
    return
  }
  func.func @transform_0(%arg0: i32) -> (i32, i32, i32, i32) {
    %c0_i32 = arith.constant 0 : i32
    %c0_i32_0 = arith.constant 0 : i32
    %c0_i32_1 = arith.constant 0 : i32
    %c0_i32_2 = arith.constant 0 : i32
    return %arg0, %c0_i32, %c0_i32_0, %c0_i32_1 : i32, i32, i32, i32
  }
  func.func @transform_1(%arg0: i32) -> (i32, i32) {
    %c0_i32 = arith.constant 0 : i32
    %c0_i32_0 = arith.constant 0 : i32
    %c0_i32_1 = arith.constant 0 : i32
    return %c0_i32, %c0_i32_0 : i32, i32
  }
  func.func @transform_2(%arg0: i32) -> (i32, i32) {
    %c0_i32 = arith.constant 0 : i32
    %c0_i32_0 = arith.constant 0 : i32
    %c0_i32_1 = arith.constant 0 : i32
    return %c0_i32, %c0_i32_0 : i32, i32
  }
  func.func @transform_3(%arg0: i32) -> (i32, i32) {
    %c0_i32 = arith.constant 0 : i32
    %c0_i32_0 = arith.constant 0 : i32
    %c0_i32_1 = arith.constant 0 : i32
    return %c0_i32, %c0_i32_0 : i32, i32
  }
  func.func @transform_4(%arg0: i32) -> (i32, i32) {
    %c0_i32 = arith.constant 0 : i32
    %c0_i32_0 = arith.constant 0 : i32
    %c0_i32_1 = arith.constant 0 : i32
    return %c0_i32, %c0_i32_0 : i32, i32
  }
  func.func @transform_5(%arg0: i32) -> (i32, i32) {
    %c0_i32 = arith.constant 0 : i32
    %c0_i32_0 = arith.constant 0 : i32
    %c0_i32_1 = arith.constant 0 : i32
    return %c0_i32, %c0_i32_0 : i32, i32
  }
  func.func @transform_6(%arg0: i32) -> (i32, i32) {
    %c0_i32 = arith.constant 0 : i32
    %c0_i32_0 = arith.constant 0 : i32
    %c0_i32_1 = arith.constant 0 : i32
    return %c0_i32, %c0_i32_0 : i32, i32
  }
  func.func @transform_7(%arg0: i32) -> (i32, i32) {
    %c0_i32 = arith.constant 0 : i32
    %c0_i32_0 = arith.constant 0 : i32
    %c0_i32_1 = arith.constant 0 : i32
    return %c0_i32, %c0_i32_0 : i32, i32
  }
  func.func @transform_8(%arg0: i32) -> (i32, i32) {
    %c0_i32 = arith.constant 0 : i32
    %c0_i32_0 = arith.constant 0 : i32
    %c0_i32_1 = arith.constant 0 : i32
    return %c0_i32, %c0_i32_0 : i32, i32
  }
  func.func @transform_9(%arg0: i32) -> (i32, i32) {
    %c0_i32 = arith.constant 0 : i32
    %c0_i32_0 = arith.constant 0 : i32
    %c0_i32_1 = arith.constant 0 : i32
    return %c0_i32, %c0_i32_0 : i32, i32
  }
  func.func @transform_10(%arg0: i32) -> (i32, i32) {
    %c0_i32 = arith.constant 0 : i32
    %c0_i32_0 = arith.constant 0 : i32
    %c0_i32_1 = arith.constant 0 : i32
    return %c0_i32, %c0_i32_0 : i32, i32
  }
  func.func @transform_11(%arg0: i32) -> (i32, i32) {
    %c0_i32 = arith.constant 0 : i32
    %c0_i32_0 = arith.constant 0 : i32
    %c0_i32_1 = arith.constant 0 : i32
    return %c0_i32, %c0_i32_0 : i32, i32
  }
  func.func @transform_12(%arg0: i32) -> (i32, i32) {
    %c0_i32 = arith.constant 0 : i32
    %c0_i32_0 = arith.constant 0 : i32
    %c0_i32_1 = arith.constant 0 : i32
    return %c0_i32, %c0_i32_0 : i32, i32
  }
  func.func @transform_13(%arg0: i32) -> (i32, i32) {
    %c0_i32 = arith.constant 0 : i32
    %c0_i32_0 = arith.constant 0 : i32
    %c0_i32_1 = arith.constant 0 : i32
    return %c0_i32, %c0_i32_0 : i32, i32
  }
  func.func @transform_14(%arg0: i32) -> (i32, i32, i32) {
    %c0_i32 = arith.constant 0 : i32
    %c0_i32_0 = arith.constant 0 : i32
    %c0_i32_1 = arith.constant 0 : i32
    return %arg0, %c0_i32, %c0_i32_0 : i32, i32, i32
  }
}

</mosaic_0001>

<llo_original>
// kernel: tpu_custom_call.1
$region0: #{tpu_custom_call.1}
  #allocation0 [shape = 'u32[]', space=smem, size = 0x4, offset = 0x4, fixed_abs, tag = 'smem constant byte address 0x4 - core index']
  #allocation1 [shape = 'u32[144,128]{1,0:T(1,128)}', space=vmem, size = 0x12000, scoped, tag = 'internal scratch']
  #allocation2 [shape = 'f32[8,180]{1,0:T(8,128)}', space=vmem, size = 0x2000, scoped, tag = 'scratch operand']
  %s0 = inlined_call_operand.hbm [shape: f32[2,4,8,180], index: 0, kind: input, shape index: {}]
  %s1 = inlined_call_operand.vmem [shape: f32[1,142], index: 1, kind: input, shape index: {}]
  %s2 = inlined_call_operand.vmem [shape: f32[8,72], index: 2, kind: input, shape index: {}]
  %s3 = inlined_call_operand.vmem [shape: f32[8,1], index: 3, kind: input, shape index: {}]
  %s4 = inlined_call_operand.vmem [shape: f32[8,72], index: 4, kind: input, shape index: {}]
  %s5 = inlined_call_operand.vmem [shape: f32[8,1], index: 5, kind: input, shape index: {}]
  %s6 = inlined_call_operand.vmem [shape: f32[8,72], index: 6, kind: input, shape index: {}]
  %s7 = inlined_call_operand.vmem [shape: f32[8,1], index: 7, kind: input, shape index: {}]
  %s8 = inlined_call_operand.vmem [shape: f32[8,72], index: 8, kind: input, shape index: {}]
  %s9 = inlined_call_operand.vmem [shape: f32[8,1], index: 9, kind: input, shape index: {}]
  %s10 = inlined_call_operand.vmem [shape: f32[32,16], index: 10, kind: input, shape index: {}]
  %s11 = inlined_call_operand.vmem [shape: f32[32,1], index: 11, kind: input, shape index: {}]
  %s12 = inlined_call_operand.vmem [shape: f32[4,8], index: 12, kind: input, shape index: {}]
  %s13 = inlined_call_operand.vmem [shape: f32[4,1], index: 13, kind: input, shape index: {}]
  %s14 = inlined_call_operand.hbm [shape: f32[2,4,180], index: 14, kind: output, shape index: {}]
  %s15 = sld [smem:[#allocation0]]
  $region93: #{tpu_custom_call.1} parent=0
    _
  %s17 = ssub.s32 1, %s15
  %s18 = scalar_select 0, %s17, %s15
  $region1: #{tpu_custom_call.1} parent=0
    #allocation3 [shape = 'u8[65536]{0}', space=vmem, size = 0x10000, scoped, tag = 'input window, operand 0']
    #allocation4 [shape = 's32[2]{0}', space=sflag, size = 0x8, scoped, tag = 'scoped memory for tpu_custom_call.1']
    #allocation5 [shape = 's32[2]{0}', space=sflag, size = 0x8, scoped, tag = 'scoped memory for tpu_custom_call.1']
    #allocation6 [shape = 'u8[8192]{0}', space=vmem, size = 0x2000, scoped, tag = 'output window, operand 0']
    %19 = vsyncpa [#allocation4], 0
    %s20 = scalar_lea.sflag [#allocation4], 1
    %21 = vsyncpa %s20, 0
    %22 = vsyncpa [#allocation5], 0
    %s23 = scalar_lea.sflag [#allocation5], 1
    %24 = vsyncpa %s23, 0
    loop: start=0, step=1, limit=4
    $region2: #{tpu_custom_call.1} parent=1 // loop_pre_header
      _
    $region3: #{tpu_custom_call.1} parent=1 // loop_header
      %s26 = sphi 0, %s30
      %p27 = scmp.ge.s32.totalorder %s26, 4
      %s36 = sphi 0, %s38
      %s39 = sphi 0, %s36
      %s40 = sphi 0, %s39
      %s56 = sphi 0, %s40
      %s60 = sphi 0, %s60
      %s62 = sphi 0, %s60
      %s63 = sphi 0, %s62
      %s77 = sphi 0, %s63
      %s81 = sphi 0, %s81
      %s83 = sphi 0, %s81
      %s84 = sphi 0, %s83
      %s98 = sphi 0, %s84
      %s102 = sphi 0, %s102
      %s104 = sphi 0, %s102
      %s105 = sphi 0, %s104
      %s119 = sphi 0, %s105
      %s123 = sphi 0, %s123
      %s125 = sphi 0, %s123
      %s126 = sphi 0, %s125
      %s140 = sphi 0, %s126
      %s144 = sphi 0, %s144
      %s146 = sphi 0, %s144
      %s147 = sphi 0, %s146
      %s161 = sphi 0, %s147
      %s165 = sphi 0, %s165
      %s167 = sphi 0, %s165
      %s168 = sphi 0, %s167
      %s182 = sphi 0, %s168
      %s186 = sphi 0, %s186
      %s188 = sphi 0, %s186
      %s189 = sphi 0, %s188
      %s203 = sphi 0, %s189
      %s207 = sphi 0, %s207
      %s209 = sphi 0, %s207
      %s210 = sphi 0, %s209
      %s224 = sphi 0, %s210
      %s228 = sphi 0, %s228
      %s230 = sphi 0, %s228
      %s231 = sphi 0, %s230
      %s245 = sphi 0, %s231
      %s249 = sphi 0, %s249
      %s251 = sphi 0, %s249
      %s252 = sphi 0, %s251
      %s266 = sphi 0, %s252
      %s270 = sphi 0, %s270
      %s272 = sphi 0, %s270
      %s273 = sphi 0, %s272
      %s287 = sphi 0, %s273
      %s291 = sphi 0, %s291
      %s293 = sphi 0, %s291
      %s294 = sphi 0, %s293
      %s308 = sphi 0, %s294
      %s312 = sphi 0, %s312
      %s314 = sphi 0, %s312
      %s315 = sphi 0, %s314
      %s329 = sphi 0, %s315
      %s335 = sphi 0, %s337
      %s338 = sphi 0, %s335
      %s339 = sphi 0, %s338
      %s355 = sphi 0, %s339
    $region4: #{tpu_custom_call.1} parent=1 // loop_header_branch
      %29 = sbr.rel (%p27) target = $region8
    $region5: #{tpu_custom_call.1} parent=1 // loop_body
      %s31 = ssub.s32 %s26, 1
      %s32 = ssub.s32 %s26, 2
      %s33 = sadd.s32 %s26, 1
      %s34 = ssub.s32 %s26, %s33
      %p35 = scmp.eq.s32.totalorder %s34, 0
      %s37 = sadd.s32 %s36, 1
      %s38 = scalar_select %p35, %s36, %s37
      %p41 = pneg %p35
      %p42 = scmp.eq.s32.totalorder %s26, 1
      %p43 = por %p41, %p42
      %p44 = scmp.ne.s32.totalorder %s36, %s39
      %p45 = scmp.eq.s32.totalorder %s26, 0
      %p46 = por %p44, %p45
      %p47 = scmp.ne.s32.totalorder %s36, %s39
      %p48 = scmp.eq.s32.totalorder %s31, 1
      %p49 = por %p47, %p48
      %p50 = scmp.ne.s32.totalorder %s39, %s40
      %p51 = scmp.eq.s32.totalorder %s31, 0
      %p52 = por %p50, %p51
      %p53 = scmp.ne.s32.totalorder %s39, %s40
      %p54 = scmp.eq.s32.totalorder %s32, 1
      %p55 = por %p53, %p54
      %p57 = scmp.ne.s32.totalorder %s40, %s56
      %p58 = scmp.eq.s32.totalorder %s32, 0
      %p59 = por %p57, %p58
      %s61 = sadd.s32 %s60, 1
      %p64 = scmp.eq.s32.totalorder %s26, 1
      %p65 = scmp.ne.s32.totalorder %s60, %s62
      %p66 = scmp.eq.s32.totalorder %s26, 0
      %p67 = por %p65, %p66
      %p68 = scmp.ne.s32.totalorder %s60, %s62
      %p69 = scmp.eq.s32.totalorder %s31, 1
      %p70 = por %p68, %p69
      %p71 = scmp.ne.s32.totalorder %s62, %s63
      %p72 = scmp.eq.s32.totalorder %s31, 0
      %p73 = por %p71, %p72
      %p74 = scmp.ne.s32.totalorder %s62, %s63
      %p75 = scmp.eq.s32.totalorder %s32, 1
      %p76 = por %p74, %p75
      %p78 = scmp.ne.s32.totalorder %s63, %s77
      %p79 = scmp.eq.s32.totalorder %s32, 0
      %p80 = por %p78, %p79
      %s82 = sadd.s32 %s81, 1
      %p85 = scmp.eq.s32.totalorder %s26, 1
      %p86 = scmp.ne.s32.totalorder %s81, %s83
      %p87 = scmp.eq.s32.totalorder %s26, 0
      %p88 = por %p86, %p87
      %p89 = scmp.ne.s32.totalorder %s81, %s83
      %p90 = scmp.eq.s32.totalorder %s31, 1
      %p91 = por %p89, %p90
      %p92 = scmp.ne.s32.totalorder %s83, %s84
      %p93 = scmp.eq.s32.totalorder %s31, 0
      %p94 = por %p92, %p93
      %p95 = scmp.ne.s32.totalorder %s83, %s84
      %p96 = scmp.eq.s32.totalorder %s32, 1
      %p97 = por %p95, %p96
      %p99 = scmp.ne.s32.totalorder %s84, %s98
      %p100 = scmp.eq.s32.totalorder %s32, 0
      %p101 = por %p99, %p100
      %s103 = sadd.s32 %s102, 1
      %p106 = scmp.eq.s32.totalorder %s26, 1
      %p107 = scmp.ne.s32.totalorder %s102, %s104
      %p108 = scmp.eq.s32.totalorder %s26, 0
      %p109 = por %p107, %p108
      %p110 = scmp.ne.s32.totalorder %s102, %s104
      %p111 = scmp.eq.s32.totalorder %s31, 1
      %p112 = por %p110, %p111
      %p113 = scmp.ne.s32.totalorder %s104, %s105
      %p114 = scmp.eq.s32.totalorder %s31, 0
      %p115 = por %p113, %p114
      %p116 = scmp.ne.s32.totalorder %s104, %s105
      %p117 = scmp.eq.s32.totalorder %s32, 1
      %p118 = por %p116, %p117
      %p120 = scmp.ne.s32.totalorder %s105, %s119
      %p121 = scmp.eq.s32.totalorder %s32, 0
      %p122 = por %p120, %p121
      %s124 = sadd.s32 %s123, 1
      %p127 = scmp.eq.s32.totalorder %s26, 1
      %p128 = scmp.ne.s32.totalorder %s123, %s125
      %p129 = scmp.eq.s32.totalorder %s26, 0
      %p130 = por %p128, %p129
      %p131 = scmp.ne.s32.totalorder %s123, %s125
      %p132 = scmp.eq.s32.totalorder %s31, 1
      %p133 = por %p131, %p132
      %p134 = scmp.ne.s32.totalorder %s125, %s126
      %p135 = scmp.eq.s32.totalorder %s31, 0
      %p136 = por %p134, %p135
      %p137 = scmp.ne.s32.totalorder %s125, %s126
      %p138 = scmp.eq.s32.totalorder %s32, 1
      %p139 = por %p137, %p138
      %p141 = scmp.ne.s32.totalorder %s126, %s140
      %p142 = scmp.eq.s32.totalorder %s32, 0
      %p143 = por %p141, %p142
      %s145 = sadd.s32 %s144, 1
      %p148 = scmp.eq.s32.totalorder %s26, 1
      %p149 = scmp.ne.s32.totalorder %s144, %s146
      %p150 = scmp.eq.s32.totalorder %s26, 0
      %p151 = por %p149, %p150
      %p152 = scmp.ne.s32.totalorder %s144, %s146
      %p153 = scmp.eq.s32.totalorder %s31, 1
      %p154 = por %p152, %p153
      %p155 = scmp.ne.s32.totalorder %s146, %s147
      %p156 = scmp.eq.s32.totalorder %s31, 0
      %p157 = por %p155, %p156
      %p158 = scmp.ne.s32.totalorder %s146, %s147
      %p159 = scmp.eq.s32.totalorder %s32, 1
      %p160 = por %p158, %p159
      %p162 = scmp.ne.s32.totalorder %s147, %s161
      %p163 = scmp.eq.s32.totalorder %s32, 0
      %p164 = por %p162, %p163
      %s166 = sadd.s32 %s165, 1
      %p169 = scmp.eq.s32.totalorder %s26, 1
      %p170 = scmp.ne.s32.totalorder %s165, %s167
      %p171 = scmp.eq.s32.totalorder %s26, 0
      %p172 = por %p170, %p171
      %p173 = scmp.ne.s32.totalorder %s165, %s167
      %p174 = scmp.eq.s32.totalorder %s31, 1
      %p175 = por %p173, %p174
      %p176 = scmp.ne.s32.totalorder %s167, %s168
      %p177 = scmp.eq.s32.totalorder %s31, 0
      %p178 = por %p176, %p177
      %p179 = scmp.ne.s32.totalorder %s167, %s168
      %p180 = scmp.eq.s32.totalorder %s32, 1
      %p181 = por %p179, %p180
      %p183 = scmp.ne.s32.totalorder %s168, %s182
      %p184 = scmp.eq.s32.totalorder %s32, 0
      %p185 = por %p183, %p184
      %s187 = sadd.s32 %s186, 1
      %p190 = scmp.eq.s32.totalorder %s26, 1
      %p191 = scmp.ne.s32.totalorder %s186, %s188
      %p192 = scmp.eq.s32.totalorder %s26, 0
      %p193 = por %p191, %p192
      %p194 = scmp.ne.s32.totalorder %s186, %s188
      %p195 = scmp.eq.s32.totalorder %s31, 1
      %p196 = por %p194, %p195
      %p197 = scmp.ne.s32.totalorder %s188, %s189
      %p198 = scmp.eq.s32.totalorder %s31, 0
      %p199 = por %p197, %p198
      %p200 = scmp.ne.s32.totalorder %s188, %s189
      %p201 = scmp.eq.s32.totalorder %s32, 1
      %p202 = por %p200, %p201
      %p204 = scmp.ne.s32.totalorder %s189, %s203
      %p205 = scmp.eq.s32.totalorder %s32, 0
      %p206 = por %p204, %p205
      %s208 = sadd.s32 %s207, 1
      %p211 = scmp.eq.s32.totalorder %s26, 1
      %p212 = scmp.ne.s32.totalorder %s207, %s209
      %p213 = scmp.eq.s32.totalorder %s26, 0
      %p214 = por %p212, %p213
      %p215 = scmp.ne.s32.totalorder %s207, %s209
      %p216 = scmp.eq.s32.totalorder %s31, 1
      %p217 = por %p215, %p216
      %p218 = scmp.ne.s32.totalorder %s209, %s210
      %p219 = scmp.eq.s32.totalorder %s31, 0
      %p220 = por %p218, %p219
      %p221 = scmp.ne.s32.totalorder %s209, %s210
      %p222 = scmp.eq.s32.totalorder %s32, 1
      %p223 = por %p221, %p222
      %p225 = scmp.ne.s32.totalorder %s210, %s224
      %p226 = scmp.eq.s32.totalorder %s32, 0
      %p227 = por %p225, %p226
      %s229 = sadd.s32 %s228, 1
      %p232 = scmp.eq.s32.totalorder %s26, 1
      %p233 = scmp.ne.s32.totalorder %s228, %s230
      %p234 = scmp.eq.s32.totalorder %s26, 0
      %p235 = por %p233, %p234
      %p236 = scmp.ne.s32.totalorder %s228, %s230
      %p237 = scmp.eq.s32.totalorder %s31, 1
      %p238 = por %p236, %p237
      %p239 = scmp.ne.s32.totalorder %s230, %s231
      %p240 = scmp.eq.s32.totalorder %s31, 0
      %p241 = por %p239, %p240
      %p242 = scmp.ne.s32.totalorder %s230, %s231
      %p243 = scmp.eq.s32.totalorder %s32, 1
      %p244 = por %p242, %p243
      %p246 = scmp.ne.s32.totalorder %s231, %s245
      %p247 = scmp.eq.s32.totalorder %s32, 0
      %p248 = por %p246, %p247
      %s250 = sadd.s32 %s249, 1
      %p253 = scmp.eq.s32.totalorder %s26, 1
      %p254 = scmp.ne.s32.totalorder %s249, %s251
      %p255 = scmp.eq.s32.totalorder %s26, 0
      %p256 = por %p254, %p255
      %p257 = scmp.ne.s32.totalorder %s249, %s251
      %p258 = scmp.eq.s32.totalorder %s31, 1
      %p259 = por %p257, %p258
      %p260 = scmp.ne.s32.totalorder %s251, %s252
      %p261 = scmp.eq.s32.totalorder %s31, 0
      %p262 = por %p260, %p261
      %p263 = scmp.ne.s32.totalorder %s251, %s252
      %p264 = scmp.eq.s32.totalorder %s32, 1
      %p265 = por %p263, %p264
      %p267 = scmp.ne.s32.totalorder %s252, %s266
      %p268 = scmp.eq.s32.totalorder %s32, 0
      %p269 = por %p267, %p268
      %s271 = sadd.s32 %s270, 1
      %p274 = scmp.eq.s32.totalorder %s26, 1
      %p275 = scmp.ne.s32.totalorder %s270, %s272
      %p276 = scmp.eq.s32.totalorder %s26, 0
      %p277 = por %p275, %p276
      %p278 = scmp.ne.s32.totalorder %s270, %s272
      %p279 = scmp.eq.s32.totalorder %s31, 1
      %p280 = por %p278, %p279
      %p281 = scmp.ne.s32.totalorder %s272, %s273
      %p282 = scmp.eq.s32.totalorder %s31, 0
      %p283 = por %p281, %p282
      %p284 = scmp.ne.s32.totalorder %s272, %s273
      %p285 = scmp.eq.s32.totalorder %s32, 1
      %p286 = por %p284, %p285
      %p288 = scmp.ne.s32.totalorder %s273, %s287
      %p289 = scmp.eq.s32.totalorder %s32, 0
      %p290 = por %p288, %p289
      %s292 = sadd.s32 %s291, 1
      %p295 = scmp.eq.s32.totalorder %s26, 1
      %p296 = scmp.ne.s32.totalorder %s291, %s293
      %p297 = scmp.eq.s32.totalorder %s26, 0
      %p298 = por %p296, %p297
      %p299 = scmp.ne.s32.totalorder %s291, %s293
      %p300 = scmp.eq.s32.totalorder %s31, 1
      %p301 = por %p299, %p300
      %p302 = scmp.ne.s32.totalorder %s293, %s294
      %p303 = scmp.eq.s32.totalorder %s31, 0
      %p304 = por %p302, %p303
      %p305 = scmp.ne.s32.totalorder %s293, %s294
      %p306 = scmp.eq.s32.totalorder %s32, 1
      %p307 = por %p305, %p306
      %p309 = scmp.ne.s32.totalorder %s294, %s308
      %p310 = scmp.eq.s32.totalorder %s32, 0
      %p311 = por %p309, %p310
      %s313 = sadd.s32 %s312, 1
      %p316 = scmp.eq.s32.totalorder %s26, 1
      %p317 = scmp.ne.s32.totalorder %s312, %s314
      %p318 = scmp.eq.s32.totalorder %s26, 0
      %p319 = por %p317, %p318
      %p320 = scmp.ne.s32.totalorder %s312, %s314
      %p321 = scmp.eq.s32.totalorder %s31, 1
      %p322 = por %p320, %p321
      %p323 = scmp.ne.s32.totalorder %s314, %s315
      %p324 = scmp.eq.s32.totalorder %s31, 0
      %p325 = por %p323, %p324
      %p326 = scmp.ne.s32.totalorder %s314, %s315
      %p327 = scmp.eq.s32.totalorder %s32, 1
      %p328 = por %p326, %p327
      %p330 = scmp.ne.s32.totalorder %s315, %s329
      %p331 = scmp.eq.s32.totalorder %s32, 0
      %p332 = por %p330, %p331
      %s333 = ssub.s32 %s26, %s33
      %p334 = scmp.eq.s32.totalorder %s333, 0
      %s336 = sadd.s32 %s335, 1
      %s337 = scalar_select %p334, %s335, %s336
      %p340 = pneg %p334
      %p341 = scmp.eq.s32.totalorder %s26, 1
      %p342 = por %p340, %p341
      %p343 = scmp.ne.s32.totalorder %s335, %s338
      %p344 = scmp.eq.s32.totalorder %s26, 0
      %p345 = por %p343, %p344
      %p346 = scmp.ne.s32.totalorder %s335, %s338
      %p347 = scmp.eq.s32.totalorder %s31, 1
      %p348 = por %p346, %p347
      %p349 = scmp.ne.s32.totalorder %s338, %s339
      %p350 = scmp.eq.s32.totalorder %s31, 0
      %p351 = por %p349, %p350
      %p352 = scmp.ne.s32.totalorder %s338, %s339
      %p353 = scmp.eq.s32.totalorder %s32, 1
      %p354 = por %p352, %p353
      %p356 = scmp.ne.s32.totalorder %s339, %s355
      %p357 = scmp.eq.s32.totalorder %s32, 0
      %p358 = por %p356, %p357
      %p359 = scmp.le.s32.totalorder 1, %s26
      %p360 = scmp.lt.s32.totalorder %s26, 3
      %p361 = pnand %p359, %p360
      %p362 = pneg %p361
      // Predicated region
      $region9: #{tpu_custom_call.1} parent=5 // pred_check
        _
      $region10: #{tpu_custom_call.1} parent=5 // pred_check_branch
        %364 = sbr.rel (%p361) target = $region12
      $region11: #{tpu_custom_call.1} parent=5 // pred_region
        %s365 = ssub.s32 %s26, 1
        // Predicated region
        $region13: #{tpu_custom_call.1} parent=11 // pred_check
          %p366 = pneg %p73
        $region14: #{tpu_custom_call.1} parent=11 // pred_check_branch
          %368 = sbr.rel (%p366) target = $region16
        $region15: #{tpu_custom_call.1} parent=11 // pred_region
          _
        $region16: #{tpu_custom_call.1} parent=11 // pred_fallthru
          _
        // Predicated region
        $region17: #{tpu_custom_call.1} parent=11 // pred_check
          %p369 = pneg %p94
        $region18: #{tpu_custom_call.1} parent=11 // pred_check_branch
          %371 = sbr.rel (%p369) target = $region20
        $region19: #{tpu_custom_call.1} parent=11 // pred_region
          _
        $region20: #{tpu_custom_call.1} parent=11 // pred_fallthru
          _
        // Predicated region
        $region21: #{tpu_custom_call.1} parent=11 // pred_check
          %p372 = pneg %p115
        $region22: #{tpu_custom_call.1} parent=11 // pred_check_branch
          %374 = sbr.rel (%p372) target = $region24
        $region23: #{tpu_custom_call.1} parent=11 // pred_region
          _
        $region24: #{tpu_custom_call.1} parent=11 // pred_fallthru
          _
        // Predicated region
        $region25: #{tpu_custom_call.1} parent=11 // pred_check
          %p375 = pneg %p136
        $region26: #{tpu_custom_call.1} parent=11 // pred_check_branch
          %377 = sbr.rel (%p375) target = $region28
        $region27: #{tpu_custom_call.1} parent=11 // pred_region
          _
        $region28: #{tpu_custom_call.1} parent=11 // pred_fallthru
          _
        // Predicated region
        $region29: #{tpu_custom_call.1} parent=11 // pred_check
          %p378 = pneg %p157
        $region30: #{tpu_custom_call.1} parent=11 // pred_check_branch
          %380 = sbr.rel (%p378) target = $region32
        $region31: #{tpu_custom_call.1} parent=11 // pred_region
          _
        $region32: #{tpu_custom_call.1} parent=11 // pred_fallthru
          _
        // Predicated region
        $region33: #{tpu_custom_call.1} parent=11 // pred_check
          %p381 = pneg %p178
        $region34: #{tpu_custom_call.1} parent=11 // pred_check_branch
          %383 = sbr.rel (%p381) target = $region36
        $region35: #{tpu_custom_call.1} parent=11 // pred_region
          _
        $region36: #{tpu_custom_call.1} parent=11 // pred_fallthru
          _
        // Predicated region
        $region37: #{tpu_custom_call.1} parent=11 // pred_check
          %p384 = pneg %p199
        $region38: #{tpu_custom_call.1} parent=11 // pred_check_branch
          %386 = sbr.rel (%p384) target = $region40
        $region39: #{tpu_custom_call.1} parent=11 // pred_region
          _
        $region40: #{tpu_custom_call.1} parent=11 // pred_fallthru
          _
        // Predicated region
        $region41: #{tpu_custom_call.1} parent=11 // pred_check
          %p387 = pneg %p220
        $region42: #{tpu_custom_call.1} parent=11 // pred_check_branch
          %389 = sbr.rel (%p387) target = $region44
        $region43: #{tpu_custom_call.1} parent=11 // pred_region
          _
        $region44: #{tpu_custom_call.1} parent=11 // pred_fallthru
          _
        // Predicated region
        $region45: #{tpu_custom_call.1} parent=11 // pred_check
          %p390 = pneg %p241
        $region46: #{tpu_custom_call.1} parent=11 // pred_check_branch
          %392 = sbr.rel (%p390) target = $region48
        $region47: #{tpu_custom_call.1} parent=11 // pred_region
          _
        $region48: #{tpu_custom_call.1} parent=11 // pred_fallthru
          _
        // Predicated region
        $region49: #{tpu_custom_call.1} parent=11 // pred_check
          %p393 = pneg %p262
        $region50: #{tpu_custom_call.1} parent=11 // pred_check_branch
          %395 = sbr.rel (%p393) target = $region52
        $region51: #{tpu_custom_call.1} parent=11 // pred_region
          _
        $region52: #{tpu_custom_call.1} parent=11 // pred_fallthru
          _
        // Predicated region
        $region53: #{tpu_custom_call.1} parent=11 // pred_check
          %p396 = pneg %p283
        $region54: #{tpu_custom_call.1} parent=11 // pred_check_branch
          %398 = sbr.rel (%p396) target = $region56
        $region55: #{tpu_custom_call.1} parent=11 // pred_region
          _
        $region56: #{tpu_custom_call.1} parent=11 // pred_fallthru
          _
        // Predicated region
        $region57: #{tpu_custom_call.1} parent=11 // pred_check
          %p399 = pneg %p304
        $region58: #{tpu_custom_call.1} parent=11 // pred_check_branch
          %401 = sbr.rel (%p399) target = $region60
        $region59: #{tpu_custom_call.1} parent=11 // pred_region
          _
        $region60: #{tpu_custom_call.1} parent=11 // pred_fallthru
          _
        // Predicated region
        $region61: #{tpu_custom_call.1} parent=11 // pred_check
          %p402 = pneg %p325
        $region62: #{tpu_custom_call.1} parent=11 // pred_check_branch
          %404 = sbr.rel (%p402) target = $region64
        $region63: #{tpu_custom_call.1} parent=11 // pred_region
          _
        $region64: #{tpu_custom_call.1} parent=11 // pred_fallthru
          _
      $region12: #{tpu_custom_call.1} parent=5 // pred_fallthru
        _
      %p405 = scmp.lt.s32.totalorder %s26, 2
      // Predicated region
      $region65: #{tpu_custom_call.1} parent=5 // pred_check
        %p406 = pneg %p405
      $region66: #{tpu_custom_call.1} parent=5 // pred_check_branch
        %408 = sbr.rel (%p406) target = $region68
      $region67: #{tpu_custom_call.1} parent=5 // pred_region
        // Predicated region
        $region69: #{tpu_custom_call.1} parent=67 // pred_check
          %p409 = pneg %p46
        $region70: #{tpu_custom_call.1} parent=67 // pred_check_branch
          %411 = sbr.rel (%p409) target = $region72
        $region71: #{tpu_custom_call.1} parent=67 // pred_region
          %s412 = sand.u32 %s36, 1
          %s413 = scalar_lea.sflag [#allocation4], %s412
          %s414 = sand.u32 %s36, 1
          %s415 = smul.addr %s414, 64
          %s416 = scalar_lea.vmem [#allocation3], %s415
          %s418 = ssub.s32 1024, 1024
          %419 = vsyncadd %s413, %s418
          %s420 = smul.addr %s26, 8
          %s421 = smul.addr %s420, 128
          %s422 = scalar_lea.hbm %s0, %s421
          %s423 = sshll.u32 %s416, 4
          %s424 = int_to_ptr.vmem [resolvable:$true] %s423
          %429 = dma.hbm_to_vmem [thread:$0]  %s422, 1024, %s424, %s413, 256, 256, 16
        $region72: #{tpu_custom_call.1} parent=67 // pred_fallthru
          _
      $region68: #{tpu_custom_call.1} parent=5 // pred_fallthru
        _
      %p430 = scmp.le.s32.totalorder 1, %s26
      %p431 = scmp.lt.s32.totalorder %s26, 3
      %p432 = pnand %p430, %p431
      %p433 = pneg %p432
      // Predicated region
      $region73: #{tpu_custom_call.1} parent=5 // pred_check
        _
      $region74: #{tpu_custom_call.1} parent=5 // pred_check_branch
        %435 = sbr.rel (%p432) target = $region76
      $region75: #{tpu_custom_call.1} parent=5 // pred_region
        %s436 = ssub.s32 %s26, 1
        %s437 = sand.u32 %s39, 1
        %s438 = scalar_lea.sflag [#allocation4], %s437
        %s439 = sand.u32 %s39, 1
        %s440 = smul.addr %s439, 64
        %s441 = scalar_lea.vmem [#allocation3], %s440
        // Predicated region
        $region77: #{tpu_custom_call.1} parent=75 // pred_check
          %p442 = pneg %p52
        $region78: #{tpu_custom_call.1} parent=75 // pred_check_branch
          %444 = sbr.rel (%p442) target = $region80
        $region79: #{tpu_custom_call.1} parent=75 // pred_region
          %445 = dma.done %s438, 1024
        $region80: #{tpu_custom_call.1} parent=75 // pred_fallthru
          _
        %s446 = sand.u32 %s39, 1
        %s447 = scalar_lea.sflag [#allocation4], %s446
        %s448 = sand.u32 %s39, 1
        %s449 = smul.addr %s448, 64
        %s450 = scalar_lea.vmem [#allocation3], %s449
        %p451 = pneg %p52
        %p452 = pneg %p49
        %p453 = pneg %p73
        %p454 = pneg %p70
        %p455 = pneg %p94
        %p456 = pneg %p91
        %p457 = pneg %p115
        %p458 = pneg %p112
        %p459 = pneg %p136
        %p460 = pneg %p133
        %p461 = pneg %p157
        %p462 = pneg %p154
        %p463 = pneg %p178
        %p464 = pneg %p175
        %p465 = pneg %p199
        %p466 = pneg %p196
        %p467 = pneg %p220
        %p468 = pneg %p217
        %p469 = pneg %p241
        %p470 = pneg %p238
        %p471 = pneg %p262
        %p472 = pneg %p259
        %p473 = pneg %p283
        %p474 = pneg %p280
        %p475 = pneg %p304
        %p476 = pneg %p301
        %p477 = pneg %p325
        %p478 = pneg %p322
        %p479 = pneg %p351
        %p480 = pneg %p348
        %s481 = sand.u32 %s338, 1
        %s482 = scalar_lea.sflag [#allocation5], %s481
        %s483 = sand.u32 %s338, 1
        %s484 = smul.addr %s483, 8
        %s485 = scalar_lea.vmem [#allocation6], %s484
        %v486 = vld [vmem:[%s1] sm:$0x3]
        %487 = vst [vmem:[#allocation2] sm:$0xff] 0.0
        %vm488 = vcmask 424960
        %489 = vst.msk [vmem:[#allocation2 + $0x8] sm:$0xff] %vm488, 0.0
        %v490 = vld [vmem:[%s441] sm:$0xff]
        %v491 = vld [vmem:[%s441 + $0x8] sm:$0xff]
        %494 = vrot.lane.b32.xlu0 %v490, 127
        %v495 = vpop.permute.xlu0 %494
        %496 = vrot.lane.b32.xlu0 %v491, 127
        %v497 = vpop.permute.xlu0 %496
        %vm498 = vcmask 1039360
        %v499 = vsel %vm498, %v495, %v497
        %502 = vrot.lane.b32.xlu0 %v490, 126
        %v503 = vpop.permute.xlu0 %502
        %504 = vrot.lane.b32.xlu0 %v491, 126
        %v505 = vpop.permute.xlu0 %504
        %vm506 = vcmask 1031168
        %v507 = vsel %vm506, %v503, %v505
        %510 = vrot.lane.b32.xlu0 %v490, 110
        %v511 = vpop.permute.xlu0 %510
        %512 = vrot.lane.b32.xlu0 %v491, 110
        %v513 = vpop.permute.xlu0 %512
        %vm514 = vcmask 900096
        %v515 = vsel %vm514, %v511, %v513
        %518 = vrot.lane.b32.xlu0 %v490, 109
        %v519 = vpop.permute.xlu0 %518
        %520 = vrot.lane.b32.xlu0 %v491, 109
        %v521 = vpop.permute.xlu0 %520
        %vm522 = vcmask 891904
        %v523 = vsel %vm522, %v519, %v521
        %526 = vrot.lane.b32.xlu0 %v490, 108
        %v527 = vpop.permute.xlu0 %526
        %528 = vrot.lane.b32.xlu0 %v491, 108
        %v529 = vpop.permute.xlu0 %528
        %vm530 = vcmask 883712
        %v531 = vsel %vm530, %v527, %v529
        %534 = vrot.lane.b32.xlu0 %v490, 92
        %v535 = vpop.permute.xlu0 %534
        %536 = vrot.lane.b32.xlu0 %v491, 92
        %v537 = vpop.permute.xlu0 %536
        %vm538 = vcmask 752640
        %v539 = vsel %vm538, %v535, %v537
        %542 = vrot.lane.b32.xlu0 %v490, 91
        %v543 = vpop.permute.xlu0 %542
        %544 = vrot.lane.b32.xlu0 %v491, 91
        %v545 = vpop.permute.xlu0 %544
        %vm546 = vcmask 744448
        %v547 = vsel %vm546, %v543, %v545
        %550 = vrot.lane.b32.xlu0 %v490, 90
        %v551 = vpop.permute.xlu0 %550
        %552 = vrot.lane.b32.xlu0 %v491, 90
        %v553 = vpop.permute.xlu0 %552
        %vm554 = vcmask 736256
        %v555 = vsel %vm554, %v551, %v553
        %v558 = vld [vmem:[%s2] sm:$0xff]
        %v559 = vld [vmem:[%s3] sm:$0xff]
        %561 = vset.pattern.permute.xlu0 0
        %562 = vperm.xlu0 %561, %v559
        %v563 = vpop.permute.xlu0 %562
        %vm565 = vcmask 588800
        %v567 = vsel %vm565, %v558, 0
        %569 = vmatprep.subr.mxu0 %v491
        %570 = vmatpush1.msra.mxu0 %v490
        %571 = vmatprep.subr.mxu0 %v497
        %572 = vmatpush1.msra.mxu0 %v499
        %573 = vmatprep.subr.mxu0 %v505
        %574 = vmatpush1.msra.mxu0 %v507
        %575 = vmatprep.subr.mxu0 %v513
        %576 = vmatpush1.msra.mxu0 %v515
        %577 = vmatprep.subr.mxu0 %v521
        %578 = vmatpush1.msra.mxu0 %v523
        %579 = vmatprep.subr.mxu0 %v529
        %580 = vmatpush1.msra.mxu0 %v531
        %581 = vmatprep.subr.mxu0 %v537
        %582 = vmatpush1.msra.mxu0 %v539
        %583 = vmatprep.subr.mxu0 %v545
        %584 = vmatpush1.msra.mxu0 %v547
        %585 = vmatprep.subr.mxu0 %v553
        %586 = vmatpush1.msra.mxu0 %v555
        %587 = vmatprep.subr.mxu0 0.0
        %588 = vmatpush1.msra.mxu0 0.0
        %589 = vmatprep.subr.mxu0 0.0
        %590 = vmatpush1.msra.mxu0 0.0
        %591 = vmatprep.subr.mxu0 0.0
        %592 = vmatpush1.msra.mxu0 0.0
        %593 = vmatprep.subr.mxu0 0.0
        %594 = vmatpush1.msra.mxu0 0.0
        %595 = vmatprep.subr.mxu0 0.0
        %596 = vmatpush1.msra.mxu0 0.0
        %597 = vmatprep.subr.mxu0 0.0
        %598 = vmatpush1.msra.mxu0 0.0
        %599 = vmatprep.subr.mxu0 0.0
        %600 = vmatpush1.msra.mxu0 0.0
        %601 = vmatprep.subr.mxu0 0.0
        %602 = vmatpush1.msra.mxu0 0.0
        %603 = vmatprep.subr.mxu0 0.0
        %604 = vmatpush1.msra.mxu0 0.0
        %605 = vmatprep.subr.mxu0 0.0
        %606 = vmatpush1.msra.mxu0 0.0
        %607 = vmatprep.subr.mxu0 0.0
        %608 = vmatpush1.msra.mxu0 0.0
        %609 = vmatprep.subr.mxu0 0.0
        %610 = vmatpush1.msra.mxu0 0.0
        %611 = vmatprep.subr.mxu0 0.0
        %612 = vmatpush1.msra.mxu0 0.0
        %613 = vmatprep.subr.mxu0 0.0
        %614 = vmatpush1.msra.mxu0 0.0
        %615 = vmatprep.subr.mxu0 0.0
        %616 = vmatpush1.msra.mxu0 0.0
        %617 = vmatprep.subr.mxu0 0.0
        %618 = vmatpush1.msra.mxu0 0.0
        %619 = vmatprep.subr.mxu0 0.0
        %620 = vmatpush1.msra.mxu0 0.0
        %621 = vmatprep.subr.mxu0 0.0
        %622 = vmatpush1.msra.mxu0 0.0
        %623 = vmatprep.subr.mxu0 0.0
        %624 = vmatpush1.msra.mxu0 0.0
        %625 = vmatprep.subr.mxu0 0.0
        %626 = vmatpush1.msra.mxu0 0.0
        %627 = vmatprep.subr.mxu0 0.0
        %628 = vmatpush1.msra.mxu0 0.0
        %629 = vmatprep.subr.mxu0 0.0
        %630 = vmatpush1.msra.mxu0 0.0
        %631 = vmatprep.subr.mxu0 0.0
        %632 = vmatpush1.msra.mxu0 0.0
        %633 = vmatprep.mubr.f32.mxu0 0.0
        %634 = vmatmul.mubr.f32.gmra.mrb[0].mxu0 %v567
        %v635 = vpop.f32.mrb[0].mxu0
        %v636 = vadd.f32 %v563, %v635
        %v637 = vpop.f32.mrb[0].mxu0
        %v638 = vadd.f32 %v563, %v637
        %639 = vdwg.mxu0
        %v640 = vmax.f32 %v636, 0.0
        %v641 = vmax.f32 %v638, 0.0
        %v643 = vlaneseq
        %v644 = vshrl.u32 %v643, 7
        %v645 = vsub.s32 0, %v644
        %v646 = vrot.slane %v486, %v645
        %v647 = vlaneseq
        %v648 = vshrl.u32 %v647, 7
        %v649 = vsub.s32 1, %v648
        %v650 = vrot.slane %v486, %v649
        %v653 = vmul.f32 %v640, %v646
        %v654 = vmul.f32 %v641, %v650
        %657 = vrot.lane.b32.xlu0 %v653, 19
        %v658 = vpop.permute.xlu0 %657
        %659 = vrot.lane.b32.xlu0 %v654, 19
        %v660 = vpop.permute.xlu0 %659
        %vm661 = vcmask 154624
        %v662 = vsel %vm661, %v658, %v660
        %vm665 = vcmask 1047704
        %666 = vst.msk [vmem:[#allocation2] sm:$0xff] %vm665, %v658
        %vm667 = vcmask 269312
        %668 = vst.msk [vmem:[#allocation2 + $0x8] sm:$0xff] %vm667, %v662
        %v669 = vld [vmem:[#allocation2] sm:$0xff]
        %v670 = vld [vmem:[#allocation2 + $0x8] sm:$0xff]
        %673 = vrot.lane.b32.xlu0 %v669, 127
        %v674 = vpop.permute.xlu0 %673
        %675 = vrot.lane.b32.xlu0 %v670, 127
        %v676 = vpop.permute.xlu0 %675
        %v677 = vsel %vm498, %v674, %v676
        %680 = vrot.lane.b32.xlu0 %v669, 126
        %v681 = vpop.permute.xlu0 %680
        %682 = vrot.lane.b32.xlu0 %v670, 126
        %v683 = vpop.permute.xlu0 %682
        %v684 = vsel %vm506, %v681, %v683
        %687 = vrot.lane.b32.xlu0 %v669, 110
        %v688 = vpop.permute.xlu0 %687
        %689 = vrot.lane.b32.xlu0 %v670, 110
        %v690 = vpop.permute.xlu0 %689
        %v691 = vsel %vm514, %v688, %v690
        %694 = vrot.lane.b32.xlu0 %v669, 109
        %v695 = vpop.permute.xlu0 %694
        %696 = vrot.lane.b32.xlu0 %v670, 109
        %v697 = vpop.permute.xlu0 %696
        %v698 = vsel %vm522, %v695, %v697
        %701 = vrot.lane.b32.xlu0 %v669, 108
        %v702 = vpop.permute.xlu0 %701
        %703 = vrot.lane.b32.xlu0 %v670, 108
        %v704 = vpop.permute.xlu0 %703
        %v705 = vsel %vm530, %v702, %v704
        %708 = vrot.lane.b32.xlu0 %v669, 92
        %v709 = vpop.permute.xlu0 %708
        %710 = vrot.lane.b32.xlu0 %v670, 92
        %v711 = vpop.permute.xlu0 %710
        %v712 = vsel %vm538, %v709, %v711
        %715 = vrot.lane.b32.xlu0 %v669, 91
        %v716 = vpop.permute.xlu0 %715
        %717 = vrot.lane.b32.xlu0 %v670, 91
        %v718 = vpop.permute.xlu0 %717
        %v719 = vsel %vm546, %v716, %v718
        %722 = vrot.lane.b32.xlu0 %v669, 90
        %v723 = vpop.permute.xlu0 %722
        %724 = vrot.lane.b32.xlu0 %v670, 90
        %v725 = vpop.permute.xlu0 %724
        %v726 = vsel %vm554, %v723, %v725
        %v729 = vld [vmem:[%s4] sm:$0xff]
        %v730 = vld [vmem:[%s5] sm:$0xff]
        %732 = vset.pattern.permute.xlu0 0
        %733 = vperm.xlu0 %732, %v730
        %v734 = vpop.permute.xlu0 %733
        %v737 = vsel %vm565, %v729, 0
        %739 = vmatprep.subr.mxu0 %v670
        %740 = vmatpush1.msra.mxu0 %v669
        %741 = vmatprep.subr.mxu0 %v676
        %742 = vmatpush1.msra.mxu0 %v677
        %743 = vmatprep.subr.mxu0 %v683
        %744 = vmatpush1.msra.mxu0 %v684
        %745 = vmatprep.subr.mxu0 %v690
        %746 = vmatpush1.msra.mxu0 %v691
        %747 = vmatprep.subr.mxu0 %v697
        %748 = vmatpush1.msra.mxu0 %v698
        %749 = vmatprep.subr.mxu0 %v704
        %750 = vmatpush1.msra.mxu0 %v705
        %751 = vmatprep.subr.mxu0 %v711
        %752 = vmatpush1.msra.mxu0 %v712
        %753 = vmatprep.subr.mxu0 %v718
        %754 = vmatpush1.msra.mxu0 %v719
        %755 = vmatprep.subr.mxu0 %v725
        %756 = vmatpush1.msra.mxu0 %v726
        %757 = vmatprep.subr.mxu0 0.0
        %758 = vmatpush1.msra.mxu0 0.0
        %759 = vmatprep.subr.mxu0 0.0
        %760 = vmatpush1.msra.mxu0 0.0
        %761 = vmatprep.subr.mxu0 0.0
        %762 = vmatpush1.msra.mxu0 0.0
        %763 = vmatprep.subr.mxu0 0.0
        %764 = vmatpush1.msra.mxu0 0.0
        %765 = vmatprep.subr.mxu0 0.0
        %766 = vmatpush1.msra.mxu0 0.0
        %767 = vmatprep.subr.mxu0 0.0
        %768 = vmatpush1.msra.mxu0 0.0
        %769 = vmatprep.subr.mxu0 0.0
        %770 = vmatpush1.msra.mxu0 0.0
        %771 = vmatprep.subr.mxu0 0.0
        %772 = vmatpush1.msra.mxu0 0.0
        %773 = vmatprep.subr.mxu0 0.0
        %774 = vmatpush1.msra.mxu0 0.0
        %775 = vmatprep.subr.mxu0 0.0
        %776 = vmatpush1.msra.mxu0 0.0
        %777 = vmatprep.subr.mxu0 0.0
        %778 = vmatpush1.msra.mxu0 0.0
        %779 = vmatprep.subr.mxu0 0.0
        %780 = vmatpush1.msra.mxu0 0.0
        %781 = vmatprep.subr.mxu0 0.0
        %782 = vmatpush1.msra.mxu0 0.0
        %783 = vmatprep.subr.mxu0 0.0
        %784 = vmatpush1.msra.mxu0 0.0
        %785 = vmatprep.subr.mxu0 0.0
        %786 = vmatpush1.msra.mxu0 0.0
        %787 = vmatprep.subr.mxu0 0.0
        %788 = vmatpush1.msra.mxu0 0.0
        %789 = vmatprep.subr.mxu0 0.0
        %790 = vmatpush1.msra.mxu0 0.0
        %791 = vmatprep.subr.mxu0 0.0
        %792 = vmatpush1.msra.mxu0 0.0
        %793 = vmatprep.subr.mxu0 0.0
        %794 = vmatpush1.msra.mxu0 0.0
        %795 = vmatprep.subr.mxu0 0.0
        %796 = vmatpush1.msra.mxu0 0.0
        %797 = vmatprep.subr.mxu0 0.0
        %798 = vmatpush1.msra.mxu0 0.0
        %799 = vmatprep.subr.mxu0 0.0
        %800 = vmatpush1.msra.mxu0 0.0
        %801 = vmatprep.subr.mxu0 0.0
        %802 = vmatpush1.msra.mxu0 0.0
        %803 = vmatprep.mubr.f32.mxu0 0.0
        %804 = vmatmul.mubr.f32.gmra.mrb[0].mxu0 %v737
        %v805 = vpop.f32.mrb[0].mxu0
        %v806 = vadd.f32 %v734, %v805
        %v807 = vpop.f32.mrb[0].mxu0
        %v808 = vadd.f32 %v734, %v807
        %809 = vdwg.mxu0
        %v810 = vmax.f32 %v806, 0.0
        %v811 = vmax.f32 %v808, 0.0
        %v812 = vmul.f32 %v810, %v646
        %v813 = vmul.f32 %v811, %v650
        %816 = vrot.lane.b32.xlu0 %v812, 19
        %v817 = vpop.permute.xlu0 %816
        %818 = vrot.lane.b32.xlu0 %v813, 19
        %v819 = vpop.permute.xlu0 %818
        %v820 = vsel %vm661, %v817, %v819
        %823 = vst.msk [vmem:[#allocation2] sm:$0xff] %vm665, %v817
        %824 = vst.msk [vmem:[#allocation2 + $0x8] sm:$0xff] %vm667, %v820
        %v825 = vld [vmem:[#allocation2] sm:$0xff]
        %v826 = vld [vmem:[#allocation2 + $0x8] sm:$0xff]
        %829 = vrot.lane.b32.xlu0 %v825, 127
        %v830 = vpop.permute.xlu0 %829
        %831 = vrot.lane.b32.xlu0 %v826, 127
        %v832 = vpop.permute.xlu0 %831
        %v833 = vsel %vm498, %v830, %v832
        %836 = vrot.lane.b32.xlu0 %v825, 126
        %v837 = vpop.permute.xlu0 %836
        %838 = vrot.lane.b32.xlu0 %v826, 126
        %v839 = vpop.permute.xlu0 %838
        %v840 = vsel %vm506, %v837, %v839
        %843 = vrot.lane.b32.xlu0 %v825, 110
        %v844 = vpop.permute.xlu0 %843
        %845 = vrot.lane.b32.xlu0 %v826, 110
        %v846 = vpop.permute.xlu0 %845
        %v847 = vsel %vm514, %v844, %v846
        %850 = vrot.lane.b32.xlu0 %v825, 109
        %v851 = vpop.permute.xlu0 %850
        %852 = vrot.lane.b32.xlu0 %v826, 109
        %v853 = vpop.permute.xlu0 %852
        %v854 = vsel %vm522, %v851, %v853
        %857 = vrot.lane.b32.xlu0 %v825, 108
        %v858 = vpop.permute.xlu0 %857
        %859 = vrot.lane.b32.xlu0 %v826, 108
        %v860 = vpop.permute.xlu0 %859
        %v861 = vsel %vm530, %v858, %v860
        %864 = vrot.lane.b32.xlu0 %v825, 92
        %v865 = vpop.permute.xlu0 %864
        %866 = vrot.lane.b32.xlu0 %v826, 92
        %v867 = vpop.permute.xlu0 %866
        %v868 = vsel %vm538, %v865, %v867
        %871 = vrot.lane.b32.xlu0 %v825, 91
        %v872 = vpop.permute.xlu0 %871
        %873 = vrot.lane.b32.xlu0 %v826, 91
        %v874 = vpop.permute.xlu0 %873
        %v875 = vsel %vm546, %v872, %v874
        %878 = vrot.lane.b32.xlu0 %v825, 90
        %v879 = vpop.permute.xlu0 %878
        %880 = vrot.lane.b32.xlu0 %v826, 90
        %v881 = vpop.permute.xlu0 %880
        %v882 = vsel %vm554, %v879, %v881
        %v885 = vld [vmem:[%s6] sm:$0xff]
        %v886 = vld [vmem:[%s7] sm:$0xff]
        %888 = vset.pattern.permute.xlu0 0
        %889 = vperm.xlu0 %888, %v886
        %v890 = vpop.permute.xlu0 %889
        %v893 = vsel %vm565, %v885, 0
        %895 = vmatprep.subr.mxu0 %v826
        %896 = vmatpush1.msra.mxu0 %v825
        %897 = vmatprep.subr.mxu0 %v832
        %898 = vmatpush1.msra.mxu0 %v833
        %899 = vmatprep.subr.mxu0 %v839
        %900 = vmatpush1.msra.mxu0 %v840
        %901 = vmatprep.subr.mxu0 %v846
        %902 = vmatpush1.msra.mxu0 %v847
        %903 = vmatprep.subr.mxu0 %v853
        %904 = vmatpush1.msra.mxu0 %v854
        %905 = vmatprep.subr.mxu0 %v860
        %906 = vmatpush1.msra.mxu0 %v861
        %907 = vmatprep.subr.mxu0 %v867
        %908 = vmatpush1.msra.mxu0 %v868
        %909 = vmatprep.subr.mxu0 %v874
        %910 = vmatpush1.msra.mxu0 %v875
        %911 = vmatprep.subr.mxu0 %v881
        %912 = vmatpush1.msra.mxu0 %v882
        %913 = vmatprep.subr.mxu0 0.0
        %914 = vmatpush1.msra.mxu0 0.0
        %915 = vmatprep.subr.mxu0 0.0
        %916 = vmatpush1.msra.mxu0 0.0
        %917 = vmatprep.subr.mxu0 0.0
        %918 = vmatpush1.msra.mxu0 0.0
        %919 = vmatprep.subr.mxu0 0.0
        %920 = vmatpush1.msra.mxu0 0.0
        %921 = vmatprep.subr.mxu0 0.0
        %922 = vmatpush1.msra.mxu0 0.0
        %923 = vmatprep.subr.mxu0 0.0
        %924 = vmatpush1.msra.mxu0 0.0
        %925 = vmatprep.subr.mxu0 0.0
        %926 = vmatpush1.msra.mxu0 0.0
        %927 = vmatprep.subr.mxu0 0.0
        %928 = vmatpush1.msra.mxu0 0.0
        %929 = vmatprep.subr.mxu0 0.0
        %930 = vmatpush1.msra.mxu0 0.0
        %931 = vmatprep.subr.mxu0 0.0
        %932 = vmatpush1.msra.mxu0 0.0
        %933 = vmatprep.subr.mxu0 0.0
        %934 = vmatpush1.msra.mxu0 0.0
        %935 = vmatprep.subr.mxu0 0.0
        %936 = vmatpush1.msra.mxu0 0.0
        %937 = vmatprep.subr.mxu0 0.0
        %938 = vmatpush1.msra.mxu0 0.0
        %939 = vmatprep.subr.mxu0 0.0
        %940 = vmatpush1.msra.mxu0 0.0
        %941 = vmatprep.subr.mxu0 0.0
        %942 = vmatpush1.msra.mxu0 0.0
        %943 = vmatprep.subr.mxu0 0.0
        %944 = vmatpush1.msra.mxu0 0.0
        %945 = vmatprep.subr.mxu0 0.0
        %946 = vmatpush1.msra.mxu0 0.0
        %947 = vmatprep.subr.mxu0 0.0
        %948 = vmatpush1.msra.mxu0 0.0
        %949 = vmatprep.subr.mxu0 0.0
        %950 = vmatpush1.msra.mxu0 0.0
        %951 = vmatprep.subr.mxu0 0.0
        %952 = vmatpush1.msra.mxu0 0.0
        %953 = vmatprep.subr.mxu0 0.0
        %954 = vmatpush1.msra.mxu0 0.0
        %955 = vmatprep.subr.mxu0 0.0
        %956 = vmatpush1.msra.mxu0 0.0
        %957 = vmatprep.subr.mxu0 0.0
        %958 = vmatpush1.msra.mxu0 0.0
        %959 = vmatprep.mubr.f32.mxu0 0.0
        %960 = vmatmul.mubr.f32.gmra.mrb[0].mxu0 %v893
        %v961 = vpop.f32.mrb[0].mxu0
        %v962 = vadd.f32 %v890, %v961
        %v963 = vpop.f32.mrb[0].mxu0
        %v964 = vadd.f32 %v890, %v963
        %965 = vdwg.mxu0
        %v966 = vmax.f32 %v962, 0.0
        %v967 = vmax.f32 %v964, 0.0
        %v968 = vmul.f32 %v966, %v646
        %v969 = vmul.f32 %v967, %v650
        %972 = vrot.lane.b32.xlu0 %v968, 19
        %v973 = vpop.permute.xlu0 %972
        %974 = vrot.lane.b32.xlu0 %v969, 19
        %v975 = vpop.permute.xlu0 %974
        %v976 = vsel %vm661, %v973, %v975
        %979 = vst.msk [vmem:[#allocation2] sm:$0xff] %vm665, %v973
        %980 = vst.msk [vmem:[#allocation2 + $0x8] sm:$0xff] %vm667, %v976
        %v981 = vld [vmem:[#allocation2] sm:$0xff]
        %v982 = vld [vmem:[#allocation2 + $0x8] sm:$0xff]
        %985 = vrot.lane.b32.xlu0 %v981, 127
        %v986 = vpop.permute.xlu0 %985
        %987 = vrot.lane.b32.xlu0 %v982, 127
        %v988 = vpop.permute.xlu0 %987
        %v989 = vsel %vm498, %v986, %v988
        %992 = vrot.lane.b32.xlu0 %v981, 126
        %v993 = vpop.permute.xlu0 %992
        %994 = vrot.lane.b32.xlu0 %v982, 126
        %v995 = vpop.permute.xlu0 %994
        %v996 = vsel %vm506, %v993, %v995
        %999 = vrot.lane.b32.xlu0 %v981, 110
        %v1000 = vpop.permute.xlu0 %999
        %1001 = vrot.lane.b32.xlu0 %v982, 110
        %v1002 = vpop.permute.xlu0 %1001
        %v1003 = vsel %vm514, %v1000, %v1002
        %1006 = vrot.lane.b32.xlu0 %v981, 109
        %v1007 = vpop.permute.xlu0 %1006
        %1008 = vrot.lane.b32.xlu0 %v982, 109
        %v1009 = vpop.permute.xlu0 %1008
        %v1010 = vsel %vm522, %v1007, %v1009
        %1013 = vrot.lane.b32.xlu0 %v981, 108
        %v1014 = vpop.permute.xlu0 %1013
        %1015 = vrot.lane.b32.xlu0 %v982, 108
        %v1016 = vpop.permute.xlu0 %1015
        %v1017 = vsel %vm530, %v1014, %v1016
        %1020 = vrot.lane.b32.xlu0 %v981, 92
        %v1021 = vpop.permute.xlu0 %1020
        %1022 = vrot.lane.b32.xlu0 %v982, 92
        %v1023 = vpop.permute.xlu0 %1022
        %v1024 = vsel %vm538, %v1021, %v1023
        %1027 = vrot.lane.b32.xlu0 %v981, 91
        %v1028 = vpop.permute.xlu0 %1027
        %1029 = vrot.lane.b32.xlu0 %v982, 91
        %v1030 = vpop.permute.xlu0 %1029
        %v1031 = vsel %vm546, %v1028, %v1030
        %1034 = vrot.lane.b32.xlu0 %v981, 90
        %v1035 = vpop.permute.xlu0 %1034
        %1036 = vrot.lane.b32.xlu0 %v982, 90
        %v1037 = vpop.permute.xlu0 %1036
        %v1038 = vsel %vm554, %v1035, %v1037
        %v1041 = vld [vmem:[%s8] sm:$0xff]
        %v1042 = vld [vmem:[%s9] sm:$0xff]
        %1044 = vset.pattern.permute.xlu0 0
        %1045 = vperm.xlu0 %1044, %v1042
        %v1046 = vpop.permute.xlu0 %1045
        %v1049 = vsel %vm565, %v1041, 0
        %1051 = vmatprep.subr.mxu0 %v982
        %1052 = vmatpush1.msra.mxu0 %v981
        %1053 = vmatprep.subr.mxu0 %v988
        %1054 = vmatpush1.msra.mxu0 %v989
        %1055 = vmatprep.subr.mxu0 %v995
        %1056 = vmatpush1.msra.mxu0 %v996
        %1057 = vmatprep.subr.mxu0 %v1002
        %1058 = vmatpush1.msra.mxu0 %v1003
        %1059 = vmatprep.subr.mxu0 %v1009
        %1060 = vmatpush1.msra.mxu0 %v1010
        %1061 = vmatprep.subr.mxu0 %v1016
        %1062 = vmatpush1.msra.mxu0 %v1017
        %1063 = vmatprep.subr.mxu0 %v1023
        %1064 = vmatpush1.msra.mxu0 %v1024
        %1065 = vmatprep.subr.mxu0 %v1030
        %1066 = vmatpush1.msra.mxu0 %v1031
        %1067 = vmatprep.subr.mxu0 %v1037
        %1068 = vmatpush1.msra.mxu0 %v1038
        %1069 = vmatprep.subr.mxu0 0.0
        %1070 = vmatpush1.msra.mxu0 0.0
        %1071 = vmatprep.subr.mxu0 0.0
        %1072 = vmatpush1.msra.mxu0 0.0
        %1073 = vmatprep.subr.mxu0 0.0
        %1074 = vmatpush1.msra.mxu0 0.0
        %1075 = vmatprep.subr.mxu0 0.0
        %1076 = vmatpush1.msra.mxu0 0.0
        %1077 = vmatprep.subr.mxu0 0.0
        %1078 = vmatpush1.msra.mxu0 0.0
        %1079 = vmatprep.subr.mxu0 0.0
        %1080 = vmatpush1.msra.mxu0 0.0
        %1081 = vmatprep.subr.mxu0 0.0
        %1082 = vmatpush1.msra.mxu0 0.0
        %1083 = vmatprep.subr.mxu0 0.0
        %1084 = vmatpush1.msra.mxu0 0.0
        %1085 = vmatprep.subr.mxu0 0.0
        %1086 = vmatpush1.msra.mxu0 0.0
        %1087 = vmatprep.subr.mxu0 0.0
        %1088 = vmatpush1.msra.mxu0 0.0
        %1089 = vmatprep.subr.mxu0 0.0
        %1090 = vmatpush1.msra.mxu0 0.0
        %1091 = vmatprep.subr.mxu0 0.0
        %1092 = vmatpush1.msra.mxu0 0.0
        %1093 = vmatprep.subr.mxu0 0.0
        %1094 = vmatpush1.msra.mxu0 0.0
        %1095 = vmatprep.subr.mxu0 0.0
        %1096 = vmatpush1.msra.mxu0 0.0
        %1097 = vmatprep.subr.mxu0 0.0
        %1098 = vmatpush1.msra.mxu0 0.0
        %1099 = vmatprep.subr.mxu0 0.0
        %1100 = vmatpush1.msra.mxu0 0.0
        %1101 = vmatprep.subr.mxu0 0.0
        %1102 = vmatpush1.msra.mxu0 0.0
        %1103 = vmatprep.subr.mxu0 0.0
        %1104 = vmatpush1.msra.mxu0 0.0
        %1105 = vmatprep.subr.mxu0 0.0
        %1106 = vmatpush1.msra.mxu0 0.0
        %1107 = vmatprep.subr.mxu0 0.0
        %1108 = vmatpush1.msra.mxu0 0.0
        %1109 = vmatprep.subr.mxu0 0.0
        %1110 = vmatpush1.msra.mxu0 0.0
        %1111 = vmatprep.subr.mxu0 0.0
        %1112 = vmatpush1.msra.mxu0 0.0
        %1113 = vmatprep.subr.mxu0 0.0
        %1114 = vmatpush1.msra.mxu0 0.0
        %1115 = vmatprep.mubr.f32.mxu0 0.0
        %1116 = vmatmul.mubr.f32.gmra.mrb[0].mxu0 %v1049
        %v1117 = vpop.f32.mrb[0].mxu0
        %v1118 = vadd.f32 %v1046, %v1117
        %v1119 = vpop.f32.mrb[0].mxu0
        %v1120 = vadd.f32 %v1046, %v1119
        %1121 = vdwg.mxu0
        %v1122 = vmax.f32 %v1118, 0.0
        %v1123 = vmax.f32 %v1120, 0.0
        %v1124 = vmul.f32 %v1122, %v646
        %v1125 = vmul.f32 %v1123, %v650
        %1128 = vrot.lane.b32.xlu0 %v1124, 19
        %v1129 = vpop.permute.xlu0 %1128
        %1130 = vrot.lane.b32.xlu0 %v1125, 19
        %v1131 = vpop.permute.xlu0 %1130
        %v1132 = vsel %vm661, %v1129, %v1131
        %1135 = vst.msk [vmem:[#allocation2] sm:$0xff] %vm665, %v1129
        %1136 = vst.msk [vmem:[#allocation2 + $0x8] sm:$0xff] %vm667, %v1132
        %v1137 = vld [vmem:[#allocation2] sm:$0xff]
        %v1138 = vld [vmem:[#allocation2 + $0x8] sm:$0xff]
        %v1139 = vld [vmem:[%s10] sm:$0xff]
        %v1140 = vld [vmem:[%s10 + $0x8] sm:$0xff]
        %v1141 = vld [vmem:[%s10 + $0x10] sm:$0xff]
        %v1142 = vld [vmem:[%s10 + $0x18] sm:$0xff]
        %v1143 = vld [vmem:[%s11] sm:$0xff]
        %v1144 = vld [vmem:[%s11 + $0x8] sm:$0xff]
        %v1145 = vld [vmem:[%s11 + $0x10] sm:$0xff]
        %v1146 = vld [vmem:[%s11 + $0x18] sm:$0xff]
        %1148 = vset.pattern.permute.xlu0 0
        %1149 = vperm.xlu0 %1148, %v1143
        %v1150 = vpop.permute.xlu0 %1149
        %1153 = vset.pattern.permute.xlu0 0
        %1154 = vperm.xlu0 %1153, %v1144
        %v1155 = vpop.permute.xlu0 %1154
        %1158 = vset.pattern.permute.xlu0 0
        %1159 = vperm.xlu0 %1158, %v1145
        %v1160 = vpop.permute.xlu0 %1159
        %1163 = vset.pattern.permute.xlu0 0
        %1164 = vperm.xlu0 %1163, %v1146
        %v1165 = vpop.permute.xlu0 %1164
        %vm1167 = vcmask 130048
        %v1169 = vsel %vm1167, %v1139, 0
        %v1172 = vsel %vm1167, %v1140, 0
        %v1175 = vsel %vm1167, %v1141, 0
        %v1178 = vsel %vm1167, %v1142, 0
        %1180 = vmatprep.subr.mxu0 %v1138
        %1181 = vmatpush1.msra.mxu0 %v1137
        %1182 = vmatprep.subr.mxu0 0.0
        %1183 = vmatpush1.msra.mxu0 0.0
        %1184 = vmatprep.subr.mxu0 0.0
        %1185 = vmatpush1.msra.mxu0 0.0
        %1186 = vmatprep.subr.mxu0 0.0
        %1187 = vmatpush1.msra.mxu0 0.0
        %1188 = vmatprep.subr.mxu0 0.0
        %1189 = vmatpush1.msra.mxu0 0.0
        %1190 = vmatprep.subr.mxu0 0.0
        %1191 = vmatpush1.msra.mxu0 0.0
        %1192 = vmatprep.subr.mxu0 0.0
        %1193 = vmatpush1.msra.mxu0 0.0
        %1194 = vmatprep.subr.mxu0 0.0
        %1195 = vmatpush1.msra.mxu0 0.0
        %1196 = vmatprep.subr.mxu0 0.0
        %1197 = vmatpush1.msra.mxu0 0.0
        %1198 = vmatprep.subr.mxu0 0.0
        %1199 = vmatpush1.msra.mxu0 0.0
        %1200 = vmatprep.subr.mxu0 0.0
        %1201 = vmatpush1.msra.mxu0 0.0
        %1202 = vmatprep.subr.mxu0 0.0
        %1203 = vmatpush1.msra.mxu0 0.0
        %1204 = vmatprep.subr.mxu0 0.0
        %1205 = vmatpush1.msra.mxu0 0.0
        %1206 = vmatprep.subr.mxu0 0.0
        %1207 = vmatpush1.msra.mxu0 0.0
        %1208 = vmatprep.subr.mxu0 0.0
        %1209 = vmatpush1.msra.mxu0 0.0
        %1210 = vmatprep.subr.mxu0 0.0
        %1211 = vmatpush1.msra.mxu0 0.0
        %1212 = vmatprep.subr.mxu0 0.0
        %1213 = vmatpush1.msra.mxu0 0.0
        %1214 = vmatprep.subr.mxu0 0.0
        %1215 = vmatpush1.msra.mxu0 0.0
        %1216 = vmatprep.subr.mxu0 0.0
        %1217 = vmatpush1.msra.mxu0 0.0
        %1218 = vmatprep.subr.mxu0 0.0
        %1219 = vmatpush1.msra.mxu0 0.0
        %1220 = vmatprep.subr.mxu0 0.0
        %1221 = vmatpush1.msra.mxu0 0.0
        %1222 = vmatprep.subr.mxu0 0.0
        %1223 = vmatpush1.msra.mxu0 0.0
        %1224 = vmatprep.subr.mxu0 0.0
        %1225 = vmatpush1.msra.mxu0 0.0
        %1226 = vmatprep.subr.mxu0 0.0
        %1227 = vmatpush1.msra.mxu0 0.0
        %1228 = vmatprep.subr.mxu0 0.0
        %1229 = vmatpush1.msra.mxu0 0.0
        %1230 = vmatprep.subr.mxu0 0.0
        %1231 = vmatpush1.msra.mxu0 0.0
        %1232 = vmatprep.subr.mxu0 0.0
        %1233 = vmatpush1.msra.mxu0 0.0
        %1234 = vmatprep.subr.mxu0 0.0
        %1235 = vmatpush1.msra.mxu0 0.0
        %1236 = vmatprep.subr.mxu0 0.0
        %1237 = vmatpush1.msra.mxu0 0.0
        %1238 = vmatprep.subr.mxu0 0.0
        %1239 = vmatpush1.msra.mxu0 0.0
        %1240 = vmatprep.subr.mxu0 0.0
        %1241 = vmatpush1.msra.mxu0 0.0
        %1242 = vmatprep.subr.mxu0 0.0
        %1243 = vmatpush1.msra.mxu0 0.0
        %1244 = vmatprep.mubr.f32.mxu0 0.0
        %1245 = vmatmul.mubr.f32.gmra.mrb[0].mxu0 %v1169
        %v1246 = vpop.f32.mrb[0].mxu0
        %v1247 = vadd.f32 %v1150, %v1246
        %v1248 = vpop.f32.mrb[0].mxu0
        %v1249 = vadd.f32 %v1150, %v1248
        %1250 = vmatprep.mubr.f32.mxu0 0.0
        %1251 = vmatmul.mubr.f32.gmra.mrb[0].mxu0 %v1172
        %v1252 = vpop.f32.mrb[0].mxu0
        %v1253 = vadd.f32 %v1155, %v1252
        %v1254 = vpop.f32.mrb[0].mxu0
        %v1255 = vadd.f32 %v1155, %v1254
        %1256 = vmatprep.mubr.f32.mxu0 0.0
        %1257 = vmatmul.mubr.f32.gmra.mrb[0].mxu0 %v1175
        %v1258 = vpop.f32.mrb[0].mxu0
        %v1259 = vadd.f32 %v1160, %v1258
        %v1260 = vpop.f32.mrb[0].mxu0
        %v1261 = vadd.f32 %v1160, %v1260
        %1262 = vmatprep.mubr.f32.mxu0 0.0
        %1263 = vmatmul.mubr.f32.gmra.mrb[0].mxu0 %v1178
        %v1264 = vpop.f32.mrb[0].mxu0
        %v1265 = vadd.f32 %v1165, %v1264
        %v1266 = vpop.f32.mrb[0].mxu0
        %v1267 = vadd.f32 %v1165, %v1266
        %1268 = vdwg.mxu0
        %v1269 = vxor.u32 %v1247, 2147483648
        %v1270 = vxor.u32 %v1249, 2147483648
        %v1271 = vmul.f32 %v1269, 1.442695
        %v1272 = vpow.pop %v1271
        %v1273 = vmul.f32 %v1270, 1.442695
        %v1274 = vpow.pop %v1273
        %v1275 = vadd.f32 %v1272, 1.0
        %v1276 = vadd.f32 %v1274, 1.0
        %v1277 = vrcp.pop %v1275
        %v1278 = vmul.f32 1.0, %v1277
        %v1279 = vrcp.pop %v1276
        %v1280 = vmul.f32 1.0, %v1279
        %v1281 = vxor.u32 %v1253, 2147483648
        %v1282 = vxor.u32 %v1255, 2147483648
        %v1283 = vmul.f32 %v1281, 1.442695
        %v1284 = vpow.pop %v1283
        %v1285 = vmul.f32 %v1282, 1.442695
        %v1286 = vpow.pop %v1285
        %v1287 = vadd.f32 %v1284, 1.0
        %v1288 = vadd.f32 %v1286, 1.0
        %v1289 = vrcp.pop %v1287
        %v1290 = vmul.f32 1.0, %v1289
        %v1291 = vrcp.pop %v1288
        %v1292 = vmul.f32 1.0, %v1291
        %v1293 = vtanh.pop %v1259
        %v1294 = vtanh.pop %v1261
        %v1295 = vxor.u32 %v1265, 2147483648
        %v1296 = vxor.u32 %v1267, 2147483648
        %v1297 = vmul.f32 %v1295, 1.442695
        %v1298 = vpow.pop %v1297
        %v1299 = vmul.f32 %v1296, 1.442695
        %v1300 = vpow.pop %v1299
        %v1301 = vadd.f32 %v1298, 1.0
        %v1302 = vadd.f32 %v1300, 1.0
        %v1303 = vrcp.pop %v1301
        %v1304 = vmul.f32 1.0, %v1303
        %v1305 = vrcp.pop %v1302
        %v1306 = vmul.f32 1.0, %v1305
        %v1307 = vmul.f32 %v1290, 0.0
        %v1308 = vmul.f32 %v1292, 0.0
        %v1309 = vmul.f32 %v1278, %v1293
        %v1310 = vmul.f32 %v1280, %v1294
        %v1311 = vadd.f32 %v1307, %v1309
        %v1312 = vadd.f32 %v1308, %v1310
        %v1313 = vtanh.pop %v1311
        %v1314 = vtanh.pop %v1312
        %v1315 = vmul.f32 %v1304, %v1313
        %v1316 = vmul.f32 %v1306, %v1314
        %s1317 = scalar_lea.vmem %s441, 16 [#allocation3]
        %v1318 = vld [vmem:[%s1317] sm:$0xff]
        %v1319 = vld [vmem:[%s1317 + $0x8] sm:$0xff]
        %1322 = vrot.lane.b32.xlu0 %v1318, 127
        %v1323 = vpop.permute.xlu0 %1322
        %1324 = vrot.lane.b32.xlu0 %v1319, 127
        %v1325 = vpop.permute.xlu0 %1324
        %v1326 = vsel %vm498, %v1323, %v1325
        %1329 = vrot.lane.b32.xlu0 %v1318, 126
        %v1330 = vpop.permute.xlu0 %1329
        %1331 = vrot.lane.b32.xlu0 %v1319, 126
        %v1332 = vpop.permute.xlu0 %1331
        %v1333 = vsel %vm506, %v1330, %v1332
        %1336 = vrot.lane.b32.xlu0 %v1318, 110
        %v1337 = vpop.permute.xlu0 %1336
        %1338 = vrot.lane.b32.xlu0 %v1319, 110
        %v1339 = vpop.permute.xlu0 %1338
        %v1340 = vsel %vm514, %v1337, %v1339
        %1343 = vrot.lane.b32.xlu0 %v1318, 109
        %v1344 = vpop.permute.xlu0 %1343
        %1345 = vrot.lane.b32.xlu0 %v1319, 109
        %v1346 = vpop.permute.xlu0 %1345
        %v1347 = vsel %vm522, %v1344, %v1346
        %1350 = vrot.lane.b32.xlu0 %v1318, 108
        %v1351 = vpop.permute.xlu0 %1350
        %1352 = vrot.lane.b32.xlu0 %v1319, 108
        %v1353 = vpop.permute.xlu0 %1352
        %v1354 = vsel %vm530, %v1351, %v1353
        %1357 = vrot.lane.b32.xlu0 %v1318, 92
        %v1358 = vpop.permute.xlu0 %1357
        %1359 = vrot.lane.b32.xlu0 %v1319, 92
        %v1360 = vpop.permute.xlu0 %1359
        %v1361 = vsel %vm538, %v1358, %v1360
        %1364 = vrot.lane.b32.xlu0 %v1318, 91
        %v1365 = vpop.permute.xlu0 %1364
        %1366 = vrot.lane.b32.xlu0 %v1319, 91
        %v1367 = vpop.permute.xlu0 %1366
        %v1368 = vsel %vm546, %v1365, %v1367
        %1371 = vrot.lane.b32.xlu0 %v1318, 90
        %v1372 = vpop.permute.xlu0 %1371
        %1373 = vrot.lane.b32.xlu0 %v1319, 90
        %v1374 = vpop.permute.xlu0 %1373
        %v1375 = vsel %vm554, %v1372, %v1374
        %v1378 = vld [vmem:[%s2] sm:$0xff]
        %v1379 = vld [vmem:[%s3] sm:$0xff]
        %1381 = vset.pattern.permute.xlu0 0
        %1382 = vperm.xlu0 %1381, %v1379
        %v1383 = vpop.permute.xlu0 %1382
        %v1386 = vsel %vm565, %v1378, 0
        %1388 = vmatprep.subr.mxu0 %v1319
        %1389 = vmatpush1.msra.mxu0 %v1318
        %1390 = vmatprep.subr.mxu0 %v1325
        %1391 = vmatpush1.msra.mxu0 %v1326
        %1392 = vmatprep.subr.mxu0 %v1332
        %1393 = vmatpush1.msra.mxu0 %v1333
        %1394 = vmatprep.subr.mxu0 %v1339
        %1395 = vmatpush1.msra.mxu0 %v1340
        %1396 = vmatprep.subr.mxu0 %v1346
        %1397 = vmatpush1.msra.mxu0 %v1347
        %1398 = vmatprep.subr.mxu0 %v1353
        %1399 = vmatpush1.msra.mxu0 %v1354
        %1400 = vmatprep.subr.mxu0 %v1360
        %1401 = vmatpush1.msra.mxu0 %v1361
        %1402 = vmatprep.subr.mxu0 %v1367
        %1403 = vmatpush1.msra.mxu0 %v1368
        %1404 = vmatprep.subr.mxu0 %v1374
        %1405 = vmatpush1.msra.mxu0 %v1375
        %1406 = vmatprep.subr.mxu0 0.0
        %1407 = vmatpush1.msra.mxu0 0.0
        %1408 = vmatprep.subr.mxu0 0.0
        %1409 = vmatpush1.msra.mxu0 0.0
        %1410 = vmatprep.subr.mxu0 0.0
        %1411 = vmatpush1.msra.mxu0 0.0
        %1412 = vmatprep.subr.mxu0 0.0
        %1413 = vmatpush1.msra.mxu0 0.0
        %1414 = vmatprep.subr.mxu0 0.0
        %1415 = vmatpush1.msra.mxu0 0.0
        %1416 = vmatprep.subr.mxu0 0.0
        %1417 = vmatpush1.msra.mxu0 0.0
        %1418 = vmatprep.subr.mxu0 0.0
        %1419 = vmatpush1.msra.mxu0 0.0
        %1420 = vmatprep.subr.mxu0 0.0
        %1421 = vmatpush1.msra.mxu0 0.0
        %1422 = vmatprep.subr.mxu0 0.0
        %1423 = vmatpush1.msra.mxu0 0.0
        %1424 = vmatprep.subr.mxu0 0.0
        %1425 = vmatpush1.msra.mxu0 0.0
        %1426 = vmatprep.subr.mxu0 0.0
        %1427 = vmatpush1.msra.mxu0 0.0
        %1428 = vmatprep.subr.mxu0 0.0
        %1429 = vmatpush1.msra.mxu0 0.0
        %1430 = vmatprep.subr.mxu0 0.0
        %1431 = vmatpush1.msra.mxu0 0.0
        %1432 = vmatprep.subr.mxu0 0.0
        %1433 = vmatpush1.msra.mxu0 0.0
        %1434 = vmatprep.subr.mxu0 0.0
        %1435 = vmatpush1.msra.mxu0 0.0
        %1436 = vmatprep.subr.mxu0 0.0
        %1437 = vmatpush1.msra.mxu0 0.0
        %1438 = vmatprep.subr.mxu0 0.0
        %1439 = vmatpush1.msra.mxu0 0.0
        %1440 = vmatprep.subr.mxu0 0.0
        %1441 = vmatpush1.msra.mxu0 0.0
        %1442 = vmatprep.subr.mxu0 0.0
        %1443 = vmatpush1.msra.mxu0 0.0
        %1444 = vmatprep.subr.mxu0 0.0
        %1445 = vmatpush1.msra.mxu0 0.0
        %1446 = vmatprep.subr.mxu0 0.0
        %1447 = vmatpush1.msra.mxu0 0.0
        %1448 = vmatprep.subr.mxu0 0.0
        %1449 = vmatpush1.msra.mxu0 0.0
        %1450 = vmatprep.subr.mxu0 0.0
        %1451 = vmatpush1.msra.mxu0 0.0
        %1452 = vmatprep.mubr.f32.mxu0 0.0
        %1453 = vmatmul.mubr.f32.gmra.mrb[0].mxu0 %v1386
        %v1454 = vpop.f32.mrb[0].mxu0
        %v1455 = vadd.f32 %v1383, %v1454
        %v1456 = vpop.f32.mrb[0].mxu0
        %v1457 = vadd.f32 %v1383, %v1456
        %1458 = vdwg.mxu0
        %v1459 = vmax.f32 %v1455, 0.0
        %v1460 = vmax.f32 %v1457, 0.0
        %v1461 = vmul.f32 %v1459, %v646
        %v1462 = vmul.f32 %v1460, %v650
        %1465 = vrot.lane.b32.xlu0 %v1461, 19
        %v1466 = vpop.permute.xlu0 %1465
        %1467 = vrot.lane.b32.xlu0 %v1462, 19
        %v1468 = vpop.permute.xlu0 %1467
        %v1469 = vsel %vm661, %v1466, %v1468
        %1472 = vst.msk [vmem:[#allocation2] sm:$0xff] %vm665, %v1466
        %1473 = vst.msk [vmem:[#allocation2 + $0x8] sm:$0xff] %vm667, %v1469
        %v1474 = vld [vmem:[#allocation2] sm:$0xff]
        %v1475 = vld [vmem:[#allocation2 + $0x8] sm:$0xff]
        %1478 = vrot.lane.b32.xlu0 %v1474, 127
        %v1479 = vpop.permute.xlu0 %1478
        %1480 = vrot.lane.b32.xlu0 %v1475, 127
        %v1481 = vpop.permute.xlu0 %1480
        %v1482 = vsel %vm498, %v1479, %v1481
        %1485 = vrot.lane.b32.xlu0 %v1474, 126
        %v1486 = vpop.permute.xlu0 %1485
        %1487 = vrot.lane.b32.xlu0 %v1475, 126
        %v1488 = vpop.permute.xlu0 %1487
        %v1489 = vsel %vm506, %v1486, %v1488
        %1492 = vrot.lane.b32.xlu0 %v1474, 110
        %v1493 = vpop.permute.xlu0 %1492
        %1494 = vrot.lane.b32.xlu0 %v1475, 110
        %v1495 = vpop.permute.xlu0 %1494
        %v1496 = vsel %vm514, %v1493, %v1495
        %1499 = vrot.lane.b32.xlu0 %v1474, 109
        %v1500 = vpop.permute.xlu0 %1499
        %1501 = vrot.lane.b32.xlu0 %v1475, 109
        %v1502 = vpop.permute.xlu0 %1501
        %v1503 = vsel %vm522, %v1500, %v1502
        %1506 = vrot.lane.b32.xlu0 %v1474, 108
        %v1507 = vpop.permute.xlu0 %1506
        %1508 = vrot.lane.b32.xlu0 %v1475, 108
        %v1509 = vpop.permute.xlu0 %1508
        %v1510 = vsel %vm530, %v1507, %v1509
        %1513 = vrot.lane.b32.xlu0 %v1474, 92
        %v1514 = vpop.permute.xlu0 %1513
        %1515 = vrot.lane.b32.xlu0 %v1475, 92
        %v1516 = vpop.permute.xlu0 %1515
        %v1517 = vsel %vm538, %v1514, %v1516
        %1520 = vrot.lane.b32.xlu0 %v1474, 91
        %v1521 = vpop.permute.xlu0 %1520
        %1522 = vrot.lane.b32.xlu0 %v1475, 91
        %v1523 = vpop.permute.xlu0 %1522
        %v1524 = vsel %vm546, %v1521, %v1523
        %1527 = vrot.lane.b32.xlu0 %v1474, 90
        %v1528 = vpop.permute.xlu0 %1527
        %1529 = vrot.lane.b32.xlu0 %v1475, 90
        %v1530 = vpop.permute.xlu0 %1529
        %v1531 = vsel %vm554, %v1528, %v1530
        %v1534 = vld [vmem:[%s4] sm:$0xff]
        %v1535 = vld [vmem:[%s5] sm:$0xff]
        %1537 = vset.pattern.permute.xlu0 0
        %1538 = vperm.xlu0 %1537, %v1535
        %v1539 = vpop.permute.xlu0 %1538
        %v1542 = vsel %vm565, %v1534, 0
        %1544 = vmatprep.subr.mxu0 %v1475
        %1545 = vmatpush1.msra.mxu0 %v1474
        %1546 = vmatprep.subr.mxu0 %v1481
        %1547 = vmatpush1.msra.mxu0 %v1482
        %1548 = vmatprep.subr.mxu0 %v1488
        %1549 = vmatpush1.msra.mxu0 %v1489
        %1550 = vmatprep.subr.mxu0 %v1495
        %1551 = vmatpush1.msra.mxu0 %v1496
        %1552 = vmatprep.subr.mxu0 %v1502
        %1553 = vmatpush1.msra.mxu0 %v1503
        %1554 = vmatprep.subr.mxu0 %v1509
        %1555 = vmatpush1.msra.mxu0 %v1510
        %1556 = vmatprep.subr.mxu0 %v1516
        %1557 = vmatpush1.msra.mxu0 %v1517
        %1558 = vmatprep.subr.mxu0 %v1523
        %1559 = vmatpush1.msra.mxu0 %v1524
        %1560 = vmatprep.subr.mxu0 %v1530
        %1561 = vmatpush1.msra.mxu0 %v1531
        %1562 = vmatprep.subr.mxu0 0.0
        %1563 = vmatpush1.msra.mxu0 0.0
        %1564 = vmatprep.subr.mxu0 0.0
        %1565 = vmatpush1.msra.mxu0 0.0
        %1566 = vmatprep.subr.mxu0 0.0
        %1567 = vmatpush1.msra.mxu0 0.0
        %1568 = vmatprep.subr.mxu0 0.0
        %1569 = vmatpush1.msra.mxu0 0.0
        %1570 = vmatprep.subr.mxu0 0.0
        %1571 = vmatpush1.msra.mxu0 0.0
        %1572 = vmatprep.subr.mxu0 0.0
        %1573 = vmatpush1.msra.mxu0 0.0
        %1574 = vmatprep.subr.mxu0 0.0
        %1575 = vmatpush1.msra.mxu0 0.0
        %1576 = vmatprep.subr.mxu0 0.0
        %1577 = vmatpush1.msra.mxu0 0.0
        %1578 = vmatprep.subr.mxu0 0.0
        %1579 = vmatpush1.msra.mxu0 0.0
        %1580 = vmatprep.subr.mxu0 0.0
        %1581 = vmatpush1.msra.mxu0 0.0
        %1582 = vmatprep.subr.mxu0 0.0
        %1583 = vmatpush1.msra.mxu0 0.0
        %1584 = vmatprep.subr.mxu0 0.0
        %1585 = vmatpush1.msra.mxu0 0.0
        %1586 = vmatprep.subr.mxu0 0.0
        %1587 = vmatpush1.msra.mxu0 0.0
        %1588 = vmatprep.subr.mxu0 0.0
        %1589 = vmatpush1.msra.mxu0 0.0
        %1590 = vmatprep.subr.mxu0 0.0
        %1591 = vmatpush1.msra.mxu0 0.0
        %1592 = vmatprep.subr.mxu0 0.0
        %1593 = vmatpush1.msra.mxu0 0.0
        %1594 = vmatprep.subr.mxu0 0.0
        %1595 = vmatpush1.msra.mxu0 0.0
        %1596 = vmatprep.subr.mxu0 0.0
        %1597 = vmatpush1.msra.mxu0 0.0
        %1598 = vmatprep.subr.mxu0 0.0
        %1599 = vmatpush1.msra.mxu0 0.0
        %1600 = vmatprep.subr.mxu0 0.0
        %1601 = vmatpush1.msra.mxu0 0.0
        %1602 = vmatprep.subr.mxu0 0.0
        %1603 = vmatpush1.msra.mxu0 0.0
        %1604 = vmatprep.subr.mxu0 0.0
        %1605 = vmatpush1.msra.mxu0 0.0
        %1606 = vmatprep.subr.mxu0 0.0
        %1607 = vmatpush1.msra.mxu0 0.0
        %1608 = vmatprep.mubr.f32.mxu0 0.0
        %1609 = vmatmul.mubr.f32.gmra.mrb[0].mxu0 %v1542
        %v1610 = vpop.f32.mrb[0].mxu0
        %v1611 = vadd.f32 %v1539, %v1610
        %v1612 = vpop.f32.mrb[0].mxu0
        %v1613 = vadd.f32 %v1539, %v1612
        %1614 = vdwg.mxu0
        %v1615 = vmax.f32 %v1611, 0.0
        %v1616 = vmax.f32 %v1613, 0.0
        %v1617 = vmul.f32 %v1615, %v646
        %v1618 = vmul.f32 %v1616, %v650
        %1621 = vrot.lane.b32.xlu0 %v1617, 19
        %v1622 = vpop.permute.xlu0 %1621
        %1623 = vrot.lane.b32.xlu0 %v1618, 19
        %v1624 = vpop.permute.xlu0 %1623
        %v1625 = vsel %vm661, %v1622, %v1624
        %1628 = vst.msk [vmem:[#allocation2] sm:$0xff] %vm665, %v1622
        %1629 = vst.msk [vmem:[#allocation2 + $0x8] sm:$0xff] %vm667, %v1625
        %v1630 = vld [vmem:[#allocation2] sm:$0xff]
        %v1631 = vld [vmem:[#allocation2 + $0x8] sm:$0xff]
        %1634 = vrot.lane.b32.xlu0 %v1630, 127
        %v1635 = vpop.permute.xlu0 %1634
        %1636 = vrot.lane.b32.xlu0 %v1631, 127
        %v1637 = vpop.permute.xlu0 %1636
        %v1638 = vsel %vm498, %v1635, %v1637
        %1641 = vrot.lane.b32.xlu0 %v1630, 126
        %v1642 = vpop.permute.xlu0 %1641
        %1643 = vrot.lane.b32.xlu0 %v1631, 126
        %v1644 = vpop.permute.xlu0 %1643
        %v1645 = vsel %vm506, %v1642, %v1644
        %1648 = vrot.lane.b32.xlu0 %v1630, 110
        %v1649 = vpop.permute.xlu0 %1648
        %1650 = vrot.lane.b32.xlu0 %v1631, 110
        %v1651 = vpop.permute.xlu0 %1650
        %v1652 = vsel %vm514, %v1649, %v1651
        %1655 = vrot.lane.b32.xlu0 %v1630, 109
        %v1656 = vpop.permute.xlu0 %1655
        %1657 = vrot.lane.b32.xlu0 %v1631, 109
        %v1658 = vpop.permute.xlu0 %1657
        %v1659 = vsel %vm522, %v1656, %v1658
        %1662 = vrot.lane.b32.xlu0 %v1630, 108
        %v1663 = vpop.permute.xlu0 %1662
        %1664 = vrot.lane.b32.xlu0 %v1631, 108
        %v1665 = vpop.permute.xlu0 %1664
        %v1666 = vsel %vm530, %v1663, %v1665
        %1669 = vrot.lane.b32.xlu0 %v1630, 92
        %v1670 = vpop.permute.xlu0 %1669
        %1671 = vrot.lane.b32.xlu0 %v1631, 92
        %v1672 = vpop.permute.xlu0 %1671
        %v1673 = vsel %vm538, %v1670, %v1672
        %1676 = vrot.lane.b32.xlu0 %v1630, 91
        %v1677 = vpop.permute.xlu0 %1676
        %1678 = vrot.lane.b32.xlu0 %v1631, 91
        %v1679 = vpop.permute.xlu0 %1678
        %v1680 = vsel %vm546, %v1677, %v1679
        %1683 = vrot.lane.b32.xlu0 %v1630, 90
        %v1684 = vpop.permute.xlu0 %1683
        %1685 = vrot.lane.b32.xlu0 %v1631, 90
        %v1686 = vpop.permute.xlu0 %1685
        %v1687 = vsel %vm554, %v1684, %v1686
        %v1690 = vld [vmem:[%s6] sm:$0xff]
        %v1691 = vld [vmem:[%s7] sm:$0xff]
        %1693 = vset.pattern.permute.xlu0 0
        %1694 = vperm.xlu0 %1693, %v1691
        %v1695 = vpop.permute.xlu0 %1694
        %v1698 = vsel %vm565, %v1690, 0
        %1700 = vmatprep.subr.mxu0 %v1631
        %1701 = vmatpush1.msra.mxu0 %v1630
        %1702 = vmatprep.subr.mxu0 %v1637
        %1703 = vmatpush1.msra.mxu0 %v1638
        %1704 = vmatprep.subr.mxu0 %v1644
        %1705 = vmatpush1.msra.mxu0 %v1645
        %1706 = vmatprep.subr.mxu0 %v1651
        %1707 = vmatpush1.msra.mxu0 %v1652
        %1708 = vmatprep.subr.mxu0 %v1658
        %1709 = vmatpush1.msra.mxu0 %v1659
        %1710 = vmatprep.subr.mxu0 %v1665
        %1711 = vmatpush1.msra.mxu0 %v1666
        %1712 = vmatprep.subr.mxu0 %v1672
        %1713 = vmatpush1.msra.mxu0 %v1673
        %1714 = vmatprep.subr.mxu0 %v1679
        %1715 = vmatpush1.msra.mxu0 %v1680
        %1716 = vmatprep.subr.mxu0 %v1686
        %1717 = vmatpush1.msra.mxu0 %v1687
        %1718 = vmatprep.subr.mxu0 0.0
        %1719 = vmatpush1.msra.mxu0 0.0
        %1720 = vmatprep.subr.mxu0 0.0
        %1721 = vmatpush1.msra.mxu0 0.0
        %1722 = vmatprep.subr.mxu0 0.0
        %1723 = vmatpush1.msra.mxu0 0.0
        %1724 = vmatprep.subr.mxu0 0.0
        %1725 = vmatpush1.msra.mxu0 0.0
        %1726 = vmatprep.subr.mxu0 0.0
        %1727 = vmatpush1.msra.mxu0 0.0
        %1728 = vmatprep.subr.mxu0 0.0
        %1729 = vmatpush1.msra.mxu0 0.0
        %1730 = vmatprep.subr.mxu0 0.0
        %1731 = vmatpush1.msra.mxu0 0.0
        %1732 = vmatprep.subr.mxu0 0.0
        %1733 = vmatpush1.msra.mxu0 0.0
        %1734 = vmatprep.subr.mxu0 0.0
        %1735 = vmatpush1.msra.mxu0 0.0
        %1736 = vmatprep.subr.mxu0 0.0
        %1737 = vmatpush1.msra.mxu0 0.0
        %1738 = vmatprep.subr.mxu0 0.0
        %1739 = vmatpush1.msra.mxu0 0.0
        %1740 = vmatprep.subr.mxu0 0.0
        %1741 = vmatpush1.msra.mxu0 0.0
        %1742 = vmatprep.subr.mxu0 0.0
        %1743 = vmatpush1.msra.mxu0 0.0
        %1744 = vmatprep.subr.mxu0 0.0
        %1745 = vmatpush1.msra.mxu0 0.0
        %1746 = vmatprep.subr.mxu0 0.0
        %1747 = vmatpush1.msra.mxu0 0.0
        %1748 = vmatprep.subr.mxu0 0.0
        %1749 = vmatpush1.msra.mxu0 0.0
        %1750 = vmatprep.subr.mxu0 0.0
        %1751 = vmatpush1.msra.mxu0 0.0
        %1752 = vmatprep.subr.mxu0 0.0
        %1753 = vmatpush1.msra.mxu0 0.0
        %1754 = vmatprep.subr.mxu0 0.0
        %1755 = vmatpush1.msra.mxu0 0.0
        %1756 = vmatprep.subr.mxu0 0.0
        %1757 = vmatpush1.msra.mxu0 0.0
        %1758 = vmatprep.subr.mxu0 0.0
        %1759 = vmatpush1.msra.mxu0 0.0
        %1760 = vmatprep.subr.mxu0 0.0
        %1761 = vmatpush1.msra.mxu0 0.0
        %1762 = vmatprep.subr.mxu0 0.0
        %1763 = vmatpush1.msra.mxu0 0.0
        %1764 = vmatprep.mubr.f32.mxu0 0.0
        %1765 = vmatmul.mubr.f32.gmra.mrb[0].mxu0 %v1698
        %v1766 = vpop.f32.mrb[0].mxu0
        %v1767 = vadd.f32 %v1695, %v1766
        %v1768 = vpop.f32.mrb[0].mxu0
        %v1769 = vadd.f32 %v1695, %v1768
        %1770 = vdwg.mxu0
        %v1771 = vmax.f32 %v1767, 0.0
        %v1772 = vmax.f32 %v1769, 0.0
        %v1773 = vmul.f32 %v1771, %v646
        %v1774 = vmul.f32 %v1772, %v650
        %1777 = vrot.lane.b32.xlu0 %v1773, 19
        %v1778 = vpop.permute.xlu0 %1777
        %1779 = vrot.lane.b32.xlu0 %v1774, 19
        %v1780 = vpop.permute.xlu0 %1779
        %v1781 = vsel %vm661, %v1778, %v1780
        %1784 = vst.msk [vmem:[#allocation2] sm:$0xff] %vm665, %v1778
        %1785 = vst.msk [vmem:[#allocation2 + $0x8] sm:$0xff] %vm667, %v1781
        %v1786 = vld [vmem:[#allocation2] sm:$0xff]
        %v1787 = vld [vmem:[#allocation2 + $0x8] sm:$0xff]
        %1790 = vrot.lane.b32.xlu0 %v1786, 127
        %v1791 = vpop.permute.xlu0 %1790
        %1792 = vrot.lane.b32.xlu0 %v1787, 127
        %v1793 = vpop.permute.xlu0 %1792
        %v1794 = vsel %vm498, %v1791, %v1793
        %1797 = vrot.lane.b32.xlu0 %v1786, 126
        %v1798 = vpop.permute.xlu0 %1797
        %1799 = vrot.lane.b32.xlu0 %v1787, 126
        %v1800 = vpop.permute.xlu0 %1799
        %v1801 = vsel %vm506, %v1798, %v1800
        %1804 = vrot.lane.b32.xlu0 %v1786, 110
        %v1805 = vpop.permute.xlu0 %1804
        %1806 = vrot.lane.b32.xlu0 %v1787, 110
        %v1807 = vpop.permute.xlu0 %1806
        %v1808 = vsel %vm514, %v1805, %v1807
        %1811 = vrot.lane.b32.xlu0 %v1786, 109
        %v1812 = vpop.permute.xlu0 %1811
        %1813 = vrot.lane.b32.xlu0 %v1787, 109
        %v1814 = vpop.permute.xlu0 %1813
        %v1815 = vsel %vm522, %v1812, %v1814
        %1818 = vrot.lane.b32.xlu0 %v1786, 108
        %v1819 = vpop.permute.xlu0 %1818
        %1820 = vrot.lane.b32.xlu0 %v1787, 108
        %v1821 = vpop.permute.xlu0 %1820
        %v1822 = vsel %vm530, %v1819, %v1821
        %1825 = vrot.lane.b32.xlu0 %v1786, 92
        %v1826 = vpop.permute.xlu0 %1825
        %1827 = vrot.lane.b32.xlu0 %v1787, 92
        %v1828 = vpop.permute.xlu0 %1827
        %v1829 = vsel %vm538, %v1826, %v1828
        %1832 = vrot.lane.b32.xlu0 %v1786, 91
        %v1833 = vpop.permute.xlu0 %1832
        %1834 = vrot.lane.b32.xlu0 %v1787, 91
        %v1835 = vpop.permute.xlu0 %1834
        %v1836 = vsel %vm546, %v1833, %v1835
        %1839 = vrot.lane.b32.xlu0 %v1786, 90
        %v1840 = vpop.permute.xlu0 %1839
        %1841 = vrot.lane.b32.xlu0 %v1787, 90
        %v1842 = vpop.permute.xlu0 %1841
        %v1843 = vsel %vm554, %v1840, %v1842
        %v1846 = vld [vmem:[%s8] sm:$0xff]
        %v1847 = vld [vmem:[%s9] sm:$0xff]
        %1849 = vset.pattern.permute.xlu0 0
        %1850 = vperm.xlu0 %1849, %v1847
        %v1851 = vpop.permute.xlu0 %1850
        %v1854 = vsel %vm565, %v1846, 0
        %1856 = vmatprep.subr.mxu0 %v1787
        %1857 = vmatpush1.msra.mxu0 %v1786
        %1858 = vmatprep.subr.mxu0 %v1793
        %1859 = vmatpush1.msra.mxu0 %v1794
        %1860 = vmatprep.subr.mxu0 %v1800
        %1861 = vmatpush1.msra.mxu0 %v1801
        %1862 = vmatprep.subr.mxu0 %v1807
        %1863 = vmatpush1.msra.mxu0 %v1808
        %1864 = vmatprep.subr.mxu0 %v1814
        %1865 = vmatpush1.msra.mxu0 %v1815
        %1866 = vmatprep.subr.mxu0 %v1821
        %1867 = vmatpush1.msra.mxu0 %v1822
        %1868 = vmatprep.subr.mxu0 %v1828
        %1869 = vmatpush1.msra.mxu0 %v1829
        %1870 = vmatprep.subr.mxu0 %v1835
        %1871 = vmatpush1.msra.mxu0 %v1836
        %1872 = vmatprep.subr.mxu0 %v1842
        %1873 = vmatpush1.msra.mxu0 %v1843
        %1874 = vmatprep.subr.mxu0 0.0
        %1875 = vmatpush1.msra.mxu0 0.0
        %1876 = vmatprep.subr.mxu0 0.0
        %1877 = vmatpush1.msra.mxu0 0.0
        %1878 = vmatprep.subr.mxu0 0.0
        %1879 = vmatpush1.msra.mxu0 0.0
        %1880 = vmatprep.subr.mxu0 0.0
        %1881 = vmatpush1.msra.mxu0 0.0
        %1882 = vmatprep.subr.mxu0 0.0
        %1883 = vmatpush1.msra.mxu0 0.0
        %1884 = vmatprep.subr.mxu0 0.0
        %1885 = vmatpush1.msra.mxu0 0.0
        %1886 = vmatprep.subr.mxu0 0.0
        %1887 = vmatpush1.msra.mxu0 0.0
        %1888 = vmatprep.subr.mxu0 0.0
        %1889 = vmatpush1.msra.mxu0 0.0
        %1890 = vmatprep.subr.mxu0 0.0
        %1891 = vmatpush1.msra.mxu0 0.0
        %1892 = vmatprep.subr.mxu0 0.0
        %1893 = vmatpush1.msra.mxu0 0.0
        %1894 = vmatprep.subr.mxu0 0.0
        %1895 = vmatpush1.msra.mxu0 0.0
        %1896 = vmatprep.subr.mxu0 0.0
        %1897 = vmatpush1.msra.mxu0 0.0
        %1898 = vmatprep.subr.mxu0 0.0
        %1899 = vmatpush1.msra.mxu0 0.0
        %1900 = vmatprep.subr.mxu0 0.0
        %1901 = vmatpush1.msra.mxu0 0.0
        %1902 = vmatprep.subr.mxu0 0.0
        %1903 = vmatpush1.msra.mxu0 0.0
        %1904 = vmatprep.subr.mxu0 0.0
        %1905 = vmatpush1.msra.mxu0 0.0
        %1906 = vmatprep.subr.mxu0 0.0
        %1907 = vmatpush1.msra.mxu0 0.0
        %1908 = vmatprep.subr.mxu0 0.0
        %1909 = vmatpush1.msra.mxu0 0.0
        %1910 = vmatprep.subr.mxu0 0.0
        %1911 = vmatpush1.msra.mxu0 0.0
        %1912 = vmatprep.subr.mxu0 0.0
        %1913 = vmatpush1.msra.mxu0 0.0
        %1914 = vmatprep.subr.mxu0 0.0
        %1915 = vmatpush1.msra.mxu0 0.0
        %1916 = vmatprep.subr.mxu0 0.0
        %1917 = vmatpush1.msra.mxu0 0.0
        %1918 = vmatprep.subr.mxu0 0.0
        %1919 = vmatpush1.msra.mxu0 0.0
        %1920 = vmatprep.mubr.f32.mxu0 0.0
        %1921 = vmatmul.mubr.f32.gmra.mrb[0].mxu0 %v1854
        %v1922 = vpop.f32.mrb[0].mxu0
        %v1923 = vadd.f32 %v1851, %v1922
        %v1924 = vpop.f32.mrb[0].mxu0
        %v1925 = vadd.f32 %v1851, %v1924
        %1926 = vdwg.mxu0
        %v1927 = vmax.f32 %v1923, 0.0
        %v1928 = vmax.f32 %v1925, 0.0
        %v1929 = vmul.f32 %v1927, %v646
        %v1930 = vmul.f32 %v1928, %v650
        %1933 = vrot.lane.b32.xlu0 %v1929, 19
        %v1934 = vpop.permute.xlu0 %1933
        %1935 = vrot.lane.b32.xlu0 %v1930, 19
        %v1936 = vpop.permute.xlu0 %1935
        %v1937 = vsel %vm661, %v1934, %v1936
        %1940 = vst.msk [vmem:[#allocation2] sm:$0xff] %vm665, %v1934
        %1941 = vst.msk [vmem:[#allocation2 + $0x8] sm:$0xff] %vm667, %v1937
        %v1942 = vld [vmem:[#allocation2] sm:$0xff]
        %v1943 = vld [vmem:[#allocation2 + $0x8] sm:$0xff]
        %v1944 = vld [vmem:[%s10] sm:$0xff]
        %v1945 = vld [vmem:[%s10 + $0x8] sm:$0xff]
        %v1946 = vld [vmem:[%s10 + $0x10] sm:$0xff]
        %v1947 = vld [vmem:[%s10 + $0x18] sm:$0xff]
        %v1948 = vld [vmem:[%s11] sm:$0xff]
        %v1949 = vld [vmem:[%s11 + $0x8] sm:$0xff]
        %v1950 = vld [vmem:[%s11 + $0x10] sm:$0xff]
        %v1951 = vld [vmem:[%s11 + $0x18] sm:$0xff]
        %1953 = vset.pattern.permute.xlu0 0
        %1954 = vperm.xlu0 %1953, %v1948
        %v1955 = vpop.permute.xlu0 %1954
        %1958 = vset.pattern.permute.xlu0 0
        %1959 = vperm.xlu0 %1958, %v1949
        %v1960 = vpop.permute.xlu0 %1959
        %1963 = vset.pattern.permute.xlu0 0
        %1964 = vperm.xlu0 %1963, %v1950
        %v1965 = vpop.permute.xlu0 %1964
        %1968 = vset.pattern.permute.xlu0 0
        %1969 = vperm.xlu0 %1968, %v1951
        %v1970 = vpop.permute.xlu0 %1969
        %v1973 = vsel %vm1167, %v1944, 0
        %v1976 = vsel %vm1167, %v1945, 0
        %v1979 = vsel %vm1167, %v1946, 0
        %v1982 = vsel %vm1167, %v1947, 0
        %1984 = vmatprep.subr.mxu0 %v1943
        %1985 = vmatpush1.msra.mxu0 %v1942
        %1986 = vmatprep.subr.mxu0 %v1316
        %1987 = vmatpush1.msra.mxu0 %v1315
        %1988 = vmatprep.subr.mxu0 0.0
        %1989 = vmatpush1.msra.mxu0 0.0
        %1990 = vmatprep.subr.mxu0 0.0
        %1991 = vmatpush1.msra.mxu0 0.0
        %1992 = vmatprep.subr.mxu0 0.0
        %1993 = vmatpush1.msra.mxu0 0.0
        %1994 = vmatprep.subr.mxu0 0.0
        %1995 = vmatpush1.msra.mxu0 0.0
        %1996 = vmatprep.subr.mxu0 0.0
        %1997 = vmatpush1.msra.mxu0 0.0
        %1998 = vmatprep.subr.mxu0 0.0
        %1999 = vmatpush1.msra.mxu0 0.0
        %2000 = vmatprep.subr.mxu0 0.0
        %2001 = vmatpush1.msra.mxu0 0.0
        %2002 = vmatprep.subr.mxu0 0.0
        %2003 = vmatpush1.msra.mxu0 0.0
        %2004 = vmatprep.subr.mxu0 0.0
        %2005 = vmatpush1.msra.mxu0 0.0
        %2006 = vmatprep.subr.mxu0 0.0
        %2007 = vmatpush1.msra.mxu0 0.0
        %2008 = vmatprep.subr.mxu0 0.0
        %2009 = vmatpush1.msra.mxu0 0.0
        %2010 = vmatprep.subr.mxu0 0.0
        %2011 = vmatpush1.msra.mxu0 0.0
        %2012 = vmatprep.subr.mxu0 0.0
        %2013 = vmatpush1.msra.mxu0 0.0
        %2014 = vmatprep.subr.mxu0 0.0
        %2015 = vmatpush1.msra.mxu0 0.0
        %2016 = vmatprep.subr.mxu0 0.0
        %2017 = vmatpush1.msra.mxu0 0.0
        %2018 = vmatprep.subr.mxu0 0.0
        %2019 = vmatpush1.msra.mxu0 0.0
        %2020 = vmatprep.subr.mxu0 0.0
        %2021 = vmatpush1.msra.mxu0 0.0
        %2022 = vmatprep.subr.mxu0 0.0
        %2023 = vmatpush1.msra.mxu0 0.0
        %2024 = vmatprep.subr.mxu0 0.0
        %2025 = vmatpush1.msra.mxu0 0.0
        %2026 = vmatprep.subr.mxu0 0.0
        %2027 = vmatpush1.msra.mxu0 0.0
        %2028 = vmatprep.subr.mxu0 0.0
        %2029 = vmatpush1.msra.mxu0 0.0
        %2030 = vmatprep.subr.mxu0 0.0
        %2031 = vmatpush1.msra.mxu0 0.0
        %2032 = vmatprep.subr.mxu0 0.0
        %2033 = vmatpush1.msra.mxu0 0.0
        %2034 = vmatprep.subr.mxu0 0.0
        %2035 = vmatpush1.msra.mxu0 0.0
        %2036 = vmatprep.subr.mxu0 0.0
        %2037 = vmatpush1.msra.mxu0 0.0
        %2038 = vmatprep.subr.mxu0 0.0
        %2039 = vmatpush1.msra.mxu0 0.0
        %2040 = vmatprep.subr.mxu0 0.0
        %2041 = vmatpush1.msra.mxu0 0.0
        %2042 = vmatprep.subr.mxu0 0.0
        %2043 = vmatpush1.msra.mxu0 0.0
        %2044 = vmatprep.subr.mxu0 0.0
        %2045 = vmatpush1.msra.mxu0 0.0
        %2046 = vmatprep.subr.mxu0 0.0
        %2047 = vmatpush1.msra.mxu0 0.0
        %2048 = vmatprep.mubr.f32.mxu0 0.0
        %2049 = vmatmul.mubr.f32.gmra.mrb[0].mxu0 %v1973
        %v2050 = vpop.f32.mrb[0].mxu0
        %v2051 = vadd.f32 %v1955, %v2050
        %v2052 = vpop.f32.mrb[0].mxu0
        %v2053 = vadd.f32 %v1955, %v2052
        %2054 = vmatprep.mubr.f32.mxu0 0.0
        %2055 = vmatmul.mubr.f32.gmra.mrb[0].mxu0 %v1976
        %v2056 = vpop.f32.mrb[0].mxu0
        %v2057 = vadd.f32 %v1960, %v2056
        %v2058 = vpop.f32.mrb[0].mxu0
        %v2059 = vadd.f32 %v1960, %v2058
        %2060 = vmatprep.mubr.f32.mxu0 0.0
        %2061 = vmatmul.mubr.f32.gmra.mrb[0].mxu0 %v1979
        %v2062 = vpop.f32.mrb[0].mxu0
        %v2063 = vadd.f32 %v1965, %v2062
        %v2064 = vpop.f32.mrb[0].mxu0
        %v2065 = vadd.f32 %v1965, %v2064
        %2066 = vmatprep.mubr.f32.mxu0 0.0
        %2067 = vmatmul.mubr.f32.gmra.mrb[0].mxu0 %v1982
        %v2068 = vpop.f32.mrb[0].mxu0
        %v2069 = vadd.f32 %v1970, %v2068
        %v2070 = vpop.f32.mrb[0].mxu0
        %v2071 = vadd.f32 %v1970, %v2070
        %2072 = vdwg.mxu0
        %v2073 = vxor.u32 %v2051, 2147483648
        %v2074 = vxor.u32 %v2053, 2147483648
        %v2075 = vmul.f32 %v2073, 1.442695
        %v2076 = vpow.pop %v2075
        %v2077 = vmul.f32 %v2074, 1.442695
        %v2078 = vpow.pop %v2077
        %v2079 = vadd.f32 %v2076, 1.0
        %v2080 = vadd.f32 %v2078, 1.0
        %v2081 = vrcp.pop %v2079
        %v2082 = vmul.f32 1.0, %v2081
        %v2083 = vrcp.pop %v2080
        %v2084 = vmul.f32 1.0, %v2083
        %v2085 = vxor.u32 %v2057, 2147483648
        %v2086 = vxor.u32 %v2059, 2147483648
        %v2087 = vmul.f32 %v2085, 1.442695
        %v2088 = vpow.pop %v2087
        %v2089 = vmul.f32 %v2086, 1.442695
        %v2090 = vpow.pop %v2089
        %v2091 = vadd.f32 %v2088, 1.0
        %v2092 = vadd.f32 %v2090, 1.0
        %v2093 = vrcp.pop %v2091
        %v2094 = vmul.f32 1.0, %v2093
        %v2095 = vrcp.pop %v2092
        %v2096 = vmul.f32 1.0, %v2095
        %v2097 = vtanh.pop %v2063
        %v2098 = vtanh.pop %v2065
        %v2099 = vxor.u32 %v2069, 2147483648
        %v2100 = vxor.u32 %v2071, 2147483648
        %v2101 = vmul.f32 %v2099, 1.442695
        %v2102 = vpow.pop %v2101
        %v2103 = vmul.f32 %v2100, 1.442695
        %v2104 = vpow.pop %v2103
        %v2105 = vadd.f32 %v2102, 1.0
        %v2106 = vadd.f32 %v2104, 1.0
        %v2107 = vrcp.pop %v2105
        %v2108 = vmul.f32 1.0, %v2107
        %v2109 = vrcp.pop %v2106
        %v2110 = vmul.f32 1.0, %v2109
        %v2111 = vmul.f32 %v2094, %v1311
        %v2112 = vmul.f32 %v2096, %v1312
        %v2113 = vmul.f32 %v2082, %v2097
        %v2114 = vmul.f32 %v2084, %v2098
        %v2115 = vadd.f32 %v2111, %v2113
        %v2116 = vadd.f32 %v2112, %v2114
        %v2117 = vtanh.pop %v2115
        %v2118 = vtanh.pop %v2116
        %v2119 = vmul.f32 %v2108, %v2117
        %v2120 = vmul.f32 %v2110, %v2118
        %s2121 = scalar_lea.vmem %s441, 32 [#allocation3]
        %v2122 = vld [vmem:[%s2121] sm:$0xff]
        %v2123 = vld [vmem:[%s2121 + $0x8] sm:$0xff]
        %2126 = vrot.lane.b32.xlu0 %v2122, 127
        %v2127 = vpop.permute.xlu0 %2126
        %2128 = vrot.lane.b32.xlu0 %v2123, 127
        %v2129 = vpop.permute.xlu0 %2128
        %v2130 = vsel %vm498, %v2127, %v2129
        %2133 = vrot.lane.b32.xlu0 %v2122, 126
        %v2134 = vpop.permute.xlu0 %2133
        %2135 = vrot.lane.b32.xlu0 %v2123, 126
        %v2136 = vpop.permute.xlu0 %2135
        %v2137 = vsel %vm506, %v2134, %v2136
        %2140 = vrot.lane.b32.xlu0 %v2122, 110
        %v2141 = vpop.permute.xlu0 %2140
        %2142 = vrot.lane.b32.xlu0 %v2123, 110
        %v2143 = vpop.permute.xlu0 %2142
        %v2144 = vsel %vm514, %v2141, %v2143
        %2147 = vrot.lane.b32.xlu0 %v2122, 109
        %v2148 = vpop.permute.xlu0 %2147
        %2149 = vrot.lane.b32.xlu0 %v2123, 109
        %v2150 = vpop.permute.xlu0 %2149
        %v2151 = vsel %vm522, %v2148, %v2150
        %2154 = vrot.lane.b32.xlu0 %v2122, 108
        %v2155 = vpop.permute.xlu0 %2154
        %2156 = vrot.lane.b32.xlu0 %v2123, 108
        %v2157 = vpop.permute.xlu0 %2156
        %v2158 = vsel %vm530, %v2155, %v2157
        %2161 = vrot.lane.b32.xlu0 %v2122, 92
        %v2162 = vpop.permute.xlu0 %2161
        %2163 = vrot.lane.b32.xlu0 %v2123, 92
        %v2164 = vpop.permute.xlu0 %2163
        %v2165 = vsel %vm538, %v2162, %v2164
        %2168 = vrot.lane.b32.xlu0 %v2122, 91
        %v2169 = vpop.permute.xlu0 %2168
        %2170 = vrot.lane.b32.xlu0 %v2123, 91
        %v2171 = vpop.permute.xlu0 %2170
        %v2172 = vsel %vm546, %v2169, %v2171
        %2175 = vrot.lane.b32.xlu0 %v2122, 90
        %v2176 = vpop.permute.xlu0 %2175
        %2177 = vrot.lane.b32.xlu0 %v2123, 90
        %v2178 = vpop.permute.xlu0 %2177
        %v2179 = vsel %vm554, %v2176, %v2178
        %v2182 = vld [vmem:[%s2] sm:$0xff]
        %v2183 = vld [vmem:[%s3] sm:$0xff]
        %2185 = vset.pattern.permute.xlu0 0
        %2186 = vperm.xlu0 %2185, %v2183
        %v2187 = vpop.permute.xlu0 %2186
        %v2190 = vsel %vm565, %v2182, 0
        %2192 = vmatprep.subr.mxu0 %v2123
        %2193 = vmatpush1.msra.mxu0 %v2122
        %2194 = vmatprep.subr.mxu0 %v2129
        %2195 = vmatpush1.msra.mxu0 %v2130
        %2196 = vmatprep.subr.mxu0 %v2136
        %2197 = vmatpush1.msra.mxu0 %v2137
        %2198 = vmatprep.subr.mxu0 %v2143
        %2199 = vmatpush1.msra.mxu0 %v2144
        %2200 = vmatprep.subr.mxu0 %v2150
        %2201 = vmatpush1.msra.mxu0 %v2151
        %2202 = vmatprep.subr.mxu0 %v2157
        %2203 = vmatpush1.msra.mxu0 %v2158
        %2204 = vmatprep.subr.mxu0 %v2164
        %2205 = vmatpush1.msra.mxu0 %v2165
        %2206 = vmatprep.subr.mxu0 %v2171
        %2207 = vmatpush1.msra.mxu0 %v2172
        %2208 = vmatprep.subr.mxu0 %v2178
        %2209 = vmatpush1.msra.mxu0 %v2179
        %2210 = vmatprep.subr.mxu0 0.0
        %2211 = vmatpush1.msra.mxu0 0.0
        %2212 = vmatprep.subr.mxu0 0.0
        %2213 = vmatpush1.msra.mxu0 0.0
        %2214 = vmatprep.subr.mxu0 0.0
        %2215 = vmatpush1.msra.mxu0 0.0
        %2216 = vmatprep.subr.mxu0 0.0
        %2217 = vmatpush1.msra.mxu0 0.0
        %2218 = vmatprep.subr.mxu0 0.0
        %2219 = vmatpush1.msra.mxu0 0.0
        %2220 = vmatprep.subr.mxu0 0.0
        %2221 = vmatpush1.msra.mxu0 0.0
        %2222 = vmatprep.subr.mxu0 0.0
        %2223 = vmatpush1.msra.mxu0 0.0
        %2224 = vmatprep.subr.mxu0 0.0
        %2225 = vmatpush1.msra.mxu0 0.0
        %2226 = vmatprep.subr.mxu0 0.0
        %2227 = vmatpush1.msra.mxu0 0.0
        %2228 = vmatprep.subr.mxu0 0.0
        %2229 = vmatpush1.msra.mxu0 0.0
        %2230 = vmatprep.subr.mxu0 0.0
        %2231 = vmatpush1.msra.mxu0 0.0
        %2232 = vmatprep.subr.mxu0 0.0
        %2233 = vmatpush1.msra.mxu0 0.0
        %2234 = vmatprep.subr.mxu0 0.0
        %2235 = vmatpush1.msra.mxu0 0.0
        %2236 = vmatprep.subr.mxu0 0.0
        %2237 = vmatpush1.msra.mxu0 0.0
        %2238 = vmatprep.subr.mxu0 0.0
        %2239 = vmatpush1.msra.mxu0 0.0
        %2240 = vmatprep.subr.mxu0 0.0
        %2241 = vmatpush1.msra.mxu0 0.0
        %2242 = vmatprep.subr.mxu0 0.0
        %2243 = vmatpush1.msra.mxu0 0.0
        %2244 = vmatprep.subr.mxu0 0.0
        %2245 = vmatpush1.msra.mxu0 0.0
        %2246 = vmatprep.subr.mxu0 0.0
        %2247 = vmatpush1.msra.mxu0 0.0
        %2248 = vmatprep.subr.mxu0 0.0
        %2249 = vmatpush1.msra.mxu0 0.0
        %2250 = vmatprep.subr.mxu0 0.0
        %2251 = vmatpush1.msra.mxu0 0.0
        %2252 = vmatprep.subr.mxu0 0.0
        %2253 = vmatpush1.msra.mxu0 0.0
        %2254 = vmatprep.subr.mxu0 0.0
        %2255 = vmatpush1.msra.mxu0 0.0
        %2256 = vmatprep.mubr.f32.mxu0 0.0
        %2257 = vmatmul.mubr.f32.gmra.mrb[0].mxu0 %v2190
        %v2258 = vpop.f32.mrb[0].mxu0
        %v2259 = vadd.f32 %v2187, %v2258
        %v2260 = vpop.f32.mrb[0].mxu0
        %v2261 = vadd.f32 %v2187, %v2260
        %2262 = vdwg.mxu0
        %v2263 = vmax.f32 %v2259, 0.0
        %v2264 = vmax.f32 %v2261, 0.0
        %v2265 = vmul.f32 %v2263, %v646
        %v2266 = vmul.f32 %v2264, %v650
        %2269 = vrot.lane.b32.xlu0 %v2265, 19
        %v2270 = vpop.permute.xlu0 %2269
        %2271 = vrot.lane.b32.xlu0 %v2266, 19
        %v2272 = vpop.permute.xlu0 %2271
        %v2273 = vsel %vm661, %v2270, %v2272
        %2276 = vst.msk [vmem:[#allocation2] sm:$0xff] %vm665, %v2270
        %2277 = vst.msk [vmem:[#allocation2 + $0x8] sm:$0xff] %vm667, %v2273
        %v2278 = vld [vmem:[#allocation2] sm:$0xff]
        %v2279 = vld [vmem:[#allocation2 + $0x8] sm:$0xff]
        %2282 = vrot.lane.b32.xlu0 %v2278, 127
        %v2283 = vpop.permute.xlu0 %2282
        %2284 = vrot.lane.b32.xlu0 %v2279, 127
        %v2285 = vpop.permute.xlu0 %2284
        %v2286 = vsel %vm498, %v2283, %v2285
        %2289 = vrot.lane.b32.xlu0 %v2278, 126
        %v2290 = vpop.permute.xlu0 %2289
        %2291 = vrot.lane.b32.xlu0 %v2279, 126
        %v2292 = vpop.permute.xlu0 %2291
        %v2293 = vsel %vm506, %v2290, %v2292
        %2296 = vrot.lane.b32.xlu0 %v2278, 110
        %v2297 = vpop.permute.xlu0 %2296
        %2298 = vrot.lane.b32.xlu0 %v2279, 110
        %v2299 = vpop.permute.xlu0 %2298
        %v2300 = vsel %vm514, %v2297, %v2299
        %2303 = vrot.lane.b32.xlu0 %v2278, 109
        %v2304 = vpop.permute.xlu0 %2303
        %2305 = vrot.lane.b32.xlu0 %v2279, 109
        %v2306 = vpop.permute.xlu0 %2305
        %v2307 = vsel %vm522, %v2304, %v2306
        %2310 = vrot.lane.b32.xlu0 %v2278, 108
        %v2311 = vpop.permute.xlu0 %2310
        %2312 = vrot.lane.b32.xlu0 %v2279, 108
        %v2313 = vpop.permute.xlu0 %2312
        %v2314 = vsel %vm530, %v2311, %v2313
        %2317 = vrot.lane.b32.xlu0 %v2278, 92
        %v2318 = vpop.permute.xlu0 %2317
        %2319 = vrot.lane.b32.xlu0 %v2279, 92
        %v2320 = vpop.permute.xlu0 %2319
        %v2321 = vsel %vm538, %v2318, %v2320
        %2324 = vrot.lane.b32.xlu0 %v2278, 91
        %v2325 = vpop.permute.xlu0 %2324
        %2326 = vrot.lane.b32.xlu0 %v2279, 91
        %v2327 = vpop.permute.xlu0 %2326
        %v2328 = vsel %vm546, %v2325, %v2327
        %2331 = vrot.lane.b32.xlu0 %v2278, 90
        %v2332 = vpop.permute.xlu0 %2331
        %2333 = vrot.lane.b32.xlu0 %v2279, 90
        %v2334 = vpop.permute.xlu0 %2333
        %v2335 = vsel %vm554, %v2332, %v2334
        %v2338 = vld [vmem:[%s4] sm:$0xff]
        %v2339 = vld [vmem:[%s5] sm:$0xff]
        %2341 = vset.pattern.permute.xlu0 0
        %2342 = vperm.xlu0 %2341, %v2339
        %v2343 = vpop.permute.xlu0 %2342
        %v2346 = vsel %vm565, %v2338, 0
        %2348 = vmatprep.subr.mxu0 %v2279
        %2349 = vmatpush1.msra.mxu0 %v2278
        %2350 = vmatprep.subr.mxu0 %v2285
        %2351 = vmatpush1.msra.mxu0 %v2286
        %2352 = vmatprep.subr.mxu0 %v2292
        %2353 = vmatpush1.msra.mxu0 %v2293
        %2354 = vmatprep.subr.mxu0 %v2299
        %2355 = vmatpush1.msra.mxu0 %v2300
        %2356 = vmatprep.subr.mxu0 %v2306
        %2357 = vmatpush1.msra.mxu0 %v2307
        %2358 = vmatprep.subr.mxu0 %v2313
        %2359 = vmatpush1.msra.mxu0 %v2314
        %2360 = vmatprep.subr.mxu0 %v2320
        %2361 = vmatpush1.msra.mxu0 %v2321
        %2362 = vmatprep.subr.mxu0 %v2327
        %2363 = vmatpush1.msra.mxu0 %v2328
        %2364 = vmatprep.subr.mxu0 %v2334
        %2365 = vmatpush1.msra.mxu0 %v2335
        %2366 = vmatprep.subr.mxu0 0.0
        %2367 = vmatpush1.msra.mxu0 0.0
        %2368 = vmatprep.subr.mxu0 0.0
        %2369 = vmatpush1.msra.mxu0 0.0
        %2370 = vmatprep.subr.mxu0 0.0
        %2371 = vmatpush1.msra.mxu0 0.0
        %2372 = vmatprep.subr.mxu0 0.0
        %2373 = vmatpush1.msra.mxu0 0.0
        %2374 = vmatprep.subr.mxu0 0.0
        %2375 = vmatpush1.msra.mxu0 0.0
        %2376 = vmatprep.subr.mxu0 0.0
        %2377 = vmatpush1.msra.mxu0 0.0
        %2378 = vmatprep.subr.mxu0 0.0
        %2379 = vmatpush1.msra.mxu0 0.0
        %2380 = vmatprep.subr.mxu0 0.0
        %2381 = vmatpush1.msra.mxu0 0.0
        %2382 = vmatprep.subr.mxu0 0.0
        %2383 = vmatpush1.msra.mxu0 0.0
        %2384 = vmatprep.subr.mxu0 0.0
        %2385 = vmatpush1.msra.mxu0 0.0
        %2386 = vmatprep.subr.mxu0 0.0
        %2387 = vmatpush1.msra.mxu0 0.0
        %2388 = vmatprep.subr.mxu0 0.0
        %2389 = vmatpush1.msra.mxu0 0.0
        %2390 = vmatprep.subr.mxu0 0.0
        %2391 = vmatpush1.msra.mxu0 0.0
        %2392 = vmatprep.subr.mxu0 0.0
        %2393 = vmatpush1.msra.mxu0 0.0
        %2394 = vmatprep.subr.mxu0 0.0
        %2395 = vmatpush1.msra.mxu0 0.0
        %2396 = vmatprep.subr.mxu0 0.0
        %2397 = vmatpush1.msra.mxu0 0.0
        %2398 = vmatprep.subr.mxu0 0.0
        %2399 = vmatpush1.msra.mxu0 0.0
        %2400 = vmatprep.subr.mxu0 0.0
        %2401 = vmatpush1.msra.mxu0 0.0
        %2402 = vmatprep.subr.mxu0 0.0
        %2403 = vmatpush1.msra.mxu0 0.0
        %2404 = vmatprep.subr.mxu0 0.0
        %2405 = vmatpush1.msra.mxu0 0.0
        %2406 = vmatprep.subr.mxu0 0.0
        %2407 = vmatpush1.msra.mxu0 0.0
        %2408 = vmatprep.subr.mxu0 0.0
        %2409 = vmatpush1.msra.mxu0 0.0
        %2410 = vmatprep.subr.mxu0 0.0
        %2411 = vmatpush1.msra.mxu0 0.0
        %2412 = vmatprep.mubr.f32.mxu0 0.0
        %2413 = vmatmul.mubr.f32.gmra.mrb[0].mxu0 %v2346
        %v2414 = vpop.f32.mrb[0].mxu0
        %v2415 = vadd.f32 %v2343, %v2414
        %v2416 = vpop.f32.mrb[0].mxu0
        %v2417 = vadd.f32 %v2343, %v2416
        %2418 = vdwg.mxu0
        %v2419 = vmax.f32 %v2415, 0.0
        %v2420 = vmax.f32 %v2417, 0.0
        %v2421 = vmul.f32 %v2419, %v646
        %v2422 = vmul.f32 %v2420, %v650
        %2425 = vrot.lane.b32.xlu0 %v2421, 19
        %v2426 = vpop.permute.xlu0 %2425
        %2427 = vrot.lane.b32.xlu0 %v2422, 19
        %v2428 = vpop.permute.xlu0 %2427
        %v2429 = vsel %vm661, %v2426, %v2428
        %2432 = vst.msk [vmem:[#allocation2] sm:$0xff] %vm665, %v2426
        %2433 = vst.msk [vmem:[#allocation2 + $0x8] sm:$0xff] %vm667, %v2429
        %v2434 = vld [vmem:[#allocation2] sm:$0xff]
        %v2435 = vld [vmem:[#allocation2 + $0x8] sm:$0xff]
        %2438 = vrot.lane.b32.xlu0 %v2434, 127
        %v2439 = vpop.permute.xlu0 %2438
        %2440 = vrot.lane.b32.xlu0 %v2435, 127
        %v2441 = vpop.permute.xlu0 %2440
        %v2442 = vsel %vm498, %v2439, %v2441
        %2445 = vrot.lane.b32.xlu0 %v2434, 126
        %v2446 = vpop.permute.xlu0 %2445
        %2447 = vrot.lane.b32.xlu0 %v2435, 126
        %v2448 = vpop.permute.xlu0 %2447
        %v2449 = vsel %vm506, %v2446, %v2448
        %2452 = vrot.lane.b32.xlu0 %v2434, 110
        %v2453 = vpop.permute.xlu0 %2452
        %2454 = vrot.lane.b32.xlu0 %v2435, 110
        %v2455 = vpop.permute.xlu0 %2454
        %v2456 = vsel %vm514, %v2453, %v2455
        %2459 = vrot.lane.b32.xlu0 %v2434, 109
        %v2460 = vpop.permute.xlu0 %2459
        %2461 = vrot.lane.b32.xlu0 %v2435, 109
        %v2462 = vpop.permute.xlu0 %2461
        %v2463 = vsel %vm522, %v2460, %v2462
        %2466 = vrot.lane.b32.xlu0 %v2434, 108
        %v2467 = vpop.permute.xlu0 %2466
        %2468 = vrot.lane.b32.xlu0 %v2435, 108
        %v2469 = vpop.permute.xlu0 %2468
        %v2470 = vsel %vm530, %v2467, %v2469
        %2473 = vrot.lane.b32.xlu0 %v2434, 92
        %v2474 = vpop.permute.xlu0 %2473
        %2475 = vrot.lane.b32.xlu0 %v2435, 92
        %v2476 = vpop.permute.xlu0 %2475
        %v2477 = vsel %vm538, %v2474, %v2476
        %2480 = vrot.lane.b32.xlu0 %v2434, 91
        %v2481 = vpop.permute.xlu0 %2480
        %2482 = vrot.lane.b32.xlu0 %v2435, 91
        %v2483 = vpop.permute.xlu0 %2482
        %v2484 = vsel %vm546, %v2481, %v2483
        %2487 = vrot.lane.b32.xlu0 %v2434, 90
        %v2488 = vpop.permute.xlu0 %2487
        %2489 = vrot.lane.b32.xlu0 %v2435, 90
        %v2490 = vpop.permute.xlu0 %2489
        %v2491 = vsel %vm554, %v2488, %v2490
        %v2494 = vld [vmem:[%s6] sm:$0xff]
        %v2495 = vld [vmem:[%s7] sm:$0xff]
        %2497 = vset.pattern.permute.xlu0 0
        %2498 = vperm.xlu0 %2497, %v2495
        %v2499 = vpop.permute.xlu0 %2498
        %v2502 = vsel %vm565, %v2494, 0
        %2504 = vmatprep.subr.mxu0 %v2435
        %2505 = vmatpush1.msra.mxu0 %v2434
        %2506 = vmatprep.subr.mxu0 %v2441
        %2507 = vmatpush1.msra.mxu0 %v2442
        %2508 = vmatprep.subr.mxu0 %v2448
        %2509 = vmatpush1.msra.mxu0 %v2449
        %2510 = vmatprep.subr.mxu0 %v2455
        %2511 = vmatpush1.msra.mxu0 %v2456
        %2512 = vmatprep.subr.mxu0 %v2462
        %2513 = vmatpush1.msra.mxu0 %v2463
        %2514 = vmatprep.subr.mxu0 %v2469
        %2515 = vmatpush1.msra.mxu0 %v2470
        %2516 = vmatprep.subr.mxu0 %v2476
        %2517 = vmatpush1.msra.mxu0 %v2477
        %2518 = vmatprep.subr.mxu0 %v2483
        %2519 = vmatpush1.msra.mxu0 %v2484
        %2520 = vmatprep.subr.mxu0 %v2490
        %2521 = vmatpush1.msra.mxu0 %v2491
        %2522 = vmatprep.subr.mxu0 0.0
        %2523 = vmatpush1.msra.mxu0 0.0
        %2524 = vmatprep.subr.mxu0 0.0
        %2525 = vmatpush1.msra.mxu0 0.0
        %2526 = vmatprep.subr.mxu0 0.0
        %2527 = vmatpush1.msra.mxu0 0.0
        %2528 = vmatprep.subr.mxu0 0.0
        %2529 = vmatpush1.msra.mxu0 0.0
        %2530 = vmatprep.subr.mxu0 0.0
        %2531 = vmatpush1.msra.mxu0 0.0
        %2532 = vmatprep.subr.mxu0 0.0
        %2533 = vmatpush1.msra.mxu0 0.0
        %2534 = vmatprep.subr.mxu0 0.0
        %2535 = vmatpush1.msra.mxu0 0.0
        %2536 = vmatprep.subr.mxu0 0.0
        %2537 = vmatpush1.msra.mxu0 0.0
        %2538 = vmatprep.subr.mxu0 0.0
        %2539 = vmatpush1.msra.mxu0 0.0
        %2540 = vmatprep.subr.mxu0 0.0
        %2541 = vmatpush1.msra.mxu0 0.0
        %2542 = vmatprep.subr.mxu0 0.0
        %2543 = vmatpush1.msra.mxu0 0.0
        %2544 = vmatprep.subr.mxu0 0.0
        %2545 = vmatpush1.msra.mxu0 0.0
        %2546 = vmatprep.subr.mxu0 0.0
        %2547 = vmatpush1.msra.mxu0 0.0
        %2548 = vmatprep.subr.mxu0 0.0
        %2549 = vmatpush1.msra.mxu0 0.0
        %2550 = vmatprep.subr.mxu0 0.0
        %2551 = vmatpush1.msra.mxu0 0.0
        %2552 = vmatprep.subr.mxu0 0.0
        %2553 = vmatpush1.msra.mxu0 0.0
        %2554 = vmatprep.subr.mxu0 0.0
        %2555 = vmatpush1.msra.mxu0 0.0
        %2556 = vmatprep.subr.mxu0 0.0
        %2557 = vmatpush1.msra.mxu0 0.0
        %2558 = vmatprep.subr.mxu0 0.0
        %2559 = vmatpush1.msra.mxu0 0.0
        %2560 = vmatprep.subr.mxu0 0.0
        %2561 = vmatpush1.msra.mxu0 0.0
        %2562 = vmatprep.subr.mxu0 0.0
        %2563 = vmatpush1.msra.mxu0 0.0
        %2564 = vmatprep.subr.mxu0 0.0
        %2565 = vmatpush1.msra.mxu0 0.0
        %2566 = vmatprep.subr.mxu0 0.0
        %2567 = vmatpush1.msra.mxu0 0.0
        %2568 = vmatprep.mubr.f32.mxu0 0.0
        %2569 = vmatmul.mubr.f32.gmra.mrb[0].mxu0 %v2502
        %v2570 = vpop.f32.mrb[0].mxu0
        %v2571 = vadd.f32 %v2499, %v2570
        %v2572 = vpop.f32.mrb[0].mxu0
        %v2573 = vadd.f32 %v2499, %v2572
        %2574 = vdwg.mxu0
        %v2575 = vmax.f32 %v2571, 0.0
        %v2576 = vmax.f32 %v2573, 0.0
        %v2577 = vmul.f32 %v2575, %v646
        %v2578 = vmul.f32 %v2576, %v650
        %2581 = vrot.lane.b32.xlu0 %v2577, 19
        %v2582 = vpop.permute.xlu0 %2581
        %2583 = vrot.lane.b32.xlu0 %v2578, 19
        %v2584 = vpop.permute.xlu0 %2583
        %v2585 = vsel %vm661, %v2582, %v2584
        %2588 = vst.msk [vmem:[#allocation2] sm:$0xff] %vm665, %v2582
        %2589 = vst.msk [vmem:[#allocation2 + $0x8] sm:$0xff] %vm667, %v2585
        %v2590 = vld [vmem:[#allocation2] sm:$0xff]
        %v2591 = vld [vmem:[#allocation2 + $0x8] sm:$0xff]
        %2594 = vrot.lane.b32.xlu0 %v2590, 127
        %v2595 = vpop.permute.xlu0 %2594
        %2596 = vrot.lane.b32.xlu0 %v2591, 127
        %v2597 = vpop.permute.xlu0 %2596
        %v2598 = vsel %vm498, %v2595, %v2597
        %2601 = vrot.lane.b32.xlu0 %v2590, 126
        %v2602 = vpop.permute.xlu0 %2601
        %2603 = vrot.lane.b32.xlu0 %v2591, 126
        %v2604 = vpop.permute.xlu0 %2603
        %v2605 = vsel %vm506, %v2602, %v2604
        %2608 = vrot.lane.b32.xlu0 %v2590, 110
        %v2609 = vpop.permute.xlu0 %2608
        %2610 = vrot.lane.b32.xlu0 %v2591, 110
        %v2611 = vpop.permute.xlu0 %2610
        %v2612 = vsel %vm514, %v2609, %v2611
        %2615 = vrot.lane.b32.xlu0 %v2590, 109
        %v2616 = vpop.permute.xlu0 %2615
        %2617 = vrot.lane.b32.xlu0 %v2591, 109
        %v2618 = vpop.permute.xlu0 %2617
        %v2619 = vsel %vm522, %v2616, %v2618
        %2622 = vrot.lane.b32.xlu0 %v2590, 108
        %v2623 = vpop.permute.xlu0 %2622
        %2624 = vrot.lane.b32.xlu0 %v2591, 108
        %v2625 = vpop.permute.xlu0 %2624
        %v2626 = vsel %vm530, %v2623, %v2625
        %2629 = vrot.lane.b32.xlu0 %v2590, 92
        %v2630 = vpop.permute.xlu0 %2629
        %2631 = vrot.lane.b32.xlu0 %v2591, 92
        %v2632 = vpop.permute.xlu0 %2631
        %v2633 = vsel %vm538, %v2630, %v2632
        %2636 = vrot.lane.b32.xlu0 %v2590, 91
        %v2637 = vpop.permute.xlu0 %2636
        %2638 = vrot.lane.b32.xlu0 %v2591, 91
        %v2639 = vpop.permute.xlu0 %2638
        %v2640 = vsel %vm546, %v2637, %v2639
        %2643 = vrot.lane.b32.xlu0 %v2590, 90
        %v2644 = vpop.permute.xlu0 %2643
        %2645 = vrot.lane.b32.xlu0 %v2591, 90
        %v2646 = vpop.permute.xlu0 %2645
        %v2647 = vsel %vm554, %v2644, %v2646
        %v2650 = vld [vmem:[%s8] sm:$0xff]
        %v2651 = vld [vmem:[%s9] sm:$0xff]
        %2653 = vset.pattern.permute.xlu0 0
        %2654 = vperm.xlu0 %2653, %v2651
        %v2655 = vpop.permute.xlu0 %2654
        %v2658 = vsel %vm565, %v2650, 0
        %2660 = vmatprep.subr.mxu0 %v2591
        %2661 = vmatpush1.msra.mxu0 %v2590
        %2662 = vmatprep.subr.mxu0 %v2597
        %2663 = vmatpush1.msra.mxu0 %v2598
        %2664 = vmatprep.subr.mxu0 %v2604
        %2665 = vmatpush1.msra.mxu0 %v2605
        %2666 = vmatprep.subr.mxu0 %v2611
        %2667 = vmatpush1.msra.mxu0 %v2612
        %2668 = vmatprep.subr.mxu0 %v2618
        %2669 = vmatpush1.msra.mxu0 %v2619
        %2670 = vmatprep.subr.mxu0 %v2625
        %2671 = vmatpush1.msra.mxu0 %v2626
        %2672 = vmatprep.subr.mxu0 %v2632
        %2673 = vmatpush1.msra.mxu0 %v2633
        %2674 = vmatprep.subr.mxu0 %v2639
        %2675 = vmatpush1.msra.mxu0 %v2640
        %2676 = vmatprep.subr.mxu0 %v2646
        %2677 = vmatpush1.msra.mxu0 %v2647
        %2678 = vmatprep.subr.mxu0 0.0
        %2679 = vmatpush1.msra.mxu0 0.0
        %2680 = vmatprep.subr.mxu0 0.0
        %2681 = vmatpush1.msra.mxu0 0.0
        %2682 = vmatprep.subr.mxu0 0.0
        %2683 = vmatpush1.msra.mxu0 0.0
        %2684 = vmatprep.subr.mxu0 0.0
        %2685 = vmatpush1.msra.mxu0 0.0
        %2686 = vmatprep.subr.mxu0 0.0
        %2687 = vmatpush1.msra.mxu0 0.0
        %2688 = vmatprep.subr.mxu0 0.0
        %2689 = vmatpush1.msra.mxu0 0.0
        %2690 = vmatprep.subr.mxu0 0.0
        %2691 = vmatpush1.msra.mxu0 0.0
        %2692 = vmatprep.subr.mxu0 0.0
        %2693 = vmatpush1.msra.mxu0 0.0
        %2694 = vmatprep.subr.mxu0 0.0
        %2695 = vmatpush1.msra.mxu0 0.0
        %2696 = vmatprep.subr.mxu0 0.0
        %2697 = vmatpush1.msra.mxu0 0.0
        %2698 = vmatprep.subr.mxu0 0.0
        %2699 = vmatpush1.msra.mxu0 0.0
        %2700 = vmatprep.subr.mxu0 0.0
        %2701 = vmatpush1.msra.mxu0 0.0
        %2702 = vmatprep.subr.mxu0 0.0
        %2703 = vmatpush1.msra.mxu0 0.0
        %2704 = vmatprep.subr.mxu0 0.0
        %2705 = vmatpush1.msra.mxu0 0.0
        %2706 = vmatprep.subr.mxu0 0.0
        %2707 = vmatpush1.msra.mxu0 0.0
        %2708 = vmatprep.subr.mxu0 0.0
        %2709 = vmatpush1.msra.mxu0 0.0
        %2710 = vmatprep.subr.mxu0 0.0
        %2711 = vmatpush1.msra.mxu0 0.0
        %2712 = vmatprep.subr.mxu0 0.0
        %2713 = vmatpush1.msra.mxu0 0.0
        %2714 = vmatprep.subr.mxu0 0.0
        %2715 = vmatpush1.msra.mxu0 0.0
        %2716 = vmatprep.subr.mxu0 0.0
        %2717 = vmatpush1.msra.mxu0 0.0
        %2718 = vmatprep.subr.mxu0 0.0
        %2719 = vmatpush1.msra.mxu0 0.0
        %2720 = vmatprep.subr.mxu0 0.0
        %2721 = vmatpush1.msra.mxu0 0.0
        %2722 = vmatprep.subr.mxu0 0.0
        %2723 = vmatpush1.msra.mxu0 0.0
        %2724 = vmatprep.mubr.f32.mxu0 0.0
        %2725 = vmatmul.mubr.f32.gmra.mrb[0].mxu0 %v2658
        %v2726 = vpop.f32.mrb[0].mxu0
        %v2727 = vadd.f32 %v2655, %v2726
        %v2728 = vpop.f32.mrb[0].mxu0
        %v2729 = vadd.f32 %v2655, %v2728
        %2730 = vdwg.mxu0
        %v2731 = vmax.f32 %v2727, 0.0
        %v2732 = vmax.f32 %v2729, 0.0
        %v2733 = vmul.f32 %v2731, %v646
        %v2734 = vmul.f32 %v2732, %v650
        %2737 = vrot.lane.b32.xlu0 %v2733, 19
        %v2738 = vpop.permute.xlu0 %2737
        %2739 = vrot.lane.b32.xlu0 %v2734, 19
        %v2740 = vpop.permute.xlu0 %2739
        %v2741 = vsel %vm661, %v2738, %v2740
        %2744 = vst.msk [vmem:[#allocation2] sm:$0xff] %vm665, %v2738
        %2745 = vst.msk [vmem:[#allocation2 + $0x8] sm:$0xff] %vm667, %v2741
        %v2746 = vld [vmem:[#allocation2] sm:$0xff]
        %v2747 = vld [vmem:[#allocation2 + $0x8] sm:$0xff]
        %v2748 = vld [vmem:[%s10] sm:$0xff]
        %v2749 = vld [vmem:[%s10 + $0x8] sm:$0xff]
        %v2750 = vld [vmem:[%s10 + $0x10] sm:$0xff]
        %v2751 = vld [vmem:[%s10 + $0x18] sm:$0xff]
        %v2752 = vld [vmem:[%s11] sm:$0xff]
        %v2753 = vld [vmem:[%s11 + $0x8] sm:$0xff]
        %v2754 = vld [vmem:[%s11 + $0x10] sm:$0xff]
        %v2755 = vld [vmem:[%s11 + $0x18] sm:$0xff]
        %2757 = vset.pattern.permute.xlu0 0
        %2758 = vperm.xlu0 %2757, %v2752
        %v2759 = vpop.permute.xlu0 %2758
        %2762 = vset.pattern.permute.xlu0 0
        %2763 = vperm.xlu0 %2762, %v2753
        %v2764 = vpop.permute.xlu0 %2763
        %2767 = vset.pattern.permute.xlu0 0
        %2768 = vperm.xlu0 %2767, %v2754
        %v2769 = vpop.permute.xlu0 %2768
        %2772 = vset.pattern.permute.xlu0 0
        %2773 = vperm.xlu0 %2772, %v2755
        %v2774 = vpop.permute.xlu0 %2773
        %v2777 = vsel %vm1167, %v2748, 0
        %v2780 = vsel %vm1167, %v2749, 0
        %v2783 = vsel %vm1167, %v2750, 0
        %v2786 = vsel %vm1167, %v2751, 0
        %2788 = vmatprep.subr.mxu0 %v2747
        %2789 = vmatpush1.msra.mxu0 %v2746
        %2790 = vmatprep.subr.mxu0 %v2120
        %2791 = vmatpush1.msra.mxu0 %v2119
        %2792 = vmatprep.subr.mxu0 0.0
        %2793 = vmatpush1.msra.mxu0 0.0
        %2794 = vmatprep.subr.mxu0 0.0
        %2795 = vmatpush1.msra.mxu0 0.0
        %2796 = vmatprep.subr.mxu0 0.0
        %2797 = vmatpush1.msra.mxu0 0.0
        %2798 = vmatprep.subr.mxu0 0.0
        %2799 = vmatpush1.msra.mxu0 0.0
        %2800 = vmatprep.subr.mxu0 0.0
        %2801 = vmatpush1.msra.mxu0 0.0
        %2802 = vmatprep.subr.mxu0 0.0
        %2803 = vmatpush1.msra.mxu0 0.0
        %2804 = vmatprep.subr.mxu0 0.0
        %2805 = vmatpush1.msra.mxu0 0.0
        %2806 = vmatprep.subr.mxu0 0.0
        %2807 = vmatpush1.msra.mxu0 0.0
        %2808 = vmatprep.subr.mxu0 0.0
        %2809 = vmatpush1.msra.mxu0 0.0
        %2810 = vmatprep.subr.mxu0 0.0
        %2811 = vmatpush1.msra.mxu0 0.0
        %2812 = vmatprep.subr.mxu0 0.0
        %2813 = vmatpush1.msra.mxu0 0.0
        %2814 = vmatprep.subr.mxu0 0.0
        %2815 = vmatpush1.msra.mxu0 0.0
        %2816 = vmatprep.subr.mxu0 0.0
        %2817 = vmatpush1.msra.mxu0 0.0
        %2818 = vmatprep.subr.mxu0 0.0
        %2819 = vmatpush1.msra.mxu0 0.0
        %2820 = vmatprep.subr.mxu0 0.0
        %2821 = vmatpush1.msra.mxu0 0.0
        %2822 = vmatprep.subr.mxu0 0.0
        %2823 = vmatpush1.msra.mxu0 0.0
        %2824 = vmatprep.subr.mxu0 0.0
        %2825 = vmatpush1.msra.mxu0 0.0
        %2826 = vmatprep.subr.mxu0 0.0
        %2827 = vmatpush1.msra.mxu0 0.0
        %2828 = vmatprep.subr.mxu0 0.0
        %2829 = vmatpush1.msra.mxu0 0.0
        %2830 = vmatprep.subr.mxu0 0.0
        %2831 = vmatpush1.msra.mxu0 0.0
        %2832 = vmatprep.subr.mxu0 0.0
        %2833 = vmatpush1.msra.mxu0 0.0
        %2834 = vmatprep.subr.mxu0 0.0
        %2835 = vmatpush1.msra.mxu0 0.0
        %2836 = vmatprep.subr.mxu0 0.0
        %2837 = vmatpush1.msra.mxu0 0.0
        %2838 = vmatprep.subr.mxu0 0.0
        %2839 = vmatpush1.msra.mxu0 0.0
        %2840 = vmatprep.subr.mxu0 0.0
        %2841 = vmatpush1.msra.mxu0 0.0
        %2842 = vmatprep.subr.mxu0 0.0
        %2843 = vmatpush1.msra.mxu0 0.0
        %2844 = vmatprep.subr.mxu0 0.0
        %2845 = vmatpush1.msra.mxu0 0.0
        %2846 = vmatprep.subr.mxu0 0.0
        %2847 = vmatpush1.msra.mxu0 0.0
        %2848 = vmatprep.subr.mxu0 0.0
        %2849 = vmatpush1.msra.mxu0 0.0
        %2850 = vmatprep.subr.mxu0 0.0
        %2851 = vmatpush1.msra.mxu0 0.0
        %2852 = vmatprep.mubr.f32.mxu0 0.0
        %2853 = vmatmul.mubr.f32.gmra.mrb[0].mxu0 %v2777
        %v2854 = vpop.f32.mrb[0].mxu0
        %v2855 = vadd.f32 %v2759, %v2854
        %v2856 = vpop.f32.mrb[0].mxu0
        %v2857 = vadd.f32 %v2759, %v2856
        %2858 = vmatprep.mubr.f32.mxu0 0.0
        %2859 = vmatmul.mubr.f32.gmra.mrb[0].mxu0 %v2780
        %v2860 = vpop.f32.mrb[0].mxu0
        %v2861 = vadd.f32 %v2764, %v2860
        %v2862 = vpop.f32.mrb[0].mxu0
        %v2863 = vadd.f32 %v2764, %v2862
        %2864 = vmatprep.mubr.f32.mxu0 0.0
        %2865 = vmatmul.mubr.f32.gmra.mrb[0].mxu0 %v2783
        %v2866 = vpop.f32.mrb[0].mxu0
        %v2867 = vadd.f32 %v2769, %v2866
        %v2868 = vpop.f32.mrb[0].mxu0
        %v2869 = vadd.f32 %v2769, %v2868
        %2870 = vmatprep.mubr.f32.mxu0 0.0
        %2871 = vmatmul.mubr.f32.gmra.mrb[0].mxu0 %v2786
        %v2872 = vpop.f32.mrb[0].mxu0
        %v2873 = vadd.f32 %v2774, %v2872
        %v2874 = vpop.f32.mrb[0].mxu0
        %v2875 = vadd.f32 %v2774, %v2874
        %2876 = vdwg.mxu0
        %v2877 = vxor.u32 %v2855, 2147483648
        %v2878 = vxor.u32 %v2857, 2147483648
        %v2879 = vmul.f32 %v2877, 1.442695
        %v2880 = vpow.pop %v2879
        %v2881 = vmul.f32 %v2878, 1.442695
        %v2882 = vpow.pop %v2881
        %v2883 = vadd.f32 %v2880, 1.0
        %v2884 = vadd.f32 %v2882, 1.0
        %v2885 = vrcp.pop %v2883
        %v2886 = vmul.f32 1.0, %v2885
        %v2887 = vrcp.pop %v2884
        %v2888 = vmul.f32 1.0, %v2887
        %v2889 = vxor.u32 %v2861, 2147483648
        %v2890 = vxor.u32 %v2863, 2147483648
        %v2891 = vmul.f32 %v2889, 1.442695
        %v2892 = vpow.pop %v2891
        %v2893 = vmul.f32 %v2890, 1.442695
        %v2894 = vpow.pop %v2893
        %v2895 = vadd.f32 %v2892, 1.0
        %v2896 = vadd.f32 %v2894, 1.0
        %v2897 = vrcp.pop %v2895
        %v2898 = vmul.f32 1.0, %v2897
        %v2899 = vrcp.pop %v2896
        %v2900 = vmul.f32 1.0, %v2899
        %v2901 = vtanh.pop %v2867
        %v2902 = vtanh.pop %v2869
        %v2903 = vxor.u32 %v2873, 2147483648
        %v2904 = vxor.u32 %v2875, 2147483648
        %v2905 = vmul.f32 %v2903, 1.442695
        %v2906 = vpow.pop %v2905
        %v2907 = vmul.f32 %v2904, 1.442695
        %v2908 = vpow.pop %v2907
        %v2909 = vadd.f32 %v2906, 1.0
        %v2910 = vadd.f32 %v2908, 1.0
        %v2911 = vrcp.pop %v2909
        %v2912 = vmul.f32 1.0, %v2911
        %v2913 = vrcp.pop %v2910
        %v2914 = vmul.f32 1.0, %v2913
        %v2915 = vmul.f32 %v2898, %v2115
        %v2916 = vmul.f32 %v2900, %v2116
        %v2917 = vmul.f32 %v2886, %v2901
        %v2918 = vmul.f32 %v2888, %v2902
        %v2919 = vadd.f32 %v2915, %v2917
        %v2920 = vadd.f32 %v2916, %v2918
        %v2921 = vtanh.pop %v2919
        %v2922 = vtanh.pop %v2920
        %v2923 = vmul.f32 %v2912, %v2921
        %v2924 = vmul.f32 %v2914, %v2922
        %s2925 = scalar_lea.vmem %s441, 48 [#allocation3]
        %v2926 = vld [vmem:[%s2925] sm:$0xff]
        %v2927 = vld [vmem:[%s2925 + $0x8] sm:$0xff]
        %2930 = vrot.lane.b32.xlu0 %v2926, 127
        %v2931 = vpop.permute.xlu0 %2930
        %2932 = vrot.lane.b32.xlu0 %v2927, 127
        %v2933 = vpop.permute.xlu0 %2932
        %v2934 = vsel %vm498, %v2931, %v2933
        %2937 = vrot.lane.b32.xlu0 %v2926, 126
        %v2938 = vpop.permute.xlu0 %2937
        %2939 = vrot.lane.b32.xlu0 %v2927, 126
        %v2940 = vpop.permute.xlu0 %2939
        %v2941 = vsel %vm506, %v2938, %v2940
        %2944 = vrot.lane.b32.xlu0 %v2926, 110
        %v2945 = vpop.permute.xlu0 %2944
        %2946 = vrot.lane.b32.xlu0 %v2927, 110
        %v2947 = vpop.permute.xlu0 %2946
        %v2948 = vsel %vm514, %v2945, %v2947
        %2951 = vrot.lane.b32.xlu0 %v2926, 109
        %v2952 = vpop.permute.xlu0 %2951
        %2953 = vrot.lane.b32.xlu0 %v2927, 109
        %v2954 = vpop.permute.xlu0 %2953
        %v2955 = vsel %vm522, %v2952, %v2954
        %2958 = vrot.lane.b32.xlu0 %v2926, 108
        %v2959 = vpop.permute.xlu0 %2958
        %2960 = vrot.lane.b32.xlu0 %v2927, 108
        %v2961 = vpop.permute.xlu0 %2960
        %v2962 = vsel %vm530, %v2959, %v2961
        %2965 = vrot.lane.b32.xlu0 %v2926, 92
        %v2966 = vpop.permute.xlu0 %2965
        %2967 = vrot.lane.b32.xlu0 %v2927, 92
        %v2968 = vpop.permute.xlu0 %2967
        %v2969 = vsel %vm538, %v2966, %v2968
        %2972 = vrot.lane.b32.xlu0 %v2926, 91
        %v2973 = vpop.permute.xlu0 %2972
        %2974 = vrot.lane.b32.xlu0 %v2927, 91
        %v2975 = vpop.permute.xlu0 %2974
        %v2976 = vsel %vm546, %v2973, %v2975
        %2979 = vrot.lane.b32.xlu0 %v2926, 90
        %v2980 = vpop.permute.xlu0 %2979
        %2981 = vrot.lane.b32.xlu0 %v2927, 90
        %v2982 = vpop.permute.xlu0 %2981
        %v2983 = vsel %vm554, %v2980, %v2982
        %v2986 = vld [vmem:[%s2] sm:$0xff]
        %v2987 = vld [vmem:[%s3] sm:$0xff]
        %2989 = vset.pattern.permute.xlu0 0
        %2990 = vperm.xlu0 %2989, %v2987
        %v2991 = vpop.permute.xlu0 %2990
        %v2994 = vsel %vm565, %v2986, 0
        %2996 = vmatprep.subr.mxu0 %v2927
        %2997 = vmatpush1.msra.mxu0 %v2926
        %2998 = vmatprep.subr.mxu0 %v2933
        %2999 = vmatpush1.msra.mxu0 %v2934
        %3000 = vmatprep.subr.mxu0 %v2940
        %3001 = vmatpush1.msra.mxu0 %v2941
        %3002 = vmatprep.subr.mxu0 %v2947
        %3003 = vmatpush1.msra.mxu0 %v2948
        %3004 = vmatprep.subr.mxu0 %v2954
        %3005 = vmatpush1.msra.mxu0 %v2955
        %3006 = vmatprep.subr.mxu0 %v2961
        %3007 = vmatpush1.msra.mxu0 %v2962
        %3008 = vmatprep.subr.mxu0 %v2968
        %3009 = vmatpush1.msra.mxu0 %v2969
        %3010 = vmatprep.subr.mxu0 %v2975
        %3011 = vmatpush1.msra.mxu0 %v2976
        %3012 = vmatprep.subr.mxu0 %v2982
        %3013 = vmatpush1.msra.mxu0 %v2983
        %3014 = vmatprep.subr.mxu0 0.0
        %3015 = vmatpush1.msra.mxu0 0.0
        %3016 = vmatprep.subr.mxu0 0.0
        %3017 = vmatpush1.msra.mxu0 0.0
        %3018 = vmatprep.subr.mxu0 0.0
        %3019 = vmatpush1.msra.mxu0 0.0
        %3020 = vmatprep.subr.mxu0 0.0
        %3021 = vmatpush1.msra.mxu0 0.0
        %3022 = vmatprep.subr.mxu0 0.0
        %3023 = vmatpush1.msra.mxu0 0.0
        %3024 = vmatprep.subr.mxu0 0.0
        %3025 = vmatpush1.msra.mxu0 0.0
        %3026 = vmatprep.subr.mxu0 0.0
        %3027 = vmatpush1.msra.mxu0 0.0
        %3028 = vmatprep.subr.mxu0 0.0
        %3029 = vmatpush1.msra.mxu0 0.0
        %3030 = vmatprep.subr.mxu0 0.0
        %3031 = vmatpush1.msra.mxu0 0.0
        %3032 = vmatprep.subr.mxu0 0.0
        %3033 = vmatpush1.msra.mxu0 0.0
        %3034 = vmatprep.subr.mxu0 0.0
        %3035 = vmatpush1.msra.mxu0 0.0
        %3036 = vmatprep.subr.mxu0 0.0
        %3037 = vmatpush1.msra.mxu0 0.0
        %3038 = vmatprep.subr.mxu0 0.0
        %3039 = vmatpush1.msra.mxu0 0.0
        %3040 = vmatprep.subr.mxu0 0.0
        %3041 = vmatpush1.msra.mxu0 0.0
        %3042 = vmatprep.subr.mxu0 0.0
        %3043 = vmatpush1.msra.mxu0 0.0
        %3044 = vmatprep.subr.mxu0 0.0
        %3045 = vmatpush1.msra.mxu0 0.0
        %3046 = vmatprep.subr.mxu0 0.0
        %3047 = vmatpush1.msra.mxu0 0.0
        %3048 = vmatprep.subr.mxu0 0.0
        %3049 = vmatpush1.msra.mxu0 0.0
        %3050 = vmatprep.subr.mxu0 0.0
        %3051 = vmatpush1.msra.mxu0 0.0
        %3052 = vmatprep.subr.mxu0 0.0
        %3053 = vmatpush1.msra.mxu0 0.0
        %3054 = vmatprep.subr.mxu0 0.0
        %3055 = vmatpush1.msra.mxu0 0.0
        %3056 = vmatprep.subr.mxu0 0.0
        %3057 = vmatpush1.msra.mxu0 0.0
        %3058 = vmatprep.subr.mxu0 0.0
        %3059 = vmatpush1.msra.mxu0 0.0
        %3060 = vmatprep.mubr.f32.mxu0 0.0
        %3061 = vmatmul.mubr.f32.gmra.mrb[0].mxu0 %v2994
        %v3062 = vpop.f32.mrb[0].mxu0
        %v3063 = vadd.f32 %v2991, %v3062
        %v3064 = vpop.f32.mrb[0].mxu0
        %v3065 = vadd.f32 %v2991, %v3064
        %3066 = vdwg.mxu0
        %v3067 = vmax.f32 %v3063, 0.0
        %v3068 = vmax.f32 %v3065, 0.0
        %v3069 = vmul.f32 %v3067, %v646
        %v3070 = vmul.f32 %v3068, %v650
        %3073 = vrot.lane.b32.xlu0 %v3069, 19
        %v3074 = vpop.permute.xlu0 %3073
        %3075 = vrot.lane.b32.xlu0 %v3070, 19
        %v3076 = vpop.permute.xlu0 %3075
        %v3077 = vsel %vm661, %v3074, %v3076
        %3080 = vst.msk [vmem:[#allocation2] sm:$0xff] %vm665, %v3074
        %3081 = vst.msk [vmem:[#allocation2 + $0x8] sm:$0xff] %vm667, %v3077
        %v3082 = vld [vmem:[#allocation2] sm:$0xff]
        %v3083 = vld [vmem:[#allocation2 + $0x8] sm:$0xff]
        %3086 = vrot.lane.b32.xlu0 %v3082, 127
        %v3087 = vpop.permute.xlu0 %3086
        %3088 = vrot.lane.b32.xlu0 %v3083, 127
        %v3089 = vpop.permute.xlu0 %3088
        %v3090 = vsel %vm498, %v3087, %v3089
        %3093 = vrot.lane.b32.xlu0 %v3082, 126
        %v3094 = vpop.permute.xlu0 %3093
        %3095 = vrot.lane.b32.xlu0 %v3083, 126
        %v3096 = vpop.permute.xlu0 %3095
        %v3097 = vsel %vm506, %v3094, %v3096
        %3100 = vrot.lane.b32.xlu0 %v3082, 110
        %v3101 = vpop.permute.xlu0 %3100
        %3102 = vrot.lane.b32.xlu0 %v3083, 110
        %v3103 = vpop.permute.xlu0 %3102
        %v3104 = vsel %vm514, %v3101, %v3103
        %3107 = vrot.lane.b32.xlu0 %v3082, 109
        %v3108 = vpop.permute.xlu0 %3107
        %3109 = vrot.lane.b32.xlu0 %v3083, 109
        %v3110 = vpop.permute.xlu0 %3109
        %v3111 = vsel %vm522, %v3108, %v3110
        %3114 = vrot.lane.b32.xlu0 %v3082, 108
        %v3115 = vpop.permute.xlu0 %3114
        %3116 = vrot.lane.b32.xlu0 %v3083, 108
        %v3117 = vpop.permute.xlu0 %3116
        %v3118 = vsel %vm530, %v3115, %v3117
        %3121 = vrot.lane.b32.xlu0 %v3082, 92
        %v3122 = vpop.permute.xlu0 %3121
        %3123 = vrot.lane.b32.xlu0 %v3083, 92
        %v3124 = vpop.permute.xlu0 %3123
        %v3125 = vsel %vm538, %v3122, %v3124
        %3128 = vrot.lane.b32.xlu0 %v3082, 91
        %v3129 = vpop.permute.xlu0 %3128
        %3130 = vrot.lane.b32.xlu0 %v3083, 91
        %v3131 = vpop.permute.xlu0 %3130
        %v3132 = vsel %vm546, %v3129, %v3131
        %3135 = vrot.lane.b32.xlu0 %v3082, 90
        %v3136 = vpop.permute.xlu0 %3135
        %3137 = vrot.lane.b32.xlu0 %v3083, 90
        %v3138 = vpop.permute.xlu0 %3137
        %v3139 = vsel %vm554, %v3136, %v3138
        %v3142 = vld [vmem:[%s4] sm:$0xff]
        %v3143 = vld [vmem:[%s5] sm:$0xff]
        %3145 = vset.pattern.permute.xlu0 0
        %3146 = vperm.xlu0 %3145, %v3143
        %v3147 = vpop.permute.xlu0 %3146
        %v3150 = vsel %vm565, %v3142, 0
        %3152 = vmatprep.subr.mxu0 %v3083
        %3153 = vmatpush1.msra.mxu0 %v3082
        %3154 = vmatprep.subr.mxu0 %v3089
        %3155 = vmatpush1.msra.mxu0 %v3090
        %3156 = vmatprep.subr.mxu0 %v3096
        %3157 = vmatpush1.msra.mxu0 %v3097
        %3158 = vmatprep.subr.mxu0 %v3103
        %3159 = vmatpush1.msra.mxu0 %v3104
        %3160 = vmatprep.subr.mxu0 %v3110
        %3161 = vmatpush1.msra.mxu0 %v3111
        %3162 = vmatprep.subr.mxu0 %v3117
        %3163 = vmatpush1.msra.mxu0 %v3118
        %3164 = vmatprep.subr.mxu0 %v3124
        %3165 = vmatpush1.msra.mxu0 %v3125
        %3166 = vmatprep.subr.mxu0 %v3131
        %3167 = vmatpush1.msra.mxu0 %v3132
        %3168 = vmatprep.subr.mxu0 %v3138
        %3169 = vmatpush1.msra.mxu0 %v3139
        %3170 = vmatprep.subr.mxu0 0.0
        %3171 = vmatpush1.msra.mxu0 0.0
        %3172 = vmatprep.subr.mxu0 0.0
        %3173 = vmatpush1.msra.mxu0 0.0
        %3174 = vmatprep.subr.mxu0 0.0
        %3175 = vmatpush1.msra.mxu0 0.0
        %3176 = vmatprep.subr.mxu0 0.0
        %3177 = vmatpush1.msra.mxu0 0.0
        %3178 = vmatprep.subr.mxu0 0.0
        %3179 = vmatpush1.msra.mxu0 0.0
        %3180 = vmatprep.subr.mxu0 0.0
        %3181 = vmatpush1.msra.mxu0 0.0
        %3182 = vmatprep.subr.mxu0 0.0
        %3183 = vmatpush1.msra.mxu0 0.0
        %3184 = vmatprep.subr.mxu0 0.0
        %3185 = vmatpush1.msra.mxu0 0.0
        %3186 = vmatprep.subr.mxu0 0.0
        %3187 = vmatpush1.msra.mxu0 0.0
        %3188 = vmatprep.subr.mxu0 0.0
        %3189 = vmatpush1.msra.mxu0 0.0
        %3190 = vmatprep.subr.mxu0 0.0
        %3191 = vmatpush1.msra.mxu0 0.0
        %3192 = vmatprep.subr.mxu0 0.0
        %3193 = vmatpush1.msra.mxu0 0.0
        %3194 = vmatprep.subr.mxu0 0.0
        %3195 = vmatpush1.msra.mxu0 0.0
        %3196 = vmatprep.subr.mxu0 0.0
        %3197 = vmatpush1.msra.mxu0 0.0
        %3198 = vmatprep.subr.mxu0 0.0
        %3199 = vmatpush1.msra.mxu0 0.0
        %3200 = vmatprep.subr.mxu0 0.0
        %3201 = vmatpush1.msra.mxu0 0.0
        %3202 = vmatprep.subr.mxu0 0.0
        %3203 = vmatpush1.msra.mxu0 0.0
        %3204 = vmatprep.subr.mxu0 0.0
        %3205 = vmatpush1.msra.mxu0 0.0
        %3206 = vmatprep.subr.mxu0 0.0
        %3207 = vmatpush1.msra.mxu0 0.0
        %3208 = vmatprep.subr.mxu0 0.0
        %3209 = vmatpush1.msra.mxu0 0.0
        %3210 = vmatprep.subr.mxu0 0.0
        %3211 = vmatpush1.msra.mxu0 0.0
        %3212 = vmatprep.subr.mxu0 0.0
        %3213 = vmatpush1.msra.mxu0 0.0
        %3214 = vmatprep.subr.mxu0 0.0
        %3215 = vmatpush1.msra.mxu0 0.0
        %3216 = vmatprep.mubr.f32.mxu0 0.0
        %3217 = vmatmul.mubr.f32.gmra.mrb[0].mxu0 %v3150
        %v3218 = vpop.f32.mrb[0].mxu0
        %v3219 = vadd.f32 %v3147, %v3218
        %v3220 = vpop.f32.mrb[0].mxu0
        %v3221 = vadd.f32 %v3147, %v3220
        %3222 = vdwg.mxu0
        %v3223 = vmax.f32 %v3219, 0.0
        %v3224 = vmax.f32 %v3221, 0.0
        %v3225 = vmul.f32 %v3223, %v646
        %v3226 = vmul.f32 %v3224, %v650
        %3229 = vrot.lane.b32.xlu0 %v3225, 19
        %v3230 = vpop.permute.xlu0 %3229
        %3231 = vrot.lane.b32.xlu0 %v3226, 19
        %v3232 = vpop.permute.xlu0 %3231
        %v3233 = vsel %vm661, %v3230, %v3232
        %3236 = vst.msk [vmem:[#allocation2] sm:$0xff] %vm665, %v3230
        %3237 = vst.msk [vmem:[#allocation2 + $0x8] sm:$0xff] %vm667, %v3233
        %v3238 = vld [vmem:[#allocation2] sm:$0xff]
        %v3239 = vld [vmem:[#allocation2 + $0x8] sm:$0xff]
        %3242 = vrot.lane.b32.xlu0 %v3238, 127
        %v3243 = vpop.permute.xlu0 %3242
        %3244 = vrot.lane.b32.xlu0 %v3239, 127
        %v3245 = vpop.permute.xlu0 %3244
        %v3246 = vsel %vm498, %v3243, %v3245
        %3249 = vrot.lane.b32.xlu0 %v3238, 126
        %v3250 = vpop.permute.xlu0 %3249
        %3251 = vrot.lane.b32.xlu0 %v3239, 126
        %v3252 = vpop.permute.xlu0 %3251
        %v3253 = vsel %vm506, %v3250, %v3252
        %3256 = vrot.lane.b32.xlu0 %v3238, 110
        %v3257 = vpop.permute.xlu0 %3256
        %3258 = vrot.lane.b32.xlu0 %v3239, 110
        %v3259 = vpop.permute.xlu0 %3258
        %v3260 = vsel %vm514, %v3257, %v3259
        %3263 = vrot.lane.b32.xlu0 %v3238, 109
        %v3264 = vpop.permute.xlu0 %3263
        %3265 = vrot.lane.b32.xlu0 %v3239, 109
        %v3266 = vpop.permute.xlu0 %3265
        %v3267 = vsel %vm522, %v3264, %v3266
        %3270 = vrot.lane.b32.xlu0 %v3238, 108
        %v3271 = vpop.permute.xlu0 %3270
        %3272 = vrot.lane.b32.xlu0 %v3239, 108
        %v3273 = vpop.permute.xlu0 %3272
        %v3274 = vsel %vm530, %v3271, %v3273
        %3277 = vrot.lane.b32.xlu0 %v3238, 92
        %v3278 = vpop.permute.xlu0 %3277
        %3279 = vrot.lane.b32.xlu0 %v3239, 92
        %v3280 = vpop.permute.xlu0 %3279
        %v3281 = vsel %vm538, %v3278, %v3280
        %3284 = vrot.lane.b32.xlu0 %v3238, 91
        %v3285 = vpop.permute.xlu0 %3284
        %3286 = vrot.lane.b32.xlu0 %v3239, 91
        %v3287 = vpop.permute.xlu0 %3286
        %v3288 = vsel %vm546, %v3285, %v3287
        %3291 = vrot.lane.b32.xlu0 %v3238, 90
        %v3292 = vpop.permute.xlu0 %3291
        %3293 = vrot.lane.b32.xlu0 %v3239, 90
        %v3294 = vpop.permute.xlu0 %3293
        %v3295 = vsel %vm554, %v3292, %v3294
        %v3298 = vld [vmem:[%s6] sm:$0xff]
        %v3299 = vld [vmem:[%s7] sm:$0xff]
        %3301 = vset.pattern.permute.xlu0 0
        %3302 = vperm.xlu0 %3301, %v3299
        %v3303 = vpop.permute.xlu0 %3302
        %v3306 = vsel %vm565, %v3298, 0
        %3308 = vmatprep.subr.mxu0 %v3239
        %3309 = vmatpush1.msra.mxu0 %v3238
        %3310 = vmatprep.subr.mxu0 %v3245
        %3311 = vmatpush1.msra.mxu0 %v3246
        %3312 = vmatprep.subr.mxu0 %v3252
        %3313 = vmatpush1.msra.mxu0 %v3253
        %3314 = vmatprep.subr.mxu0 %v3259
        %3315 = vmatpush1.msra.mxu0 %v3260
        %3316 = vmatprep.subr.mxu0 %v3266
        %3317 = vmatpush1.msra.mxu0 %v3267
        %3318 = vmatprep.subr.mxu0 %v3273
        %3319 = vmatpush1.msra.mxu0 %v3274
        %3320 = vmatprep.subr.mxu0 %v3280
        %3321 = vmatpush1.msra.mxu0 %v3281
        %3322 = vmatprep.subr.mxu0 %v3287
        %3323 = vmatpush1.msra.mxu0 %v3288
        %3324 = vmatprep.subr.mxu0 %v3294
        %3325 = vmatpush1.msra.mxu0 %v3295
        %3326 = vmatprep.subr.mxu0 0.0
        %3327 = vmatpush1.msra.mxu0 0.0
        %3328 = vmatprep.subr.mxu0 0.0
        %3329 = vmatpush1.msra.mxu0 0.0
        %3330 = vmatprep.subr.mxu0 0.0
        %3331 = vmatpush1.msra.mxu0 0.0
        %3332 = vmatprep.subr.mxu0 0.0
        %3333 = vmatpush1.msra.mxu0 0.0
        %3334 = vmatprep.subr.mxu0 0.0
        %3335 = vmatpush1.msra.mxu0 0.0
        %3336 = vmatprep.subr.mxu0 0.0
        %3337 = vmatpush1.msra.mxu0 0.0
        %3338 = vmatprep.subr.mxu0 0.0
        %3339 = vmatpush1.msra.mxu0 0.0
        %3340 = vmatprep.subr.mxu0 0.0
        %3341 = vmatpush1.msra.mxu0 0.0
        %3342 = vmatprep.subr.mxu0 0.0
        %3343 = vmatpush1.msra.mxu0 0.0
        %3344 = vmatprep.subr.mxu0 0.0
        %3345 = vmatpush1.msra.mxu0 0.0
        %3346 = vmatprep.subr.mxu0 0.0
        %3347 = vmatpush1.msra.mxu0 0.0
        %3348 = vmatprep.subr.mxu0 0.0
        %3349 = vmatpush1.msra.mxu0 0.0
        %3350 = vmatprep.subr.mxu0 0.0
        %3351 = vmatpush1.msra.mxu0 0.0
        %3352 = vmatprep.subr.mxu0 0.0
        %3353 = vmatpush1.msra.mxu0 0.0
        %3354 = vmatprep.subr.mxu0 0.0
        %3355 = vmatpush1.msra.mxu0 0.0
        %3356 = vmatprep.subr.mxu0 0.0
        %3357 = vmatpush1.msra.mxu0 0.0
        %3358 = vmatprep.subr.mxu0 0.0
        %3359 = vmatpush1.msra.mxu0 0.0
        %3360 = vmatprep.subr.mxu0 0.0
        %3361 = vmatpush1.msra.mxu0 0.0
        %3362 = vmatprep.subr.mxu0 0.0
        %3363 = vmatpush1.msra.mxu0 0.0
        %3364 = vmatprep.subr.mxu0 0.0
        %3365 = vmatpush1.msra.mxu0 0.0
        %3366 = vmatprep.subr.mxu0 0.0
        %3367 = vmatpush1.msra.mxu0 0.0
        %3368 = vmatprep.subr.mxu0 0.0
        %3369 = vmatpush1.msra.mxu0 0.0
        %3370 = vmatprep.subr.mxu0 0.0
        %3371 = vmatpush1.msra.mxu0 0.0
        %3372 = vmatprep.mubr.f32.mxu0 0.0
        %3373 = vmatmul.mubr.f32.gmra.mrb[0].mxu0 %v3306
        %v3374 = vpop.f32.mrb[0].mxu0
        %v3375 = vadd.f32 %v3303, %v3374
        %v3376 = vpop.f32.mrb[0].mxu0
        %v3377 = vadd.f32 %v3303, %v3376
        %3378 = vdwg.mxu0
        %v3379 = vmax.f32 %v3375, 0.0
        %v3380 = vmax.f32 %v3377, 0.0
        %v3381 = vmul.f32 %v3379, %v646
        %v3382 = vmul.f32 %v3380, %v650
        %3385 = vrot.lane.b32.xlu0 %v3381, 19
        %v3386 = vpop.permute.xlu0 %3385
        %3387 = vrot.lane.b32.xlu0 %v3382, 19
        %v3388 = vpop.permute.xlu0 %3387
        %v3389 = vsel %vm661, %v3386, %v3388
        %3392 = vst.msk [vmem:[#allocation2] sm:$0xff] %vm665, %v3386
        %3393 = vst.msk [vmem:[#allocation2 + $0x8] sm:$0xff] %vm667, %v3389
        %v3394 = vld [vmem:[#allocation2] sm:$0xff]
        %v3395 = vld [vmem:[#allocation2 + $0x8] sm:$0xff]
        %3398 = vrot.lane.b32.xlu0 %v3394, 127
        %v3399 = vpop.permute.xlu0 %3398
        %3400 = vrot.lane.b32.xlu0 %v3395, 127
        %v3401 = vpop.permute.xlu0 %3400
        %v3402 = vsel %vm498, %v3399, %v3401
        %3405 = vrot.lane.b32.xlu0 %v3394, 126
        %v3406 = vpop.permute.xlu0 %3405
        %3407 = vrot.lane.b32.xlu0 %v3395, 126
        %v3408 = vpop.permute.xlu0 %3407
        %v3409 = vsel %vm506, %v3406, %v3408
        %3412 = vrot.lane.b32.xlu0 %v3394, 110
        %v3413 = vpop.permute.xlu0 %3412
        %3414 = vrot.lane.b32.xlu0 %v3395, 110
        %v3415 = vpop.permute.xlu0 %3414
        %v3416 = vsel %vm514, %v3413, %v3415
        %3419 = vrot.lane.b32.xlu0 %v3394, 109
        %v3420 = vpop.permute.xlu0 %3419
        %3421 = vrot.lane.b32.xlu0 %v3395, 109
        %v3422 = vpop.permute.xlu0 %3421
        %v3423 = vsel %vm522, %v3420, %v3422
        %3426 = vrot.lane.b32.xlu0 %v3394, 108
        %v3427 = vpop.permute.xlu0 %3426
        %3428 = vrot.lane.b32.xlu0 %v3395, 108
        %v3429 = vpop.permute.xlu0 %3428
        %v3430 = vsel %vm530, %v3427, %v3429
        %3433 = vrot.lane.b32.xlu0 %v3394, 92
        %v3434 = vpop.permute.xlu0 %3433
        %3435 = vrot.lane.b32.xlu0 %v3395, 92
        %v3436 = vpop.permute.xlu0 %3435
        %v3437 = vsel %vm538, %v3434, %v3436
        %3440 = vrot.lane.b32.xlu0 %v3394, 91
        %v3441 = vpop.permute.xlu0 %3440
        %3442 = vrot.lane.b32.xlu0 %v3395, 91
        %v3443 = vpop.permute.xlu0 %3442
        %v3444 = vsel %vm546, %v3441, %v3443
        %3447 = vrot.lane.b32.xlu0 %v3394, 90
        %v3448 = vpop.permute.xlu0 %3447
        %3449 = vrot.lane.b32.xlu0 %v3395, 90
        %v3450 = vpop.permute.xlu0 %3449
        %v3451 = vsel %vm554, %v3448, %v3450
        %v3454 = vld [vmem:[%s8] sm:$0xff]
        %v3455 = vld [vmem:[%s9] sm:$0xff]
        %3457 = vset.pattern.permute.xlu0 0
        %3458 = vperm.xlu0 %3457, %v3455
        %v3459 = vpop.permute.xlu0 %3458
        %v3462 = vsel %vm565, %v3454, 0
        %3464 = vmatprep.subr.mxu0 %v3395
        %3465 = vmatpush1.msra.mxu0 %v3394
        %3466 = vmatprep.subr.mxu0 %v3401
        %3467 = vmatpush1.msra.mxu0 %v3402
        %3468 = vmatprep.subr.mxu0 %v3408
        %3469 = vmatpush1.msra.mxu0 %v3409
        %3470 = vmatprep.subr.mxu0 %v3415
        %3471 = vmatpush1.msra.mxu0 %v3416
        %3472 = vmatprep.subr.mxu0 %v3422
        %3473 = vmatpush1.msra.mxu0 %v3423
        %3474 = vmatprep.subr.mxu0 %v3429
        %3475 = vmatpush1.msra.mxu0 %v3430
        %3476 = vmatprep.subr.mxu0 %v3436
        %3477 = vmatpush1.msra.mxu0 %v3437
        %3478 = vmatprep.subr.mxu0 %v3443
        %3479 = vmatpush1.msra.mxu0 %v3444
        %3480 = vmatprep.subr.mxu0 %v3450
        %3481 = vmatpush1.msra.mxu0 %v3451
        %3482 = vmatprep.subr.mxu0 0.0
        %3483 = vmatpush1.msra.mxu0 0.0
        %3484 = vmatprep.subr.mxu0 0.0
        %3485 = vmatpush1.msra.mxu0 0.0
        %3486 = vmatprep.subr.mxu0 0.0
        %3487 = vmatpush1.msra.mxu0 0.0
        %3488 = vmatprep.subr.mxu0 0.0
        %3489 = vmatpush1.msra.mxu0 0.0
        %3490 = vmatprep.subr.mxu0 0.0
        %3491 = vmatpush1.msra.mxu0 0.0
        %3492 = vmatprep.subr.mxu0 0.0
        %3493 = vmatpush1.msra.mxu0 0.0
        %3494 = vmatprep.subr.mxu0 0.0
        %3495 = vmatpush1.msra.mxu0 0.0
        %3496 = vmatprep.subr.mxu0 0.0
        %3497 = vmatpush1.msra.mxu0 0.0
        %3498 = vmatprep.subr.mxu0 0.0
        %3499 = vmatpush1.msra.mxu0 0.0
        %3500 = vmatprep.subr.mxu0 0.0
        %3501 = vmatpush1.msra.mxu0 0.0
        %3502 = vmatprep.subr.mxu0 0.0
        %3503 = vmatpush1.msra.mxu0 0.0
        %3504 = vmatprep.subr.mxu0 0.0
        %3505 = vmatpush1.msra.mxu0 0.0
        %3506 = vmatprep.subr.mxu0 0.0
        %3507 = vmatpush1.msra.mxu0 0.0
        %3508 = vmatprep.subr.mxu0 0.0
        %3509 = vmatpush1.msra.mxu0 0.0
        %3510 = vmatprep.subr.mxu0 0.0
        %3511 = vmatpush1.msra.mxu0 0.0
        %3512 = vmatprep.subr.mxu0 0.0
        %3513 = vmatpush1.msra.mxu0 0.0
        %3514 = vmatprep.subr.mxu0 0.0
        %3515 = vmatpush1.msra.mxu0 0.0
        %3516 = vmatprep.subr.mxu0 0.0
        %3517 = vmatpush1.msra.mxu0 0.0
        %3518 = vmatprep.subr.mxu0 0.0
        %3519 = vmatpush1.msra.mxu0 0.0
        %3520 = vmatprep.subr.mxu0 0.0
        %3521 = vmatpush1.msra.mxu0 0.0
        %3522 = vmatprep.subr.mxu0 0.0
        %3523 = vmatpush1.msra.mxu0 0.0
        %3524 = vmatprep.subr.mxu0 0.0
        %3525 = vmatpush1.msra.mxu0 0.0
        %3526 = vmatprep.subr.mxu0 0.0
        %3527 = vmatpush1.msra.mxu0 0.0
        %3528 = vmatprep.mubr.f32.mxu0 0.0
        %3529 = vmatmul.mubr.f32.gmra.mrb[0].mxu0 %v3462
        %v3530 = vpop.f32.mrb[0].mxu0
        %v3531 = vadd.f32 %v3459, %v3530
        %v3532 = vpop.f32.mrb[0].mxu0
        %v3533 = vadd.f32 %v3459, %v3532
        %3534 = vdwg.mxu0
        %v3535 = vmax.f32 %v3531, 0.0
        %v3536 = vmax.f32 %v3533, 0.0
        %v3537 = vmul.f32 %v3535, %v646
        %v3538 = vmul.f32 %v3536, %v650
        %3541 = vrot.lane.b32.xlu0 %v3537, 19
        %v3542 = vpop.permute.xlu0 %3541
        %3543 = vrot.lane.b32.xlu0 %v3538, 19
        %v3544 = vpop.permute.xlu0 %3543
        %v3545 = vsel %vm661, %v3542, %v3544
        %3548 = vst.msk [vmem:[#allocation2] sm:$0xff] %vm665, %v3542
        %3549 = vst.msk [vmem:[#allocation2 + $0x8] sm:$0xff] %vm667, %v3545
        %v3550 = vld [vmem:[#allocation2] sm:$0xff]
        %v3551 = vld [vmem:[#allocation2 + $0x8] sm:$0xff]
        %v3552 = vld [vmem:[%s10] sm:$0xff]
        %v3553 = vld [vmem:[%s10 + $0x8] sm:$0xff]
        %v3554 = vld [vmem:[%s10 + $0x10] sm:$0xff]
        %v3555 = vld [vmem:[%s10 + $0x18] sm:$0xff]
        %v3556 = vld [vmem:[%s11] sm:$0xff]
        %v3557 = vld [vmem:[%s11 + $0x8] sm:$0xff]
        %v3558 = vld [vmem:[%s11 + $0x10] sm:$0xff]
        %v3559 = vld [vmem:[%s11 + $0x18] sm:$0xff]
        %3561 = vset.pattern.permute.xlu0 0
        %3562 = vperm.xlu0 %3561, %v3556
        %v3563 = vpop.permute.xlu0 %3562
        %3566 = vset.pattern.permute.xlu0 0
        %3567 = vperm.xlu0 %3566, %v3557
        %v3568 = vpop.permute.xlu0 %3567
        %3571 = vset.pattern.permute.xlu0 0
        %3572 = vperm.xlu0 %3571, %v3558
        %v3573 = vpop.permute.xlu0 %3572
        %3576 = vset.pattern.permute.xlu0 0
        %3577 = vperm.xlu0 %3576, %v3559
        %v3578 = vpop.permute.xlu0 %3577
        %v3581 = vsel %vm1167, %v3552, 0
        %v3584 = vsel %vm1167, %v3553, 0
        %v3587 = vsel %vm1167, %v3554, 0
        %v3590 = vsel %vm1167, %v3555, 0
        %3592 = vmatprep.subr.mxu0 %v3551
        %3593 = vmatpush1.msra.mxu0 %v3550
        %3594 = vmatprep.subr.mxu0 %v2924
        %3595 = vmatpush1.msra.mxu0 %v2923
        %3596 = vmatprep.subr.mxu0 0.0
        %3597 = vmatpush1.msra.mxu0 0.0
        %3598 = vmatprep.subr.mxu0 0.0
        %3599 = vmatpush1.msra.mxu0 0.0
        %3600 = vmatprep.subr.mxu0 0.0
        %3601 = vmatpush1.msra.mxu0 0.0
        %3602 = vmatprep.subr.mxu0 0.0
        %3603 = vmatpush1.msra.mxu0 0.0
        %3604 = vmatprep.subr.mxu0 0.0
        %3605 = vmatpush1.msra.mxu0 0.0
        %3606 = vmatprep.subr.mxu0 0.0
        %3607 = vmatpush1.msra.mxu0 0.0
        %3608 = vmatprep.subr.mxu0 0.0
        %3609 = vmatpush1.msra.mxu0 0.0
        %3610 = vmatprep.subr.mxu0 0.0
        %3611 = vmatpush1.msra.mxu0 0.0
        %3612 = vmatprep.subr.mxu0 0.0
        %3613 = vmatpush1.msra.mxu0 0.0
        %3614 = vmatprep.subr.mxu0 0.0
        %3615 = vmatpush1.msra.mxu0 0.0
        %3616 = vmatprep.subr.mxu0 0.0
        %3617 = vmatpush1.msra.mxu0 0.0
        %3618 = vmatprep.subr.mxu0 0.0
        %3619 = vmatpush1.msra.mxu0 0.0
        %3620 = vmatprep.subr.mxu0 0.0
        %3621 = vmatpush1.msra.mxu0 0.0
        %3622 = vmatprep.subr.mxu0 0.0
        %3623 = vmatpush1.msra.mxu0 0.0
        %3624 = vmatprep.subr.mxu0 0.0
        %3625 = vmatpush1.msra.mxu0 0.0
        %3626 = vmatprep.subr.mxu0 0.0
        %3627 = vmatpush1.msra.mxu0 0.0
        %3628 = vmatprep.subr.mxu0 0.0
        %3629 = vmatpush1.msra.mxu0 0.0
        %3630 = vmatprep.subr.mxu0 0.0
        %3631 = vmatpush1.msra.mxu0 0.0
        %3632 = vmatprep.subr.mxu0 0.0
        %3633 = vmatpush1.msra.mxu0 0.0
        %3634 = vmatprep.subr.mxu0 0.0
        %3635 = vmatpush1.msra.mxu0 0.0
        %3636 = vmatprep.subr.mxu0 0.0
        %3637 = vmatpush1.msra.mxu0 0.0
        %3638 = vmatprep.subr.mxu0 0.0
        %3639 = vmatpush1.msra.mxu0 0.0
        %3640 = vmatprep.subr.mxu0 0.0
        %3641 = vmatpush1.msra.mxu0 0.0
        %3642 = vmatprep.subr.mxu0 0.0
        %3643 = vmatpush1.msra.mxu0 0.0
        %3644 = vmatprep.subr.mxu0 0.0
        %3645 = vmatpush1.msra.mxu0 0.0
        %3646 = vmatprep.subr.mxu0 0.0
        %3647 = vmatpush1.msra.mxu0 0.0
        %3648 = vmatprep.subr.mxu0 0.0
        %3649 = vmatpush1.msra.mxu0 0.0
        %3650 = vmatprep.subr.mxu0 0.0
        %3651 = vmatpush1.msra.mxu0 0.0
        %3652 = vmatprep.subr.mxu0 0.0
        %3653 = vmatpush1.msra.mxu0 0.0
        %3654 = vmatprep.subr.mxu0 0.0
        %3655 = vmatpush1.msra.mxu0 0.0
        %3656 = vmatprep.mubr.f32.mxu0 0.0
        %3657 = vmatmul.mubr.f32.gmra.mrb[0].mxu0 %v3581
        %v3658 = vpop.f32.mrb[0].mxu0
        %v3659 = vadd.f32 %v3563, %v3658
        %v3660 = vpop.f32.mrb[0].mxu0
        %v3661 = vadd.f32 %v3563, %v3660
        %3662 = vmatprep.mubr.f32.mxu0 0.0
        %3663 = vmatmul.mubr.f32.gmra.mrb[0].mxu0 %v3584
        %v3664 = vpop.f32.mrb[0].mxu0
        %v3665 = vadd.f32 %v3568, %v3664
        %v3666 = vpop.f32.mrb[0].mxu0
        %v3667 = vadd.f32 %v3568, %v3666
        %3668 = vmatprep.mubr.f32.mxu0 0.0
        %3669 = vmatmul.mubr.f32.gmra.mrb[0].mxu0 %v3587
        %v3670 = vpop.f32.mrb[0].mxu0
        %v3671 = vadd.f32 %v3573, %v3670
        %v3672 = vpop.f32.mrb[0].mxu0
        %v3673 = vadd.f32 %v3573, %v3672
        %3674 = vmatprep.mubr.f32.mxu0 0.0
        %3675 = vmatmul.mubr.f32.gmra.mrb[0].mxu0 %v3590
        %v3676 = vpop.f32.mrb[0].mxu0
        %v3677 = vadd.f32 %v3578, %v3676
        %v3678 = vpop.f32.mrb[0].mxu0
        %v3679 = vadd.f32 %v3578, %v3678
        %3680 = vdwg.mxu0
        %v3681 = vxor.u32 %v3659, 2147483648
        %v3682 = vxor.u32 %v3661, 2147483648
        %v3683 = vmul.f32 %v3681, 1.442695
        %v3684 = vpow.pop %v3683
        %v3685 = vmul.f32 %v3682, 1.442695
        %v3686 = vpow.pop %v3685
        %v3687 = vadd.f32 %v3684, 1.0
        %v3688 = vadd.f32 %v3686, 1.0
        %v3689 = vrcp.pop %v3687
        %v3690 = vmul.f32 1.0, %v3689
        %v3691 = vrcp.pop %v3688
        %v3692 = vmul.f32 1.0, %v3691
        %v3693 = vxor.u32 %v3665, 2147483648
        %v3694 = vxor.u32 %v3667, 2147483648
        %v3695 = vmul.f32 %v3693, 1.442695
        %v3696 = vpow.pop %v3695
        %v3697 = vmul.f32 %v3694, 1.442695
        %v3698 = vpow.pop %v3697
        %v3699 = vadd.f32 %v3696, 1.0
        %v3700 = vadd.f32 %v3698, 1.0
        %v3701 = vrcp.pop %v3699
        %v3702 = vmul.f32 1.0, %v3701
        %v3703 = vrcp.pop %v3700
        %v3704 = vmul.f32 1.0, %v3703
        %v3705 = vtanh.pop %v3671
        %v3706 = vtanh.pop %v3673
        %v3707 = vxor.u32 %v3677, 2147483648
        %v3708 = vxor.u32 %v3679, 2147483648
        %v3709 = vmul.f32 %v3707, 1.442695
        %v3710 = vpow.pop %v3709
        %v3711 = vmul.f32 %v3708, 1.442695
        %v3712 = vpow.pop %v3711
        %v3713 = vadd.f32 %v3710, 1.0
        %v3714 = vadd.f32 %v3712, 1.0
        %v3715 = vrcp.pop %v3713
        %v3716 = vmul.f32 1.0, %v3715
        %v3717 = vrcp.pop %v3714
        %v3718 = vmul.f32 1.0, %v3717
        %v3719 = vmul.f32 %v3702, %v2919
        %v3720 = vmul.f32 %v3704, %v2920
        %v3721 = vmul.f32 %v3690, %v3705
        %v3722 = vmul.f32 %v3692, %v3706
        %v3723 = vadd.f32 %v3719, %v3721
        %v3724 = vadd.f32 %v3720, %v3722
        %v3725 = vtanh.pop %v3723
        %v3726 = vtanh.pop %v3724
        %v3727 = vmul.f32 %v3716, %v3725
        %v3728 = vmul.f32 %v3718, %v3726
        %v3729 = vld [vmem:[%s12] sm:$0xf]
        %v3730 = vld [vmem:[%s13] sm:$0xf]
        %3732 = vset.pattern.permute.xlu0 0
        %3733 = vperm.xlu0 %3732, %v3730
        %v3734 = vpop.permute.xlu0 %3733
        %vm3736 = vcmask 64512
        %v3738 = vsel %vm3736, %v3729, 0
        %3740 = vmatprep.subr.mxu0 %v3728
        %3741 = vmatpush1.msra.mxu0 %v3727
        %3742 = vmatprep.subr.mxu0 0.0
        %3743 = vmatpush1.msra.mxu0 0.0
        %3744 = vmatprep.subr.mxu0 0.0
        %3745 = vmatpush1.msra.mxu0 0.0
        %3746 = vmatprep.subr.mxu0 0.0
        %3747 = vmatpush1.msra.mxu0 0.0
        %3748 = vmatprep.subr.mxu0 0.0
        %3749 = vmatpush1.msra.mxu0 0.0
        %3750 = vmatprep.subr.mxu0 0.0
        %3751 = vmatpush1.msra.mxu0 0.0
        %3752 = vmatprep.subr.mxu0 0.0
        %3753 = vmatpush1.msra.mxu0 0.0
        %3754 = vmatprep.subr.mxu0 0.0
        %3755 = vmatpush1.msra.mxu0 0.0
        %3756 = vmatprep.subr.mxu0 0.0
        %3757 = vmatpush1.msra.mxu0 0.0
        %3758 = vmatprep.subr.mxu0 0.0
        %3759 = vmatpush1.msra.mxu0 0.0
        %3760 = vmatprep.subr.mxu0 0.0
        %3761 = vmatpush1.msra.mxu0 0.0
        %3762 = vmatprep.subr.mxu0 0.0
        %3763 = vmatpush1.msra.mxu0 0.0
        %3764 = vmatprep.subr.mxu0 0.0
        %3765 = vmatpush1.msra.mxu0 0.0
        %3766 = vmatprep.subr.mxu0 0.0
        %3767 = vmatpush1.msra.mxu0 0.0
        %3768 = vmatprep.subr.mxu0 0.0
        %3769 = vmatpush1.msra.mxu0 0.0
        %3770 = vmatprep.subr.mxu0 0.0
        %3771 = vmatpush1.msra.mxu0 0.0
        %3772 = vmatprep.subr.mxu0 0.0
        %3773 = vmatpush1.msra.mxu0 0.0
        %3774 = vmatprep.subr.mxu0 0.0
        %3775 = vmatpush1.msra.mxu0 0.0
        %3776 = vmatprep.subr.mxu0 0.0
        %3777 = vmatpush1.msra.mxu0 0.0
        %3778 = vmatprep.subr.mxu0 0.0
        %3779 = vmatpush1.msra.mxu0 0.0
        %3780 = vmatprep.subr.mxu0 0.0
        %3781 = vmatpush1.msra.mxu0 0.0
        %3782 = vmatprep.subr.mxu0 0.0
        %3783 = vmatpush1.msra.mxu0 0.0
        %3784 = vmatprep.subr.mxu0 0.0
        %3785 = vmatpush1.msra.mxu0 0.0
        %3786 = vmatprep.subr.mxu0 0.0
        %3787 = vmatpush1.msra.mxu0 0.0
        %3788 = vmatprep.subr.mxu0 0.0
        %3789 = vmatpush1.msra.mxu0 0.0
        %3790 = vmatprep.subr.mxu0 0.0
        %3791 = vmatpush1.msra.mxu0 0.0
        %3792 = vmatprep.subr.mxu0 0.0
        %3793 = vmatpush1.msra.mxu0 0.0
        %3794 = vmatprep.subr.mxu0 0.0
        %3795 = vmatpush1.msra.mxu0 0.0
        %3796 = vmatprep.subr.mxu0 0.0
        %3797 = vmatpush1.msra.mxu0 0.0
        %3798 = vmatprep.subr.mxu0 0.0
        %3799 = vmatpush1.msra.mxu0 0.0
        %3800 = vmatprep.subr.mxu0 0.0
        %3801 = vmatpush1.msra.mxu0 0.0
        %3802 = vmatprep.subr.mxu0 0.0
        %3803 = vmatpush1.msra.mxu0 0.0
        %3804 = vmatprep.mubr.f32.mxu0 0.0
        %3805 = vmatmul.mubr.f32.gmra.mrb[0].mxu0 %v3738
        %v3806 = vpop.f32.mrb[0].mxu0
        %v3807 = vadd.f32 %v3734, %v3806
        %v3808 = vpop.f32.mrb[0].mxu0
        %v3809 = vadd.f32 %v3734, %v3808
        %3810 = vdwg.mxu0
        %v3813 = vcombine.low %v3807, %v3809
        %vm3815 = vcmask 1043456
        %vm3816 = vcmask 424964
        %vm3817 = vmor %vm3816, %vm3815
        %3818 = vst.msk [vmem:[%s485] sm:$0xff] %vm3817, %v3813
        %s3819 = sand.u32 %s338, 1
        %s3820 = scalar_lea.sflag [#allocation5], %s3819
        %s3821 = sand.u32 %s338, 1
        %s3822 = smul.addr %s3821, 8
        %s3823 = scalar_lea.vmem [#allocation6], %s3822
        // Predicated region
        $region81: #{tpu_custom_call.1} parent=75 // pred_check
          %p3824 = pneg %p348
        $region82: #{tpu_custom_call.1} parent=75 // pred_check_branch
          %3826 = sbr.rel (%p3824) target = $region84
        $region83: #{tpu_custom_call.1} parent=75 // pred_region
          %s3828 = ssub.s32 128, 128
          %3829 = vsyncadd %s3820, %s3828
          %s3830 = smul.addr %s31, 2
          %s3831 = smul.addr %s3830, 64
          %s3832 = scalar_lea.hbm %s14, %s3831
          %s3834 = sshll.u32 %s3823, 4
          %s3835 = int_to_ptr.vmem [resolvable:$true] %s3834
          %3837 = dma.vmem_to_hbm [thread:$0]  %s3835, 128, %s3832, %s3820
        $region84: #{tpu_custom_call.1} parent=75 // pred_fallthru
          _
      $region76: #{tpu_custom_call.1} parent=5 // pred_fallthru
        _
      %p3838 = scmp.le.s32.totalorder 2, %s26
      // Predicated region
      $region85: #{tpu_custom_call.1} parent=5 // pred_check
        %p3839 = pneg %p3838
      $region86: #{tpu_custom_call.1} parent=5 // pred_check_branch
        %3841 = sbr.rel (%p3839) target = $region88
      $region87: #{tpu_custom_call.1} parent=5 // pred_region
        %s3842 = ssub.s32 %s26, 2
        // Predicated region
        $region89: #{tpu_custom_call.1} parent=87 // pred_check
          %p3843 = pneg %p354
        $region90: #{tpu_custom_call.1} parent=87 // pred_check_branch
          %3845 = sbr.rel (%p3843) target = $region92
        $region91: #{tpu_custom_call.1} parent=87 // pred_region
          %s3846 = sand.u32 %s339, 1
          %s3847 = scalar_lea.sflag [#allocation5], %s3846
          %s3848 = sand.u32 %s339, 1
          %s3849 = smul.addr %s3848, 8
          %s3850 = scalar_lea.vmem [#allocation6], %s3849
          %3851 = dma.done %s3847, 128
        $region92: #{tpu_custom_call.1} parent=87 // pred_fallthru
          _
      $region88: #{tpu_custom_call.1} parent=5 // pred_fallthru
        _
    $region6: #{tpu_custom_call.1} parent=1 // loop_footer
      %s30 = sadd.s32 1, %s26
    $region7: #{tpu_custom_call.1} parent=1 // loop_footer_branch
      %25 = sbr.rel target = $region3
    $region8: #{tpu_custom_call.1} parent=1 // loop_exit
      _
    %3852 = vsyncpa [#allocation4], 1
    %s3853 = scalar_lea.sflag [#allocation4], 1
    %3854 = vsyncpa %s3853, 1
    %3855 = vsyncpa [#allocation5], 1
    %s3856 = scalar_lea.sflag [#allocation5], 1
    %3857 = vsyncpa %s3856, 1

</llo_original>
